<compile_context>
chip_gen: v7x
topology: tpu7x:2x2x1
jax: 0.10.0
libtpu: 0.0.40
codegen_flags: <defaults>
</compile_context>

<pallas_src>
import math

import jax
import jax.numpy as jnp
from jax.experimental import pallas as pl
from jax.experimental.pallas import tpu as pltpu

# ----------------------------- model config (small, ViT-like) -----------------------------
B = 2                      # batch
C = 3                      # image channels
IMG = 32                   # image height/width
P = 16                     # patch size
N_PATCH = (IMG // P) ** 2  # 4 patches
SEQ = N_PATCH + 1          # 5 tokens (CLS + patches)
HIDDEN = 32                # hidden size
NUM_HEADS = 4
HEAD_DIM = HIDDEN // NUM_HEADS
MLP = 4 * HIDDEN
NUM_LAYERS = 2
NUM_LABELS = 3
LN_EPS = 1e-12             # HF ViT layer_norm_eps

VMEM = pltpu.MemorySpace.VMEM
SMEM = pltpu.MemorySpace.SMEM


# ----------------------------- pure-jnp reference math -----------------------------
def _layer_norm(x, gamma, beta):
    mean = jnp.mean(x, axis=-1, keepdims=True)
    var = jnp.mean((x - mean) ** 2, axis=-1, keepdims=True)
    return (x - mean) * jax.lax.rsqrt(var + LN_EPS) * gamma + beta


def _patch_embed(patches, w, b):
    return jnp.einsum("bnc,ch->bnh", patches, w,
                      preferred_element_type=jnp.float32) + b


def _attention(hn, wq, bq, wk, bk, wv, bv, wo, bo):
    q = jnp.einsum("bsh,hd->bsd", hn, wq, preferred_element_type=jnp.float32) + bq
    k = jnp.einsum("bsh,hd->bsd", hn, wk, preferred_element_type=jnp.float32) + bk
    v = jnp.einsum("bsh,hd->bsd", hn, wv, preferred_element_type=jnp.float32) + bv
    scale = 1.0 / math.sqrt(HEAD_DIM)
    attn_out = jnp.zeros(hn.shape, jnp.float32)
    for h in range(NUM_HEADS):
        sl = slice(h * HEAD_DIM, (h + 1) * HEAD_DIM)
        qh, kh, vh = q[..., sl], k[..., sl], v[..., sl]
        sc = jnp.einsum("bqd,bkd->bqk", qh, kh,
                        preferred_element_type=jnp.float32) * scale
        sc = sc - jnp.max(sc, axis=-1, keepdims=True)
        pz = jnp.exp(sc)
        pz = pz / jnp.sum(pz, axis=-1, keepdims=True)
        ctx_h = jnp.einsum("bqk,bkd->bqd", pz, vh,
                           preferred_element_type=jnp.float32)
        attn_out = attn_out + jnp.einsum("bqd,dh->bqh", ctx_h, wo[sl, :],
                                         preferred_element_type=jnp.float32)
    return attn_out + bo


def _mlp(hn, w1, b1, w2, b2):
    inter = jnp.einsum("bsh,hm->bsm", hn, w1,
                       preferred_element_type=jnp.float32) + b1
    # TODO(synk): HF ViT uses exact (erf) GELU; tanh approximation used here for a
    # clean EUP-friendly TPU lowering (well within the test tolerance).
    inter = jax.nn.gelu(inter, approximate=True)
    return jnp.einsum("bsm,mh->bsh", inter, w2,
                      preferred_element_type=jnp.float32) + b2


def _head(x, lng, lnb, wc, bc, labels2d):
    # Final LN -> CLS token -> (dropout p=0.1 is identity in eval) -> classifier -> CE loss.
    cls_tok = _layer_norm(x[:, 0:1, :], lng, lnb)[:, 0, :]          # (B, H)
    logits = jnp.dot(cls_tok, wc, preferred_element_type=jnp.float32) + bc
    m = jnp.max(logits, axis=-1, keepdims=True)
    lse = jnp.log(jnp.sum(jnp.exp(logits - m), axis=-1, keepdims=True)) + m
    logp = logits - lse
    classes = jax.lax.broadcasted_iota(jnp.int32, logp.shape, 1)
    nll = -jnp.sum(jnp.where(classes == labels2d, logp, 0.0), axis=-1)
    return logits, jnp.mean(nll)


# ----------------------------- fused Pallas kernel -----------------------------
def vit_fused_kernel(labels_ref,                       # SMEM (B,) int32
                     patches_ref,                      # (B, N, C*P*P) f32
                     patch_w_ref,                      # (C*P*P, H) bf16
                     emb_vec_ref,                      # (2+SEQ, H) f32: patch_b, cls, pos
                     wqkv_ref,                         # (L, H, 3H) bf16
                     bqkv_ref,                         # (L, 1, 3H) f32
                     wo_ref,                           # (L, H, H) bf16
                     w1_ref,                           # (L, H, MLP) bf16
                     b1_ref,                           # (L, 1, MLP) f32
                     w2_ref,                           # (L, MLP, H) bf16
                     vec_ref,                          # (L, 6, H) f32: ln1g,ln1b,ln2g,ln2b,bo,b2
                     lnf_ref,                          # (2, H) f32: ln_g, ln_b
                     cls_w_ref,                        # (H, NUM_LABELS) f32
                     cls_b_ref,                        # (1, NUM_LABELS) f32
                     logits_ref, loss_ref):
    f32 = jnp.float32

    def ln(x, g, b):
        mu = jnp.mean(x, axis=-1, keepdims=True)
        var = jnp.mean((x - mu) ** 2, axis=-1, keepdims=True)
        return (x - mu) * jax.lax.rsqrt(var + LN_EPS) * g + b

    def mm(a, w):
        # bf16-input MXU matmul with f32 accumulation (w already bf16).
        return jax.lax.dot_general(a.astype(w.dtype), w,
                                   (((1,), (0,)), ((), ())),
                                   preferred_element_type=f32)

    # ---------------- patch embedding + CLS + positional embedding ----------------
    ev = emb_vec_ref[...]
    patch_b = ev[0:1, :]                               # (1, H)
    cls_tok = ev[1:2, :]                               # (1, H)
    pos = ev[2:, :]                                    # (SEQ, H)

    rows = []
    for b in range(B):
        emb_b = mm(patches_ref[b], patch_w_ref[...]) + patch_b      # (N, H)
        rows.append(jnp.concatenate([cls_tok, emb_b], axis=0) + pos)  # (SEQ, H)
    x = jnp.concatenate(rows, axis=0)                  # (B*SEQ, H) f32

    scale = 1.0 / math.sqrt(HEAD_DIM)

    # ---------------- encoder layers (all weights resident in VMEM) ----------------
    for l in range(NUM_LAYERS):
        vec = vec_ref[l]                               # (6, H)
        ln1_g, ln1_b = vec[0:1, :], vec[1:2, :]
        ln2_g, ln2_b = vec[2:3, :], vec[3:4, :]
        bo, b2 = vec[4:5, :], vec[5:6, :]

        # --- multi-head self attention (fused QKV + fused output projection) ---
        hn = ln(x, ln1_g, ln1_b)
        qkv = mm(hn, wqkv_ref[l]) + bqkv_ref[l]        # (B*SEQ, 3H)
        ctx_rows = []
        for b in range(B):
            rs = slice(b * SEQ, (b + 1) * SEQ)
            head_ctx = []
            for h in range(NUM_HEADS):
                qh = qkv[rs, h * HEAD_DIM:(h + 1) * HEAD_DIM]
                kh = qkv[rs, HIDDEN + h * HEAD_DIM:HIDDEN + (h + 1) * HEAD_DIM]
                vh = qkv[rs, 2 * HIDDEN + h * HEAD_DIM:2 * HIDDEN + (h + 1) * HEAD_DIM]
                sc = jax.lax.dot_general(qh, kh, (((1,), (1,)), ((), ())),
                                         preferred_element_type=f32) * scale
                sc = sc - jnp.max(sc, axis=-1, keepdims=True)
                pz = jnp.exp(sc)
                pz = pz * pl.reciprocal(jnp.sum(pz, axis=-1, keepdims=True),
                                        approx=True)
                head_ctx.append(jax.lax.dot_general(pz, vh, (((1,), (0,)), ((), ())),
                                                    preferred_element_type=f32))
            ctx_rows.append(jnp.concatenate(head_ctx, axis=-1))     # (SEQ, H)
        ctx = jnp.concatenate(ctx_rows, axis=0)                      # (B*SEQ, H)
        x = x + mm(ctx, wo_ref[l]) + bo

        # --- MLP ---
        hn2 = ln(x, ln2_g, ln2_b)
        inter = mm(hn2, w1_ref[l]) + b1_ref[l]
        # TODO(synk): HF ViT uses exact (erf) GELU; tanh approximation used here.
        inter = jax.nn.gelu(inter, approximate=True)
        x = x + mm(inter, w2_ref[l]) + b2

    # ---------------- classification head (CLS sliced before LN) ----------------
    cls_rows = jnp.concatenate([x[b * SEQ:b * SEQ + 1, :] for b in range(B)],
                               axis=0)                               # (B, H)
    cls_n = ln(cls_rows, lnf_ref[0:1, :], lnf_ref[1:2, :])
    # dropout(p=0.1) is identity in eval mode.
    logits = jax.lax.dot_general(cls_n, cls_w_ref[...], (((1,), (0,)), ((), ())),
                                 preferred_element_type=f32) + cls_b_ref[...]
    logits_ref[...] = logits

    # mean cross-entropy loss
    m = jnp.max(logits, axis=-1, keepdims=True)
    lse = jnp.log(jnp.sum(jnp.exp(logits - m), axis=-1, keepdims=True)) + m
    logp = logits - lse
    classes = jax.lax.broadcasted_iota(jnp.int32, logp.shape, 1)
    loss_sum = 0.0
    for b in range(B):
        lbl = labels_ref[b]                                          # scalar from SMEM
        loss_sum = loss_sum - jnp.sum(jnp.where(classes[b:b + 1, :] == lbl,
                                                logp[b:b + 1, :], 0.0))
    loss_ref[...] = (loss_sum / B).reshape(1, 1)


# ----------------------------- wrappers -----------------------------
def _extract_patches(pixel_values):
    # NCHW -> (B, N, C*P*P), patch flattened in (C, ph, pw) order (conv weight order).
    b, c, hi, wi = pixel_values.shape
    nh, nw = hi // P, wi // P
    x = pixel_values.reshape(b, c, nh, P, nw, P)
    x = x.transpose(0, 2, 4, 1, 3, 5)                  # (B, nh, nw, C, P, P)
    return x.reshape(b, nh * nw, c * P * P)


def _pack_params(params):
    # Pack the many tiny per-layer parameters into a few stacked arrays and cast the
    # MXU matmul weights to bf16 (f32 accumulation happens inside the kernel).
    layers = params["layers"]
    h = HIDDEN
    emb_vec = jnp.concatenate([params["patch_b"].reshape(1, h),
                               params["cls"].reshape(1, h),
                               params["pos"].reshape(SEQ, h)], axis=0)
    wqkv = jnp.stack([jnp.concatenate([L["wq"], L["wk"], L["wv"]], axis=1)
                      for L in layers]).astype(jnp.bfloat16)
    bqkv = jnp.stack([jnp.concatenate([L["bq"].reshape(1, h),
                                       L["bk"].reshape(1, h),
                                       L["bv"].reshape(1, h)], axis=1)
                      for L in layers])
    wo = jnp.stack([L["wo"] for L in layers]).astype(jnp.bfloat16)
    w1 = jnp.stack([L["w1"] for L in layers]).astype(jnp.bfloat16)
    b1 = jnp.stack([L["b1"].reshape(1, MLP) for L in layers])
    w2 = jnp.stack([L["w2"] for L in layers]).astype(jnp.bfloat16)
    vec = jnp.stack([jnp.concatenate([L["ln1_g"].reshape(1, h), L["ln1_b"].reshape(1, h),
                                      L["ln2_g"].reshape(1, h), L["ln2_b"].reshape(1, h),
                                      L["bo"].reshape(1, h), L["b2"].reshape(1, h)],
                                     axis=0)
                     for L in layers])
    lnf = jnp.concatenate([params["ln_g"].reshape(1, h),
                           params["ln_b"].reshape(1, h)], axis=0)
    patch_w = params["patch_w"].astype(jnp.bfloat16)
    return (patch_w, emb_vec, wqkv, bqkv, wo, w1, b1, w2, vec, lnf,
            params["cls_w"], params["cls_b"])


def vit_forward(pixel_values, labels, params):
    bsz = pixel_values.shape[0]
    patches = _extract_patches(pixel_values)           # glue (plain JAX)
    packed = _pack_params(params)                      # glue (plain JAX)

    in_specs = ([pl.BlockSpec(memory_space=SMEM)] +
                [pl.BlockSpec(memory_space=VMEM)] * (1 + len(packed)))

    logits, loss = pl.pallas_call(
        vit_fused_kernel,
        out_shape=(jax.ShapeDtypeStruct((bsz, NUM_LABELS), jnp.float32),
                   jax.ShapeDtypeStruct((1, 1), jnp.float32)),
        in_specs=in_specs,
        out_specs=(pl.BlockSpec(memory_space=VMEM),
                   pl.BlockSpec(memory_space=VMEM)),
    )(labels.astype(jnp.int32), patches, *packed)
    return logits, loss[0, 0]


def reference_forward(pixel_values, labels, params):
    # Pure-JAX reference (f32 everywhere, exact division softmax).
    bsz = pixel_values.shape[0]
    patches = _extract_patches(pixel_values)
    emb = _patch_embed(patches, params["patch_w"], params["patch_b"])
    cls = jnp.broadcast_to(params["cls"], (bsz, 1, HIDDEN))
    x = jnp.concatenate([cls, emb], axis=1) + params["pos"]
    for layer in params["layers"]:
        hn = _layer_norm(x, layer["ln1_g"], layer["ln1_b"])
        x = x + _attention(hn, layer["wq"], layer["bq"], layer["wk"], layer["bk"],
                           layer["wv"], layer["bv"], layer["wo"], layer["bo"])
        hn2 = _layer_norm(x, layer["ln2_g"], layer["ln2_b"])
        x = x + _mlp(hn2, layer["w1"], layer["b1"], layer["w2"], layer["b2"])
    return _head(x, params["ln_g"], params["ln_b"], params["cls_w"],
                 params["cls_b"], labels.reshape(bsz, 1).astype(jnp.int32))


# ----------------------------- deterministic parameter init -----------------------------
def init_params(key):
    def nrm(k, shape, scale=0.02):
        return scale * jax.random.normal(k, shape, dtype=jnp.float32)

    keys = jax.random.split(key, 4 + NUM_LAYERS)
    cpp = C * P * P
    params = dict(
        patch_w=nrm(keys[0], (cpp, HIDDEN)),
        patch_b=jnp.zeros((1, 1, HIDDEN), jnp.float32),
        cls=nrm(keys[1], (1, 1, HIDDEN)),
        pos=nrm(keys[2], (1, SEQ, HIDDEN)),
        ln_g=jnp.ones((1, 1, HIDDEN), jnp.float32),
        ln_b=jnp.zeros((1, 1, HIDDEN), jnp.float32),
        cls_w=nrm(keys[3], (HIDDEN, NUM_LABELS)),
        cls_b=jnp.zeros((1, NUM_LABELS), jnp.float32),
        layers=[],
    )
    for l in range(NUM_LAYERS):
        lk = jax.random.split(keys[4 + l], 6)
        params["layers"].append(dict(
            ln1_g=jnp.ones((1, 1, HIDDEN), jnp.float32),
            ln1_b=jnp.zeros((1, 1, HIDDEN), jnp.float32),
            wq=nrm(lk[0], (HIDDEN, HIDDEN)), bq=jnp.zeros((1, 1, HIDDEN), jnp.float32),
            wk=nrm(lk[1], (HIDDEN, HIDDEN)), bk=jnp.zeros((1, 1, HIDDEN), jnp.float32),
            wv=nrm(lk[2], (HIDDEN, HIDDEN)), bv=jnp.zeros((1, 1, HIDDEN), jnp.float32),
            wo=nrm(lk[3], (HIDDEN, HIDDEN)), bo=jnp.zeros((1, 1, HIDDEN), jnp.float32),
            ln2_g=jnp.ones((1, 1, HIDDEN), jnp.float32),
            ln2_b=jnp.zeros((1, 1, HIDDEN), jnp.float32),
            w1=nrm(lk[4], (HIDDEN, MLP)), b1=jnp.zeros((1, 1, MLP), jnp.float32),
            w2=nrm(lk[5], (MLP, HIDDEN)), b2=jnp.zeros((1, 1, HIDDEN), jnp.float32),
        ))
    return params


# ----------------------------- main -----------------------------
if __name__ == "__main__":
    key = jax.random.PRNGKey(0)
    k_img, k_lbl, k_par = jax.random.split(key, 3)
    pixel_values = jax.random.normal(k_img, (B, C, IMG, IMG), dtype=jnp.float32)
    labels = jax.random.randint(k_lbl, (B,), 0, NUM_LABELS, dtype=jnp.int32)
    params = init_params(k_par)

    logits, loss = jax.jit(vit_forward)(pixel_values, labels, params)
    (logits, loss) = jax.block_until_ready((logits, loss))

    ref_logits, ref_loss = reference_forward(pixel_values, labels, params)
    assert logits.shape == (B, NUM_LABELS)
    assert bool(jnp.all(jnp.isfinite(logits))) and bool(jnp.isfinite(loss))
    assert bool(jnp.allclose(logits, ref_logits, atol=5e-2, rtol=5e-2))
    assert bool(jnp.allclose(loss, ref_loss, atol=5e-2, rtol=5e-2))
    print("KERNEL_OK")
</pallas_src>

<mosaic_0001>
module attributes {stable_mosaic.version = 11 : i64} {
  func.func @vit_fused_kernel(%arg0: memref<2xi32, #tpu.memory_space<smem>>, %arg1: memref<2x4x768xf32, #tpu.memory_space<vmem>>, %arg2: memref<768x32xbf16, #tpu.memory_space<vmem>>, %arg3: memref<7x32xf32, #tpu.memory_space<vmem>>, %arg4: memref<2x32x96xbf16, #tpu.memory_space<vmem>>, %arg5: memref<2x1x96xf32, #tpu.memory_space<vmem>>, %arg6: memref<2x32x32xbf16, #tpu.memory_space<vmem>>, %arg7: memref<2x32x128xbf16, #tpu.memory_space<vmem>>, %arg8: memref<2x1x128xf32, #tpu.memory_space<vmem>>, %arg9: memref<2x128x32xbf16, #tpu.memory_space<vmem>>, %arg10: memref<2x6x32xf32, #tpu.memory_space<vmem>>, %arg11: memref<2x32xf32, #tpu.memory_space<vmem>>, %arg12: memref<32x3xf32, #tpu.memory_space<vmem>>, %arg13: memref<1x3xf32, #tpu.memory_space<vmem>>, %arg14: memref<2x3xf32, #tpu.memory_space<vmem>>, %arg15: memref<1x1xf32, #tpu.memory_space<vmem>>) attributes {dimension_semantics = [], scalar_prefetch = 0 : i64, scratch_operands = 0 : i64, tpu.core_type = #tpu.core_type<tc>} {
    %c0 = arith.constant 0 : index
    %c0_0 = arith.constant 0 : index
    %0 = vector.load %arg3[%c0, %c0_0] : memref<7x32xf32, #tpu.memory_space<vmem>>, vector<7x32xf32>
    %1 = vector.extract_strided_slice %0 {offsets = [0, 0], sizes = [1, 32], strides = [1, 1]} : vector<7x32xf32> to vector<1x32xf32>
    %2 = vector.extract_strided_slice %0 {offsets = [1, 0], sizes = [1, 32], strides = [1, 1]} : vector<7x32xf32> to vector<1x32xf32>
    %3 = vector.extract_strided_slice %0 {offsets = [2, 0], sizes = [5, 32], strides = [1, 1]} : vector<7x32xf32> to vector<5x32xf32>
    %c0_1 = arith.constant 0 : index
    %c0_2 = arith.constant 0 : index
    %c0_3 = arith.constant 0 : index
    %4 = vector.load %arg1[%c0_1, %c0_2, %c0_3] : memref<2x4x768xf32, #tpu.memory_space<vmem>>, vector<1x4x768xf32>
    %5 = vector.shape_cast %4 : vector<1x4x768xf32> to vector<4x768xf32>
    %c0_4 = arith.constant 0 : index
    %c0_5 = arith.constant 0 : index
    %6 = vector.load %arg2[%c0_4, %c0_5] : memref<768x32xbf16, #tpu.memory_space<vmem>>, vector<768x32xbf16>
    %7 = arith.truncf %5 : vector<4x768xf32> to vector<4x768xbf16>
    %cst = arith.constant dense<0.000000e+00> : vector<4x32xf32>
    %8 = tpu.matmul %7, %6, %cst {dimension_numbers = #tpu.dot_dimension_numbers<[1], [0], [0], [1], [0, 0, 1, 1], [], []>} : vector<4x768xbf16>, vector<768x32xbf16>, vector<4x32xf32> -> vector<4x32xf32>
    %9 = vector.broadcast %1 : vector<1x32xf32> to vector<4x32xf32>
    %10 = arith.addf %8, %9 : vector<4x32xf32>
    %11 = tpu.concatenate %2, %10 in 0 : vector<1x32xf32>, vector<4x32xf32> -> vector<5x32xf32>
    %12 = arith.addf %11, %3 : vector<5x32xf32>
    %c1 = arith.constant 1 : index
    %c0_6 = arith.constant 0 : index
    %c0_7 = arith.constant 0 : index
    %13 = vector.load %arg1[%c1, %c0_6, %c0_7] : memref<2x4x768xf32, #tpu.memory_space<vmem>>, vector<1x4x768xf32>
    %14 = vector.shape_cast %13 : vector<1x4x768xf32> to vector<4x768xf32>
    %c0_8 = arith.constant 0 : index
    %c0_9 = arith.constant 0 : index
    %15 = vector.load %arg2[%c0_8, %c0_9] : memref<768x32xbf16, #tpu.memory_space<vmem>>, vector<768x32xbf16>
    %16 = arith.truncf %14 : vector<4x768xf32> to vector<4x768xbf16>
    %cst_10 = arith.constant dense<0.000000e+00> : vector<4x32xf32>
    %17 = tpu.matmul %16, %15, %cst_10 {dimension_numbers = #tpu.dot_dimension_numbers<[1], [0], [0], [1], [0, 0, 1, 1], [], []>} : vector<4x768xbf16>, vector<768x32xbf16>, vector<4x32xf32> -> vector<4x32xf32>
    %18 = vector.broadcast %1 : vector<1x32xf32> to vector<4x32xf32>
    %19 = arith.addf %17, %18 : vector<4x32xf32>
    %20 = tpu.concatenate %2, %19 in 0 : vector<1x32xf32>, vector<4x32xf32> -> vector<5x32xf32>
    %21 = arith.addf %20, %3 : vector<5x32xf32>
    %22 = tpu.concatenate %12, %21 in 0 : vector<5x32xf32>, vector<5x32xf32> -> vector<10x32xf32>
    %c0_11 = arith.constant 0 : index
    %c0_12 = arith.constant 0 : index
    %c0_13 = arith.constant 0 : index
    %23 = vector.load %arg10[%c0_11, %c0_12, %c0_13] : memref<2x6x32xf32, #tpu.memory_space<vmem>>, vector<1x6x32xf32>
    %24 = vector.shape_cast %23 : vector<1x6x32xf32> to vector<6x32xf32>
    %25 = vector.extract_strided_slice %24 {offsets = [0, 0], sizes = [1, 32], strides = [1, 1]} : vector<6x32xf32> to vector<1x32xf32>
    %26 = vector.extract_strided_slice %24 {offsets = [1, 0], sizes = [1, 32], strides = [1, 1]} : vector<6x32xf32> to vector<1x32xf32>
    %27 = vector.extract_strided_slice %24 {offsets = [2, 0], sizes = [1, 32], strides = [1, 1]} : vector<6x32xf32> to vector<1x32xf32>
    %28 = vector.extract_strided_slice %24 {offsets = [3, 0], sizes = [1, 32], strides = [1, 1]} : vector<6x32xf32> to vector<1x32xf32>
    %29 = vector.extract_strided_slice %24 {offsets = [4, 0], sizes = [1, 32], strides = [1, 1]} : vector<6x32xf32> to vector<1x32xf32>
    %30 = vector.extract_strided_slice %24 {offsets = [5, 0], sizes = [1, 32], strides = [1, 1]} : vector<6x32xf32> to vector<1x32xf32>
    %cst_14 = arith.constant dense<0.000000e+00> : vector<10xf32>
    %31 = vector.multi_reduction <add>, %22, %cst_14 [1] : vector<10x32xf32> to vector<10xf32>
    %32 = vector.shape_cast %31 : vector<10xf32> to vector<10x1xf32>
    %cst_15 = arith.constant 3.200000e+01 : f32
    %33 = vector.broadcast %cst_15 : f32 to vector<10x1xf32>
    %34 = arith.divf %32, %33 : vector<10x1xf32>
    %35 = vector.broadcast %34 : vector<10x1xf32> to vector<10x32xf32>
    %36 = arith.subf %22, %35 : vector<10x32xf32>
    %37 = arith.mulf %36, %36 : vector<10x32xf32>
    %cst_16 = arith.constant dense<0.000000e+00> : vector<10xf32>
    %38 = vector.multi_reduction <add>, %37, %cst_16 [1] : vector<10x32xf32> to vector<10xf32>
    %39 = vector.shape_cast %38 : vector<10xf32> to vector<10x1xf32>
    %cst_17 = arith.constant 3.200000e+01 : f32
    %40 = vector.broadcast %cst_17 : f32 to vector<10x1xf32>
    %41 = arith.divf %39, %40 : vector<10x1xf32>
    %42 = vector.broadcast %34 : vector<10x1xf32> to vector<10x32xf32>
    %43 = arith.subf %22, %42 : vector<10x32xf32>
    %cst_18 = arith.constant 9.99999996E-13 : f32
    %44 = vector.broadcast %cst_18 : f32 to vector<10x1xf32>
    %45 = arith.addf %41, %44 : vector<10x1xf32>
    %46 = math.rsqrt %45 : vector<10x1xf32>
    %47 = vector.broadcast %46 : vector<10x1xf32> to vector<10x32xf32>
    %48 = arith.mulf %43, %47 : vector<10x32xf32>
    %49 = vector.broadcast %25 : vector<1x32xf32> to vector<10x32xf32>
    %50 = arith.mulf %48, %49 : vector<10x32xf32>
    %51 = vector.broadcast %26 : vector<1x32xf32> to vector<10x32xf32>
    %52 = arith.addf %50, %51 : vector<10x32xf32>
    %c0_19 = arith.constant 0 : index
    %c0_20 = arith.constant 0 : index
    %c0_21 = arith.constant 0 : index
    %53 = vector.load %arg4[%c0_19, %c0_20, %c0_21] : memref<2x32x96xbf16, #tpu.memory_space<vmem>>, vector<1x32x96xbf16>
    %54 = vector.shape_cast %53 : vector<1x32x96xbf16> to vector<32x96xbf16>
    %55 = arith.truncf %52 : vector<10x32xf32> to vector<10x32xbf16>
    %cst_22 = arith.constant dense<0.000000e+00> : vector<10x96xf32>
    %56 = tpu.matmul %55, %54, %cst_22 {dimension_numbers = #tpu.dot_dimension_numbers<[1], [0], [0], [1], [0, 0, 1, 1], [], []>} : vector<10x32xbf16>, vector<32x96xbf16>, vector<10x96xf32> -> vector<10x96xf32>
    %c0_23 = arith.constant 0 : index
    %c0_24 = arith.constant 0 : index
    %c0_25 = arith.constant 0 : index
    %57 = vector.load %arg5[%c0_23, %c0_24, %c0_25] : memref<2x1x96xf32, #tpu.memory_space<vmem>>, vector<1x1x96xf32>
    %58 = vector.shape_cast %57 : vector<1x1x96xf32> to vector<1x96xf32>
    %59 = vector.broadcast %58 : vector<1x96xf32> to vector<10x96xf32>
    %60 = arith.addf %56, %59 : vector<10x96xf32>
    %61 = vector.extract_strided_slice %60 {offsets = [0, 0], sizes = [5, 8], strides = [1, 1]} : vector<10x96xf32> to vector<5x8xf32>
    %62 = vector.extract_strided_slice %60 {offsets = [0, 32], sizes = [5, 8], strides = [1, 1]} : vector<10x96xf32> to vector<5x8xf32>
    %63 = vector.extract_strided_slice %60 {offsets = [0, 64], sizes = [5, 8], strides = [1, 1]} : vector<10x96xf32> to vector<5x8xf32>
    %cst_26 = arith.constant dense<0.000000e+00> : vector<5x5xf32>
    %64 = tpu.matmul %61, %62, %cst_26 {dimension_numbers = #tpu.dot_dimension_numbers<[1], [1], [0], [0], [0, 0, 1, 0], [], []>} : vector<5x8xf32>, vector<5x8xf32>, vector<5x5xf32> -> vector<5x5xf32>
    %cst_27 = arith.constant 0.353553385 : f32
    %65 = vector.broadcast %cst_27 : f32 to vector<5x5xf32>
    %66 = arith.mulf %64, %65 : vector<5x5xf32>
    %cst_28 = arith.constant dense<0xFF800000> : vector<5xf32>
    %67 = vector.multi_reduction <maximumf>, %66, %cst_28 [1] : vector<5x5xf32> to vector<5xf32>
    %68 = vector.shape_cast %67 : vector<5xf32> to vector<5x1xf32>
    %69 = vector.broadcast %68 : vector<5x1xf32> to vector<5x5xf32>
    %70 = arith.subf %66, %69 : vector<5x5xf32>
    %71 = math.exp %70 : vector<5x5xf32>
    %cst_29 = arith.constant dense<0.000000e+00> : vector<5xf32>
    %72 = vector.multi_reduction <add>, %71, %cst_29 [1] : vector<5x5xf32> to vector<5xf32>
    %73 = vector.shape_cast %72 : vector<5xf32> to vector<5x1xf32>
    %74 = tpu.reciprocal %73 {approx = true} : vector<5x1xf32> -> vector<5x1xf32>
    %75 = vector.broadcast %74 : vector<5x1xf32> to vector<5x5xf32>
    %76 = arith.mulf %71, %75 : vector<5x5xf32>
    %cst_30 = arith.constant dense<0.000000e+00> : vector<5x8xf32>
    %77 = tpu.matmul %76, %63, %cst_30 {dimension_numbers = #tpu.dot_dimension_numbers<[1], [0], [0], [1], [0, 0, 1, 1], [], []>} : vector<5x5xf32>, vector<5x8xf32>, vector<5x8xf32> -> vector<5x8xf32>
    %78 = vector.extract_strided_slice %60 {offsets = [0, 8], sizes = [5, 8], strides = [1, 1]} : vector<10x96xf32> to vector<5x8xf32>
    %79 = vector.extract_strided_slice %60 {offsets = [0, 40], sizes = [5, 8], strides = [1, 1]} : vector<10x96xf32> to vector<5x8xf32>
    %80 = vector.extract_strided_slice %60 {offsets = [0, 72], sizes = [5, 8], strides = [1, 1]} : vector<10x96xf32> to vector<5x8xf32>
    %cst_31 = arith.constant dense<0.000000e+00> : vector<5x5xf32>
    %81 = tpu.matmul %78, %79, %cst_31 {dimension_numbers = #tpu.dot_dimension_numbers<[1], [1], [0], [0], [0, 0, 1, 0], [], []>} : vector<5x8xf32>, vector<5x8xf32>, vector<5x5xf32> -> vector<5x5xf32>
    %cst_32 = arith.constant 0.353553385 : f32
    %82 = vector.broadcast %cst_32 : f32 to vector<5x5xf32>
    %83 = arith.mulf %81, %82 : vector<5x5xf32>
    %cst_33 = arith.constant dense<0xFF800000> : vector<5xf32>
    %84 = vector.multi_reduction <maximumf>, %83, %cst_33 [1] : vector<5x5xf32> to vector<5xf32>
    %85 = vector.shape_cast %84 : vector<5xf32> to vector<5x1xf32>
    %86 = vector.broadcast %85 : vector<5x1xf32> to vector<5x5xf32>
    %87 = arith.subf %83, %86 : vector<5x5xf32>
    %88 = math.exp %87 : vector<5x5xf32>
    %cst_34 = arith.constant dense<0.000000e+00> : vector<5xf32>
    %89 = vector.multi_reduction <add>, %88, %cst_34 [1] : vector<5x5xf32> to vector<5xf32>
    %90 = vector.shape_cast %89 : vector<5xf32> to vector<5x1xf32>
    %91 = tpu.reciprocal %90 {approx = true} : vector<5x1xf32> -> vector<5x1xf32>
    %92 = vector.broadcast %91 : vector<5x1xf32> to vector<5x5xf32>
    %93 = arith.mulf %88, %92 : vector<5x5xf32>
    %cst_35 = arith.constant dense<0.000000e+00> : vector<5x8xf32>
    %94 = tpu.matmul %93, %80, %cst_35 {dimension_numbers = #tpu.dot_dimension_numbers<[1], [0], [0], [1], [0, 0, 1, 1], [], []>} : vector<5x5xf32>, vector<5x8xf32>, vector<5x8xf32> -> vector<5x8xf32>
    %95 = vector.extract_strided_slice %60 {offsets = [0, 16], sizes = [5, 8], strides = [1, 1]} : vector<10x96xf32> to vector<5x8xf32>
    %96 = vector.extract_strided_slice %60 {offsets = [0, 48], sizes = [5, 8], strides = [1, 1]} : vector<10x96xf32> to vector<5x8xf32>
    %97 = vector.extract_strided_slice %60 {offsets = [0, 80], sizes = [5, 8], strides = [1, 1]} : vector<10x96xf32> to vector<5x8xf32>
    %cst_36 = arith.constant dense<0.000000e+00> : vector<5x5xf32>
    %98 = tpu.matmul %95, %96, %cst_36 {dimension_numbers = #tpu.dot_dimension_numbers<[1], [1], [0], [0], [0, 0, 1, 0], [], []>} : vector<5x8xf32>, vector<5x8xf32>, vector<5x5xf32> -> vector<5x5xf32>
    %cst_37 = arith.constant 0.353553385 : f32
    %99 = vector.broadcast %cst_37 : f32 to vector<5x5xf32>
    %100 = arith.mulf %98, %99 : vector<5x5xf32>
    %cst_38 = arith.constant dense<0xFF800000> : vector<5xf32>
    %101 = vector.multi_reduction <maximumf>, %100, %cst_38 [1] : vector<5x5xf32> to vector<5xf32>
    %102 = vector.shape_cast %101 : vector<5xf32> to vector<5x1xf32>
    %103 = vector.broadcast %102 : vector<5x1xf32> to vector<5x5xf32>
    %104 = arith.subf %100, %103 : vector<5x5xf32>
    %105 = math.exp %104 : vector<5x5xf32>
    %cst_39 = arith.constant dense<0.000000e+00> : vector<5xf32>
    %106 = vector.multi_reduction <add>, %105, %cst_39 [1] : vector<5x5xf32> to vector<5xf32>
    %107 = vector.shape_cast %106 : vector<5xf32> to vector<5x1xf32>
    %108 = tpu.reciprocal %107 {approx = true} : vector<5x1xf32> -> vector<5x1xf32>
    %109 = vector.broadcast %108 : vector<5x1xf32> to vector<5x5xf32>
    %110 = arith.mulf %105, %109 : vector<5x5xf32>
    %cst_40 = arith.constant dense<0.000000e+00> : vector<5x8xf32>
    %111 = tpu.matmul %110, %97, %cst_40 {dimension_numbers = #tpu.dot_dimension_numbers<[1], [0], [0], [1], [0, 0, 1, 1], [], []>} : vector<5x5xf32>, vector<5x8xf32>, vector<5x8xf32> -> vector<5x8xf32>
    %112 = vector.extract_strided_slice %60 {offsets = [0, 24], sizes = [5, 8], strides = [1, 1]} : vector<10x96xf32> to vector<5x8xf32>
    %113 = vector.extract_strided_slice %60 {offsets = [0, 56], sizes = [5, 8], strides = [1, 1]} : vector<10x96xf32> to vector<5x8xf32>
    %114 = vector.extract_strided_slice %60 {offsets = [0, 88], sizes = [5, 8], strides = [1, 1]} : vector<10x96xf32> to vector<5x8xf32>
    %cst_41 = arith.constant dense<0.000000e+00> : vector<5x5xf32>
    %115 = tpu.matmul %112, %113, %cst_41 {dimension_numbers = #tpu.dot_dimension_numbers<[1], [1], [0], [0], [0, 0, 1, 0], [], []>} : vector<5x8xf32>, vector<5x8xf32>, vector<5x5xf32> -> vector<5x5xf32>
    %cst_42 = arith.constant 0.353553385 : f32
    %116 = vector.broadcast %cst_42 : f32 to vector<5x5xf32>
    %117 = arith.mulf %115, %116 : vector<5x5xf32>
    %cst_43 = arith.constant dense<0xFF800000> : vector<5xf32>
    %118 = vector.multi_reduction <maximumf>, %117, %cst_43 [1] : vector<5x5xf32> to vector<5xf32>
    %119 = vector.shape_cast %118 : vector<5xf32> to vector<5x1xf32>
    %120 = vector.broadcast %119 : vector<5x1xf32> to vector<5x5xf32>
    %121 = arith.subf %117, %120 : vector<5x5xf32>
    %122 = math.exp %121 : vector<5x5xf32>
    %cst_44 = arith.constant dense<0.000000e+00> : vector<5xf32>
    %123 = vector.multi_reduction <add>, %122, %cst_44 [1] : vector<5x5xf32> to vector<5xf32>
    %124 = vector.shape_cast %123 : vector<5xf32> to vector<5x1xf32>
    %125 = tpu.reciprocal %124 {approx = true} : vector<5x1xf32> -> vector<5x1xf32>
    %126 = vector.broadcast %125 : vector<5x1xf32> to vector<5x5xf32>
    %127 = arith.mulf %122, %126 : vector<5x5xf32>
    %cst_45 = arith.constant dense<0.000000e+00> : vector<5x8xf32>
    %128 = tpu.matmul %127, %114, %cst_45 {dimension_numbers = #tpu.dot_dimension_numbers<[1], [0], [0], [1], [0, 0, 1, 1], [], []>} : vector<5x5xf32>, vector<5x8xf32>, vector<5x8xf32> -> vector<5x8xf32>
    %129 = tpu.concatenate %77, %94, %111, %128 in 1 : vector<5x8xf32>, vector<5x8xf32>, vector<5x8xf32>, vector<5x8xf32> -> vector<5x32xf32>
    %130 = vector.extract_strided_slice %60 {offsets = [5, 0], sizes = [5, 8], strides = [1, 1]} : vector<10x96xf32> to vector<5x8xf32>
    %131 = vector.extract_strided_slice %60 {offsets = [5, 32], sizes = [5, 8], strides = [1, 1]} : vector<10x96xf32> to vector<5x8xf32>
    %132 = vector.extract_strided_slice %60 {offsets = [5, 64], sizes = [5, 8], strides = [1, 1]} : vector<10x96xf32> to vector<5x8xf32>
    %cst_46 = arith.constant dense<0.000000e+00> : vector<5x5xf32>
    %133 = tpu.matmul %130, %131, %cst_46 {dimension_numbers = #tpu.dot_dimension_numbers<[1], [1], [0], [0], [0, 0, 1, 0], [], []>} : vector<5x8xf32>, vector<5x8xf32>, vector<5x5xf32> -> vector<5x5xf32>
    %cst_47 = arith.constant 0.353553385 : f32
    %134 = vector.broadcast %cst_47 : f32 to vector<5x5xf32>
    %135 = arith.mulf %133, %134 : vector<5x5xf32>
    %cst_48 = arith.constant dense<0xFF800000> : vector<5xf32>
    %136 = vector.multi_reduction <maximumf>, %135, %cst_48 [1] : vector<5x5xf32> to vector<5xf32>
    %137 = vector.shape_cast %136 : vector<5xf32> to vector<5x1xf32>
    %138 = vector.broadcast %137 : vector<5x1xf32> to vector<5x5xf32>
    %139 = arith.subf %135, %138 : vector<5x5xf32>
    %140 = math.exp %139 : vector<5x5xf32>
    %cst_49 = arith.constant dense<0.000000e+00> : vector<5xf32>
    %141 = vector.multi_reduction <add>, %140, %cst_49 [1] : vector<5x5xf32> to vector<5xf32>
    %142 = vector.shape_cast %141 : vector<5xf32> to vector<5x1xf32>
    %143 = tpu.reciprocal %142 {approx = true} : vector<5x1xf32> -> vector<5x1xf32>
    %144 = vector.broadcast %143 : vector<5x1xf32> to vector<5x5xf32>
    %145 = arith.mulf %140, %144 : vector<5x5xf32>
    %cst_50 = arith.constant dense<0.000000e+00> : vector<5x8xf32>
    %146 = tpu.matmul %145, %132, %cst_50 {dimension_numbers = #tpu.dot_dimension_numbers<[1], [0], [0], [1], [0, 0, 1, 1], [], []>} : vector<5x5xf32>, vector<5x8xf32>, vector<5x8xf32> -> vector<5x8xf32>
    %147 = vector.extract_strided_slice %60 {offsets = [5, 8], sizes = [5, 8], strides = [1, 1]} : vector<10x96xf32> to vector<5x8xf32>
    %148 = vector.extract_strided_slice %60 {offsets = [5, 40], sizes = [5, 8], strides = [1, 1]} : vector<10x96xf32> to vector<5x8xf32>
    %149 = vector.extract_strided_slice %60 {offsets = [5, 72], sizes = [5, 8], strides = [1, 1]} : vector<10x96xf32> to vector<5x8xf32>
    %cst_51 = arith.constant dense<0.000000e+00> : vector<5x5xf32>
    %150 = tpu.matmul %147, %148, %cst_51 {dimension_numbers = #tpu.dot_dimension_numbers<[1], [1], [0], [0], [0, 0, 1, 0], [], []>} : vector<5x8xf32>, vector<5x8xf32>, vector<5x5xf32> -> vector<5x5xf32>
    %cst_52 = arith.constant 0.353553385 : f32
    %151 = vector.broadcast %cst_52 : f32 to vector<5x5xf32>
    %152 = arith.mulf %150, %151 : vector<5x5xf32>
    %cst_53 = arith.constant dense<0xFF800000> : vector<5xf32>
    %153 = vector.multi_reduction <maximumf>, %152, %cst_53 [1] : vector<5x5xf32> to vector<5xf32>
    %154 = vector.shape_cast %153 : vector<5xf32> to vector<5x1xf32>
    %155 = vector.broadcast %154 : vector<5x1xf32> to vector<5x5xf32>
    %156 = arith.subf %152, %155 : vector<5x5xf32>
    %157 = math.exp %156 : vector<5x5xf32>
    %cst_54 = arith.constant dense<0.000000e+00> : vector<5xf32>
    %158 = vector.multi_reduction <add>, %157, %cst_54 [1] : vector<5x5xf32> to vector<5xf32>
    %159 = vector.shape_cast %158 : vector<5xf32> to vector<5x1xf32>
    %160 = tpu.reciprocal %159 {approx = true} : vector<5x1xf32> -> vector<5x1xf32>
    %161 = vector.broadcast %160 : vector<5x1xf32> to vector<5x5xf32>
    %162 = arith.mulf %157, %161 : vector<5x5xf32>
    %cst_55 = arith.constant dense<0.000000e+00> : vector<5x8xf32>
    %163 = tpu.matmul %162, %149, %cst_55 {dimension_numbers = #tpu.dot_dimension_numbers<[1], [0], [0], [1], [0, 0, 1, 1], [], []>} : vector<5x5xf32>, vector<5x8xf32>, vector<5x8xf32> -> vector<5x8xf32>
    %164 = vector.extract_strided_slice %60 {offsets = [5, 16], sizes = [5, 8], strides = [1, 1]} : vector<10x96xf32> to vector<5x8xf32>
    %165 = vector.extract_strided_slice %60 {offsets = [5, 48], sizes = [5, 8], strides = [1, 1]} : vector<10x96xf32> to vector<5x8xf32>
    %166 = vector.extract_strided_slice %60 {offsets = [5, 80], sizes = [5, 8], strides = [1, 1]} : vector<10x96xf32> to vector<5x8xf32>
    %cst_56 = arith.constant dense<0.000000e+00> : vector<5x5xf32>
    %167 = tpu.matmul %164, %165, %cst_56 {dimension_numbers = #tpu.dot_dimension_numbers<[1], [1], [0], [0], [0, 0, 1, 0], [], []>} : vector<5x8xf32>, vector<5x8xf32>, vector<5x5xf32> -> vector<5x5xf32>
    %cst_57 = arith.constant 0.353553385 : f32
    %168 = vector.broadcast %cst_57 : f32 to vector<5x5xf32>
    %169 = arith.mulf %167, %168 : vector<5x5xf32>
    %cst_58 = arith.constant dense<0xFF800000> : vector<5xf32>
    %170 = vector.multi_reduction <maximumf>, %169, %cst_58 [1] : vector<5x5xf32> to vector<5xf32>
    %171 = vector.shape_cast %170 : vector<5xf32> to vector<5x1xf32>
    %172 = vector.broadcast %171 : vector<5x1xf32> to vector<5x5xf32>
    %173 = arith.subf %169, %172 : vector<5x5xf32>
    %174 = math.exp %173 : vector<5x5xf32>
    %cst_59 = arith.constant dense<0.000000e+00> : vector<5xf32>
    %175 = vector.multi_reduction <add>, %174, %cst_59 [1] : vector<5x5xf32> to vector<5xf32>
    %176 = vector.shape_cast %175 : vector<5xf32> to vector<5x1xf32>
    %177 = tpu.reciprocal %176 {approx = true} : vector<5x1xf32> -> vector<5x1xf32>
    %178 = vector.broadcast %177 : vector<5x1xf32> to vector<5x5xf32>
    %179 = arith.mulf %174, %178 : vector<5x5xf32>
    %cst_60 = arith.constant dense<0.000000e+00> : vector<5x8xf32>
    %180 = tpu.matmul %179, %166, %cst_60 {dimension_numbers = #tpu.dot_dimension_numbers<[1], [0], [0], [1], [0, 0, 1, 1], [], []>} : vector<5x5xf32>, vector<5x8xf32>, vector<5x8xf32> -> vector<5x8xf32>
    %181 = vector.extract_strided_slice %60 {offsets = [5, 24], sizes = [5, 8], strides = [1, 1]} : vector<10x96xf32> to vector<5x8xf32>
    %182 = vector.extract_strided_slice %60 {offsets = [5, 56], sizes = [5, 8], strides = [1, 1]} : vector<10x96xf32> to vector<5x8xf32>
    %183 = vector.extract_strided_slice %60 {offsets = [5, 88], sizes = [5, 8], strides = [1, 1]} : vector<10x96xf32> to vector<5x8xf32>
    %cst_61 = arith.constant dense<0.000000e+00> : vector<5x5xf32>
    %184 = tpu.matmul %181, %182, %cst_61 {dimension_numbers = #tpu.dot_dimension_numbers<[1], [1], [0], [0], [0, 0, 1, 0], [], []>} : vector<5x8xf32>, vector<5x8xf32>, vector<5x5xf32> -> vector<5x5xf32>
    %cst_62 = arith.constant 0.353553385 : f32
    %185 = vector.broadcast %cst_62 : f32 to vector<5x5xf32>
    %186 = arith.mulf %184, %185 : vector<5x5xf32>
    %cst_63 = arith.constant dense<0xFF800000> : vector<5xf32>
    %187 = vector.multi_reduction <maximumf>, %186, %cst_63 [1] : vector<5x5xf32> to vector<5xf32>
    %188 = vector.shape_cast %187 : vector<5xf32> to vector<5x1xf32>
    %189 = vector.broadcast %188 : vector<5x1xf32> to vector<5x5xf32>
    %190 = arith.subf %186, %189 : vector<5x5xf32>
    %191 = math.exp %190 : vector<5x5xf32>
    %cst_64 = arith.constant dense<0.000000e+00> : vector<5xf32>
    %192 = vector.multi_reduction <add>, %191, %cst_64 [1] : vector<5x5xf32> to vector<5xf32>
    %193 = vector.shape_cast %192 : vector<5xf32> to vector<5x1xf32>
    %194 = tpu.reciprocal %193 {approx = true} : vector<5x1xf32> -> vector<5x1xf32>
    %195 = vector.broadcast %194 : vector<5x1xf32> to vector<5x5xf32>
    %196 = arith.mulf %191, %195 : vector<5x5xf32>
    %cst_65 = arith.constant dense<0.000000e+00> : vector<5x8xf32>
    %197 = tpu.matmul %196, %183, %cst_65 {dimension_numbers = #tpu.dot_dimension_numbers<[1], [0], [0], [1], [0, 0, 1, 1], [], []>} : vector<5x5xf32>, vector<5x8xf32>, vector<5x8xf32> -> vector<5x8xf32>
    %198 = tpu.concatenate %146, %163, %180, %197 in 1 : vector<5x8xf32>, vector<5x8xf32>, vector<5x8xf32>, vector<5x8xf32> -> vector<5x32xf32>
    %199 = tpu.concatenate %129, %198 in 0 : vector<5x32xf32>, vector<5x32xf32> -> vector<10x32xf32>
    %c0_66 = arith.constant 0 : index
    %c0_67 = arith.constant 0 : index
    %c0_68 = arith.constant 0 : index
    %200 = vector.load %arg6[%c0_66, %c0_67, %c0_68] : memref<2x32x32xbf16, #tpu.memory_space<vmem>>, vector<1x32x32xbf16>
    %201 = vector.shape_cast %200 : vector<1x32x32xbf16> to vector<32x32xbf16>
    %202 = arith.truncf %199 : vector<10x32xf32> to vector<10x32xbf16>
    %cst_69 = arith.constant dense<0.000000e+00> : vector<10x32xf32>
    %203 = tpu.matmul %202, %201, %cst_69 {dimension_numbers = #tpu.dot_dimension_numbers<[1], [0], [0], [1], [0, 0, 1, 1], [], []>} : vector<10x32xbf16>, vector<32x32xbf16>, vector<10x32xf32> -> vector<10x32xf32>
    %204 = arith.addf %22, %203 : vector<10x32xf32>
    %205 = vector.broadcast %29 : vector<1x32xf32> to vector<10x32xf32>
    %206 = arith.addf %204, %205 : vector<10x32xf32>
    %cst_70 = arith.constant dense<0.000000e+00> : vector<10xf32>
    %207 = vector.multi_reduction <add>, %206, %cst_70 [1] : vector<10x32xf32> to vector<10xf32>
    %208 = vector.shape_cast %207 : vector<10xf32> to vector<10x1xf32>
    %cst_71 = arith.constant 3.200000e+01 : f32
    %209 = vector.broadcast %cst_71 : f32 to vector<10x1xf32>
    %210 = arith.divf %208, %209 : vector<10x1xf32>
    %211 = vector.broadcast %210 : vector<10x1xf32> to vector<10x32xf32>
    %212 = arith.subf %206, %211 : vector<10x32xf32>
    %213 = arith.mulf %212, %212 : vector<10x32xf32>
    %cst_72 = arith.constant dense<0.000000e+00> : vector<10xf32>
    %214 = vector.multi_reduction <add>, %213, %cst_72 [1] : vector<10x32xf32> to vector<10xf32>
    %215 = vector.shape_cast %214 : vector<10xf32> to vector<10x1xf32>
    %cst_73 = arith.constant 3.200000e+01 : f32
    %216 = vector.broadcast %cst_73 : f32 to vector<10x1xf32>
    %217 = arith.divf %215, %216 : vector<10x1xf32>
    %218 = vector.broadcast %210 : vector<10x1xf32> to vector<10x32xf32>
    %219 = arith.subf %206, %218 : vector<10x32xf32>
    %cst_74 = arith.constant 9.99999996E-13 : f32
    %220 = vector.broadcast %cst_74 : f32 to vector<10x1xf32>
    %221 = arith.addf %217, %220 : vector<10x1xf32>
    %222 = math.rsqrt %221 : vector<10x1xf32>
    %223 = vector.broadcast %222 : vector<10x1xf32> to vector<10x32xf32>
    %224 = arith.mulf %219, %223 : vector<10x32xf32>
    %225 = vector.broadcast %27 : vector<1x32xf32> to vector<10x32xf32>
    %226 = arith.mulf %224, %225 : vector<10x32xf32>
    %227 = vector.broadcast %28 : vector<1x32xf32> to vector<10x32xf32>
    %228 = arith.addf %226, %227 : vector<10x32xf32>
    %c0_75 = arith.constant 0 : index
    %c0_76 = arith.constant 0 : index
    %c0_77 = arith.constant 0 : index
    %229 = vector.load %arg7[%c0_75, %c0_76, %c0_77] : memref<2x32x128xbf16, #tpu.memory_space<vmem>>, vector<1x32x128xbf16>
    %230 = vector.shape_cast %229 : vector<1x32x128xbf16> to vector<32x128xbf16>
    %231 = arith.truncf %228 : vector<10x32xf32> to vector<10x32xbf16>
    %cst_78 = arith.constant dense<0.000000e+00> : vector<10x128xf32>
    %232 = tpu.matmul %231, %230, %cst_78 {dimension_numbers = #tpu.dot_dimension_numbers<[1], [0], [0], [1], [0, 0, 1, 1], [], []>} : vector<10x32xbf16>, vector<32x128xbf16>, vector<10x128xf32> -> vector<10x128xf32>
    %c0_79 = arith.constant 0 : index
    %c0_80 = arith.constant 0 : index
    %c0_81 = arith.constant 0 : index
    %233 = vector.load %arg8[%c0_79, %c0_80, %c0_81] : memref<2x1x128xf32, #tpu.memory_space<vmem>>, vector<1x1x128xf32>
    %234 = vector.shape_cast %233 : vector<1x1x128xf32> to vector<1x128xf32>
    %235 = vector.broadcast %234 : vector<1x128xf32> to vector<10x128xf32>
    %236 = arith.addf %232, %235 : vector<10x128xf32>
    %237 = arith.mulf %236, %236 : vector<10x128xf32>
    %238 = arith.mulf %236, %237 : vector<10x128xf32>
    %cst_82 = arith.constant 4.471500e-02 : f32
    %239 = vector.broadcast %cst_82 : f32 to vector<10x128xf32>
    %240 = arith.mulf %239, %238 : vector<10x128xf32>
    %241 = arith.addf %236, %240 : vector<10x128xf32>
    %cst_83 = arith.constant 0.797884583 : f32
    %242 = vector.broadcast %cst_83 : f32 to vector<10x128xf32>
    %243 = arith.mulf %242, %241 : vector<10x128xf32>
    %244 = math.tanh %243 : vector<10x128xf32>
    %cst_84 = arith.constant 1.000000e+00 : f32
    %245 = vector.broadcast %cst_84 : f32 to vector<10x128xf32>
    %246 = arith.addf %245, %244 : vector<10x128xf32>
    %cst_85 = arith.constant 5.000000e-01 : f32
    %247 = vector.broadcast %cst_85 : f32 to vector<10x128xf32>
    %248 = arith.mulf %247, %246 : vector<10x128xf32>
    %249 = arith.mulf %236, %248 : vector<10x128xf32>
    %c0_86 = arith.constant 0 : index
    %c0_87 = arith.constant 0 : index
    %c0_88 = arith.constant 0 : index
    %250 = vector.load %arg9[%c0_86, %c0_87, %c0_88] : memref<2x128x32xbf16, #tpu.memory_space<vmem>>, vector<1x128x32xbf16>
    %251 = vector.shape_cast %250 : vector<1x128x32xbf16> to vector<128x32xbf16>
    %252 = arith.truncf %249 : vector<10x128xf32> to vector<10x128xbf16>
    %cst_89 = arith.constant dense<0.000000e+00> : vector<10x32xf32>
    %253 = tpu.matmul %252, %251, %cst_89 {dimension_numbers = #tpu.dot_dimension_numbers<[1], [0], [0], [1], [0, 0, 1, 1], [], []>} : vector<10x128xbf16>, vector<128x32xbf16>, vector<10x32xf32> -> vector<10x32xf32>
    %254 = arith.addf %206, %253 : vector<10x32xf32>
    %255 = vector.broadcast %30 : vector<1x32xf32> to vector<10x32xf32>
    %256 = arith.addf %254, %255 : vector<10x32xf32>
    %c1_90 = arith.constant 1 : index
    %c0_91 = arith.constant 0 : index
    %c0_92 = arith.constant 0 : index
    %257 = vector.load %arg10[%c1_90, %c0_91, %c0_92] : memref<2x6x32xf32, #tpu.memory_space<vmem>>, vector<1x6x32xf32>
    %258 = vector.shape_cast %257 : vector<1x6x32xf32> to vector<6x32xf32>
    %259 = vector.extract_strided_slice %258 {offsets = [0, 0], sizes = [1, 32], strides = [1, 1]} : vector<6x32xf32> to vector<1x32xf32>
    %260 = vector.extract_strided_slice %258 {offsets = [1, 0], sizes = [1, 32], strides = [1, 1]} : vector<6x32xf32> to vector<1x32xf32>
    %261 = vector.extract_strided_slice %258 {offsets = [2, 0], sizes = [1, 32], strides = [1, 1]} : vector<6x32xf32> to vector<1x32xf32>
    %262 = vector.extract_strided_slice %258 {offsets = [3, 0], sizes = [1, 32], strides = [1, 1]} : vector<6x32xf32> to vector<1x32xf32>
    %263 = vector.extract_strided_slice %258 {offsets = [4, 0], sizes = [1, 32], strides = [1, 1]} : vector<6x32xf32> to vector<1x32xf32>
    %264 = vector.extract_strided_slice %258 {offsets = [5, 0], sizes = [1, 32], strides = [1, 1]} : vector<6x32xf32> to vector<1x32xf32>
    %cst_93 = arith.constant dense<0.000000e+00> : vector<10xf32>
    %265 = vector.multi_reduction <add>, %256, %cst_93 [1] : vector<10x32xf32> to vector<10xf32>
    %266 = vector.shape_cast %265 : vector<10xf32> to vector<10x1xf32>
    %cst_94 = arith.constant 3.200000e+01 : f32
    %267 = vector.broadcast %cst_94 : f32 to vector<10x1xf32>
    %268 = arith.divf %266, %267 : vector<10x1xf32>
    %269 = vector.broadcast %268 : vector<10x1xf32> to vector<10x32xf32>
    %270 = arith.subf %256, %269 : vector<10x32xf32>
    %271 = arith.mulf %270, %270 : vector<10x32xf32>
    %cst_95 = arith.constant dense<0.000000e+00> : vector<10xf32>
    %272 = vector.multi_reduction <add>, %271, %cst_95 [1] : vector<10x32xf32> to vector<10xf32>
    %273 = vector.shape_cast %272 : vector<10xf32> to vector<10x1xf32>
    %cst_96 = arith.constant 3.200000e+01 : f32
    %274 = vector.broadcast %cst_96 : f32 to vector<10x1xf32>
    %275 = arith.divf %273, %274 : vector<10x1xf32>
    %276 = vector.broadcast %268 : vector<10x1xf32> to vector<10x32xf32>
    %277 = arith.subf %256, %276 : vector<10x32xf32>
    %cst_97 = arith.constant 9.99999996E-13 : f32
    %278 = vector.broadcast %cst_97 : f32 to vector<10x1xf32>
    %279 = arith.addf %275, %278 : vector<10x1xf32>
    %280 = math.rsqrt %279 : vector<10x1xf32>
    %281 = vector.broadcast %280 : vector<10x1xf32> to vector<10x32xf32>
    %282 = arith.mulf %277, %281 : vector<10x32xf32>
    %283 = vector.broadcast %259 : vector<1x32xf32> to vector<10x32xf32>
    %284 = arith.mulf %282, %283 : vector<10x32xf32>
    %285 = vector.broadcast %260 : vector<1x32xf32> to vector<10x32xf32>
    %286 = arith.addf %284, %285 : vector<10x32xf32>
    %c1_98 = arith.constant 1 : index
    %c0_99 = arith.constant 0 : index
    %c0_100 = arith.constant 0 : index
    %287 = vector.load %arg4[%c1_98, %c0_99, %c0_100] : memref<2x32x96xbf16, #tpu.memory_space<vmem>>, vector<1x32x96xbf16>
    %288 = vector.shape_cast %287 : vector<1x32x96xbf16> to vector<32x96xbf16>
    %289 = arith.truncf %286 : vector<10x32xf32> to vector<10x32xbf16>
    %cst_101 = arith.constant dense<0.000000e+00> : vector<10x96xf32>
    %290 = tpu.matmul %289, %288, %cst_101 {dimension_numbers = #tpu.dot_dimension_numbers<[1], [0], [0], [1], [0, 0, 1, 1], [], []>} : vector<10x32xbf16>, vector<32x96xbf16>, vector<10x96xf32> -> vector<10x96xf32>
    %c1_102 = arith.constant 1 : index
    %c0_103 = arith.constant 0 : index
    %c0_104 = arith.constant 0 : index
    %291 = vector.load %arg5[%c1_102, %c0_103, %c0_104] : memref<2x1x96xf32, #tpu.memory_space<vmem>>, vector<1x1x96xf32>
    %292 = vector.shape_cast %291 : vector<1x1x96xf32> to vector<1x96xf32>
    %293 = vector.broadcast %292 : vector<1x96xf32> to vector<10x96xf32>
    %294 = arith.addf %290, %293 : vector<10x96xf32>
    %295 = vector.extract_strided_slice %294 {offsets = [0, 0], sizes = [5, 8], strides = [1, 1]} : vector<10x96xf32> to vector<5x8xf32>
    %296 = vector.extract_strided_slice %294 {offsets = [0, 32], sizes = [5, 8], strides = [1, 1]} : vector<10x96xf32> to vector<5x8xf32>
    %297 = vector.extract_strided_slice %294 {offsets = [0, 64], sizes = [5, 8], strides = [1, 1]} : vector<10x96xf32> to vector<5x8xf32>
    %cst_105 = arith.constant dense<0.000000e+00> : vector<5x5xf32>
    %298 = tpu.matmul %295, %296, %cst_105 {dimension_numbers = #tpu.dot_dimension_numbers<[1], [1], [0], [0], [0, 0, 1, 0], [], []>} : vector<5x8xf32>, vector<5x8xf32>, vector<5x5xf32> -> vector<5x5xf32>
    %cst_106 = arith.constant 0.353553385 : f32
    %299 = vector.broadcast %cst_106 : f32 to vector<5x5xf32>
    %300 = arith.mulf %298, %299 : vector<5x5xf32>
    %cst_107 = arith.constant dense<0xFF800000> : vector<5xf32>
    %301 = vector.multi_reduction <maximumf>, %300, %cst_107 [1] : vector<5x5xf32> to vector<5xf32>
    %302 = vector.shape_cast %301 : vector<5xf32> to vector<5x1xf32>
    %303 = vector.broadcast %302 : vector<5x1xf32> to vector<5x5xf32>
    %304 = arith.subf %300, %303 : vector<5x5xf32>
    %305 = math.exp %304 : vector<5x5xf32>
    %cst_108 = arith.constant dense<0.000000e+00> : vector<5xf32>
    %306 = vector.multi_reduction <add>, %305, %cst_108 [1] : vector<5x5xf32> to vector<5xf32>
    %307 = vector.shape_cast %306 : vector<5xf32> to vector<5x1xf32>
    %308 = tpu.reciprocal %307 {approx = true} : vector<5x1xf32> -> vector<5x1xf32>
    %309 = vector.broadcast %308 : vector<5x1xf32> to vector<5x5xf32>
    %310 = arith.mulf %305, %309 : vector<5x5xf32>
    %cst_109 = arith.constant dense<0.000000e+00> : vector<5x8xf32>
    %311 = tpu.matmul %310, %297, %cst_109 {dimension_numbers = #tpu.dot_dimension_numbers<[1], [0], [0], [1], [0, 0, 1, 1], [], []>} : vector<5x5xf32>, vector<5x8xf32>, vector<5x8xf32> -> vector<5x8xf32>
    %312 = vector.extract_strided_slice %294 {offsets = [0, 8], sizes = [5, 8], strides = [1, 1]} : vector<10x96xf32> to vector<5x8xf32>
    %313 = vector.extract_strided_slice %294 {offsets = [0, 40], sizes = [5, 8], strides = [1, 1]} : vector<10x96xf32> to vector<5x8xf32>
    %314 = vector.extract_strided_slice %294 {offsets = [0, 72], sizes = [5, 8], strides = [1, 1]} : vector<10x96xf32> to vector<5x8xf32>
    %cst_110 = arith.constant dense<0.000000e+00> : vector<5x5xf32>
    %315 = tpu.matmul %312, %313, %cst_110 {dimension_numbers = #tpu.dot_dimension_numbers<[1], [1], [0], [0], [0, 0, 1, 0], [], []>} : vector<5x8xf32>, vector<5x8xf32>, vector<5x5xf32> -> vector<5x5xf32>
    %cst_111 = arith.constant 0.353553385 : f32
    %316 = vector.broadcast %cst_111 : f32 to vector<5x5xf32>
    %317 = arith.mulf %315, %316 : vector<5x5xf32>
    %cst_112 = arith.constant dense<0xFF800000> : vector<5xf32>
    %318 = vector.multi_reduction <maximumf>, %317, %cst_112 [1] : vector<5x5xf32> to vector<5xf32>
    %319 = vector.shape_cast %318 : vector<5xf32> to vector<5x1xf32>
    %320 = vector.broadcast %319 : vector<5x1xf32> to vector<5x5xf32>
    %321 = arith.subf %317, %320 : vector<5x5xf32>
    %322 = math.exp %321 : vector<5x5xf32>
    %cst_113 = arith.constant dense<0.000000e+00> : vector<5xf32>
    %323 = vector.multi_reduction <add>, %322, %cst_113 [1] : vector<5x5xf32> to vector<5xf32>
    %324 = vector.shape_cast %323 : vector<5xf32> to vector<5x1xf32>
    %325 = tpu.reciprocal %324 {approx = true} : vector<5x1xf32> -> vector<5x1xf32>
    %326 = vector.broadcast %325 : vector<5x1xf32> to vector<5x5xf32>
    %327 = arith.mulf %322, %326 : vector<5x5xf32>
    %cst_114 = arith.constant dense<0.000000e+00> : vector<5x8xf32>
    %328 = tpu.matmul %327, %314, %cst_114 {dimension_numbers = #tpu.dot_dimension_numbers<[1], [0], [0], [1], [0, 0, 1, 1], [], []>} : vector<5x5xf32>, vector<5x8xf32>, vector<5x8xf32> -> vector<5x8xf32>
    %329 = vector.extract_strided_slice %294 {offsets = [0, 16], sizes = [5, 8], strides = [1, 1]} : vector<10x96xf32> to vector<5x8xf32>
    %330 = vector.extract_strided_slice %294 {offsets = [0, 48], sizes = [5, 8], strides = [1, 1]} : vector<10x96xf32> to vector<5x8xf32>
    %331 = vector.extract_strided_slice %294 {offsets = [0, 80], sizes = [5, 8], strides = [1, 1]} : vector<10x96xf32> to vector<5x8xf32>
    %cst_115 = arith.constant dense<0.000000e+00> : vector<5x5xf32>
    %332 = tpu.matmul %329, %330, %cst_115 {dimension_numbers = #tpu.dot_dimension_numbers<[1], [1], [0], [0], [0, 0, 1, 0], [], []>} : vector<5x8xf32>, vector<5x8xf32>, vector<5x5xf32> -> vector<5x5xf32>
    %cst_116 = arith.constant 0.353553385 : f32
    %333 = vector.broadcast %cst_116 : f32 to vector<5x5xf32>
    %334 = arith.mulf %332, %333 : vector<5x5xf32>
    %cst_117 = arith.constant dense<0xFF800000> : vector<5xf32>
    %335 = vector.multi_reduction <maximumf>, %334, %cst_117 [1] : vector<5x5xf32> to vector<5xf32>
    %336 = vector.shape_cast %335 : vector<5xf32> to vector<5x1xf32>
    %337 = vector.broadcast %336 : vector<5x1xf32> to vector<5x5xf32>
    %338 = arith.subf %334, %337 : vector<5x5xf32>
    %339 = math.exp %338 : vector<5x5xf32>
    %cst_118 = arith.constant dense<0.000000e+00> : vector<5xf32>
    %340 = vector.multi_reduction <add>, %339, %cst_118 [1] : vector<5x5xf32> to vector<5xf32>
    %341 = vector.shape_cast %340 : vector<5xf32> to vector<5x1xf32>
    %342 = tpu.reciprocal %341 {approx = true} : vector<5x1xf32> -> vector<5x1xf32>
    %343 = vector.broadcast %342 : vector<5x1xf32> to vector<5x5xf32>
    %344 = arith.mulf %339, %343 : vector<5x5xf32>
    %cst_119 = arith.constant dense<0.000000e+00> : vector<5x8xf32>
    %345 = tpu.matmul %344, %331, %cst_119 {dimension_numbers = #tpu.dot_dimension_numbers<[1], [0], [0], [1], [0, 0, 1, 1], [], []>} : vector<5x5xf32>, vector<5x8xf32>, vector<5x8xf32> -> vector<5x8xf32>
    %346 = vector.extract_strided_slice %294 {offsets = [0, 24], sizes = [5, 8], strides = [1, 1]} : vector<10x96xf32> to vector<5x8xf32>
    %347 = vector.extract_strided_slice %294 {offsets = [0, 56], sizes = [5, 8], strides = [1, 1]} : vector<10x96xf32> to vector<5x8xf32>
    %348 = vector.extract_strided_slice %294 {offsets = [0, 88], sizes = [5, 8], strides = [1, 1]} : vector<10x96xf32> to vector<5x8xf32>
    %cst_120 = arith.constant dense<0.000000e+00> : vector<5x5xf32>
    %349 = tpu.matmul %346, %347, %cst_120 {dimension_numbers = #tpu.dot_dimension_numbers<[1], [1], [0], [0], [0, 0, 1, 0], [], []>} : vector<5x8xf32>, vector<5x8xf32>, vector<5x5xf32> -> vector<5x5xf32>
    %cst_121 = arith.constant 0.353553385 : f32
    %350 = vector.broadcast %cst_121 : f32 to vector<5x5xf32>
    %351 = arith.mulf %349, %350 : vector<5x5xf32>
    %cst_122 = arith.constant dense<0xFF800000> : vector<5xf32>
    %352 = vector.multi_reduction <maximumf>, %351, %cst_122 [1] : vector<5x5xf32> to vector<5xf32>
    %353 = vector.shape_cast %352 : vector<5xf32> to vector<5x1xf32>
    %354 = vector.broadcast %353 : vector<5x1xf32> to vector<5x5xf32>
    %355 = arith.subf %351, %354 : vector<5x5xf32>
    %356 = math.exp %355 : vector<5x5xf32>
    %cst_123 = arith.constant dense<0.000000e+00> : vector<5xf32>
    %357 = vector.multi_reduction <add>, %356, %cst_123 [1] : vector<5x5xf32> to vector<5xf32>
    %358 = vector.shape_cast %357 : vector<5xf32> to vector<5x1xf32>
    %359 = tpu.reciprocal %358 {approx = true} : vector<5x1xf32> -> vector<5x1xf32>
    %360 = vector.broadcast %359 : vector<5x1xf32> to vector<5x5xf32>
    %361 = arith.mulf %356, %360 : vector<5x5xf32>
    %cst_124 = arith.constant dense<0.000000e+00> : vector<5x8xf32>
    %362 = tpu.matmul %361, %348, %cst_124 {dimension_numbers = #tpu.dot_dimension_numbers<[1], [0], [0], [1], [0, 0, 1, 1], [], []>} : vector<5x5xf32>, vector<5x8xf32>, vector<5x8xf32> -> vector<5x8xf32>
    %363 = tpu.concatenate %311, %328, %345, %362 in 1 : vector<5x8xf32>, vector<5x8xf32>, vector<5x8xf32>, vector<5x8xf32> -> vector<5x32xf32>
    %364 = vector.extract_strided_slice %294 {offsets = [5, 0], sizes = [5, 8], strides = [1, 1]} : vector<10x96xf32> to vector<5x8xf32>
    %365 = vector.extract_strided_slice %294 {offsets = [5, 32], sizes = [5, 8], strides = [1, 1]} : vector<10x96xf32> to vector<5x8xf32>
    %366 = vector.extract_strided_slice %294 {offsets = [5, 64], sizes = [5, 8], strides = [1, 1]} : vector<10x96xf32> to vector<5x8xf32>
    %cst_125 = arith.constant dense<0.000000e+00> : vector<5x5xf32>
    %367 = tpu.matmul %364, %365, %cst_125 {dimension_numbers = #tpu.dot_dimension_numbers<[1], [1], [0], [0], [0, 0, 1, 0], [], []>} : vector<5x8xf32>, vector<5x8xf32>, vector<5x5xf32> -> vector<5x5xf32>
    %cst_126 = arith.constant 0.353553385 : f32
    %368 = vector.broadcast %cst_126 : f32 to vector<5x5xf32>
    %369 = arith.mulf %367, %368 : vector<5x5xf32>
    %cst_127 = arith.constant dense<0xFF800000> : vector<5xf32>
    %370 = vector.multi_reduction <maximumf>, %369, %cst_127 [1] : vector<5x5xf32> to vector<5xf32>
    %371 = vector.shape_cast %370 : vector<5xf32> to vector<5x1xf32>
    %372 = vector.broadcast %371 : vector<5x1xf32> to vector<5x5xf32>
    %373 = arith.subf %369, %372 : vector<5x5xf32>
    %374 = math.exp %373 : vector<5x5xf32>
    %cst_128 = arith.constant dense<0.000000e+00> : vector<5xf32>
    %375 = vector.multi_reduction <add>, %374, %cst_128 [1] : vector<5x5xf32> to vector<5xf32>
    %376 = vector.shape_cast %375 : vector<5xf32> to vector<5x1xf32>
    %377 = tpu.reciprocal %376 {approx = true} : vector<5x1xf32> -> vector<5x1xf32>
    %378 = vector.broadcast %377 : vector<5x1xf32> to vector<5x5xf32>
    %379 = arith.mulf %374, %378 : vector<5x5xf32>
    %cst_129 = arith.constant dense<0.000000e+00> : vector<5x8xf32>
    %380 = tpu.matmul %379, %366, %cst_129 {dimension_numbers = #tpu.dot_dimension_numbers<[1], [0], [0], [1], [0, 0, 1, 1], [], []>} : vector<5x5xf32>, vector<5x8xf32>, vector<5x8xf32> -> vector<5x8xf32>
    %381 = vector.extract_strided_slice %294 {offsets = [5, 8], sizes = [5, 8], strides = [1, 1]} : vector<10x96xf32> to vector<5x8xf32>
    %382 = vector.extract_strided_slice %294 {offsets = [5, 40], sizes = [5, 8], strides = [1, 1]} : vector<10x96xf32> to vector<5x8xf32>
    %383 = vector.extract_strided_slice %294 {offsets = [5, 72], sizes = [5, 8], strides = [1, 1]} : vector<10x96xf32> to vector<5x8xf32>
    %cst_130 = arith.constant dense<0.000000e+00> : vector<5x5xf32>
    %384 = tpu.matmul %381, %382, %cst_130 {dimension_numbers = #tpu.dot_dimension_numbers<[1], [1], [0], [0], [0, 0, 1, 0], [], []>} : vector<5x8xf32>, vector<5x8xf32>, vector<5x5xf32> -> vector<5x5xf32>
    %cst_131 = arith.constant 0.353553385 : f32
    %385 = vector.broadcast %cst_131 : f32 to vector<5x5xf32>
    %386 = arith.mulf %384, %385 : vector<5x5xf32>
    %cst_132 = arith.constant dense<0xFF800000> : vector<5xf32>
    %387 = vector.multi_reduction <maximumf>, %386, %cst_132 [1] : vector<5x5xf32> to vector<5xf32>
    %388 = vector.shape_cast %387 : vector<5xf32> to vector<5x1xf32>
    %389 = vector.broadcast %388 : vector<5x1xf32> to vector<5x5xf32>
    %390 = arith.subf %386, %389 : vector<5x5xf32>
    %391 = math.exp %390 : vector<5x5xf32>
    %cst_133 = arith.constant dense<0.000000e+00> : vector<5xf32>
    %392 = vector.multi_reduction <add>, %391, %cst_133 [1] : vector<5x5xf32> to vector<5xf32>
    %393 = vector.shape_cast %392 : vector<5xf32> to vector<5x1xf32>
    %394 = tpu.reciprocal %393 {approx = true} : vector<5x1xf32> -> vector<5x1xf32>
    %395 = vector.broadcast %394 : vector<5x1xf32> to vector<5x5xf32>
    %396 = arith.mulf %391, %395 : vector<5x5xf32>
    %cst_134 = arith.constant dense<0.000000e+00> : vector<5x8xf32>
    %397 = tpu.matmul %396, %383, %cst_134 {dimension_numbers = #tpu.dot_dimension_numbers<[1], [0], [0], [1], [0, 0, 1, 1], [], []>} : vector<5x5xf32>, vector<5x8xf32>, vector<5x8xf32> -> vector<5x8xf32>
    %398 = vector.extract_strided_slice %294 {offsets = [5, 16], sizes = [5, 8], strides = [1, 1]} : vector<10x96xf32> to vector<5x8xf32>
    %399 = vector.extract_strided_slice %294 {offsets = [5, 48], sizes = [5, 8], strides = [1, 1]} : vector<10x96xf32> to vector<5x8xf32>
    %400 = vector.extract_strided_slice %294 {offsets = [5, 80], sizes = [5, 8], strides = [1, 1]} : vector<10x96xf32> to vector<5x8xf32>
    %cst_135 = arith.constant dense<0.000000e+00> : vector<5x5xf32>
    %401 = tpu.matmul %398, %399, %cst_135 {dimension_numbers = #tpu.dot_dimension_numbers<[1], [1], [0], [0], [0, 0, 1, 0], [], []>} : vector<5x8xf32>, vector<5x8xf32>, vector<5x5xf32> -> vector<5x5xf32>
    %cst_136 = arith.constant 0.353553385 : f32
    %402 = vector.broadcast %cst_136 : f32 to vector<5x5xf32>
    %403 = arith.mulf %401, %402 : vector<5x5xf32>
    %cst_137 = arith.constant dense<0xFF800000> : vector<5xf32>
    %404 = vector.multi_reduction <maximumf>, %403, %cst_137 [1] : vector<5x5xf32> to vector<5xf32>
    %405 = vector.shape_cast %404 : vector<5xf32> to vector<5x1xf32>
    %406 = vector.broadcast %405 : vector<5x1xf32> to vector<5x5xf32>
    %407 = arith.subf %403, %406 : vector<5x5xf32>
    %408 = math.exp %407 : vector<5x5xf32>
    %cst_138 = arith.constant dense<0.000000e+00> : vector<5xf32>
    %409 = vector.multi_reduction <add>, %408, %cst_138 [1] : vector<5x5xf32> to vector<5xf32>
    %410 = vector.shape_cast %409 : vector<5xf32> to vector<5x1xf32>
    %411 = tpu.reciprocal %410 {approx = true} : vector<5x1xf32> -> vector<5x1xf32>
    %412 = vector.broadcast %411 : vector<5x1xf32> to vector<5x5xf32>
    %413 = arith.mulf %408, %412 : vector<5x5xf32>
    %cst_139 = arith.constant dense<0.000000e+00> : vector<5x8xf32>
    %414 = tpu.matmul %413, %400, %cst_139 {dimension_numbers = #tpu.dot_dimension_numbers<[1], [0], [0], [1], [0, 0, 1, 1], [], []>} : vector<5x5xf32>, vector<5x8xf32>, vector<5x8xf32> -> vector<5x8xf32>
    %415 = vector.extract_strided_slice %294 {offsets = [5, 24], sizes = [5, 8], strides = [1, 1]} : vector<10x96xf32> to vector<5x8xf32>
    %416 = vector.extract_strided_slice %294 {offsets = [5, 56], sizes = [5, 8], strides = [1, 1]} : vector<10x96xf32> to vector<5x8xf32>
    %417 = vector.extract_strided_slice %294 {offsets = [5, 88], sizes = [5, 8], strides = [1, 1]} : vector<10x96xf32> to vector<5x8xf32>
    %cst_140 = arith.constant dense<0.000000e+00> : vector<5x5xf32>
    %418 = tpu.matmul %415, %416, %cst_140 {dimension_numbers = #tpu.dot_dimension_numbers<[1], [1], [0], [0], [0, 0, 1, 0], [], []>} : vector<5x8xf32>, vector<5x8xf32>, vector<5x5xf32> -> vector<5x5xf32>
    %cst_141 = arith.constant 0.353553385 : f32
    %419 = vector.broadcast %cst_141 : f32 to vector<5x5xf32>
    %420 = arith.mulf %418, %419 : vector<5x5xf32>
    %cst_142 = arith.constant dense<0xFF800000> : vector<5xf32>
    %421 = vector.multi_reduction <maximumf>, %420, %cst_142 [1] : vector<5x5xf32> to vector<5xf32>
    %422 = vector.shape_cast %421 : vector<5xf32> to vector<5x1xf32>
    %423 = vector.broadcast %422 : vector<5x1xf32> to vector<5x5xf32>
    %424 = arith.subf %420, %423 : vector<5x5xf32>
    %425 = math.exp %424 : vector<5x5xf32>
    %cst_143 = arith.constant dense<0.000000e+00> : vector<5xf32>
    %426 = vector.multi_reduction <add>, %425, %cst_143 [1] : vector<5x5xf32> to vector<5xf32>
    %427 = vector.shape_cast %426 : vector<5xf32> to vector<5x1xf32>
    %428 = tpu.reciprocal %427 {approx = true} : vector<5x1xf32> -> vector<5x1xf32>
    %429 = vector.broadcast %428 : vector<5x1xf32> to vector<5x5xf32>
    %430 = arith.mulf %425, %429 : vector<5x5xf32>
    %cst_144 = arith.constant dense<0.000000e+00> : vector<5x8xf32>
    %431 = tpu.matmul %430, %417, %cst_144 {dimension_numbers = #tpu.dot_dimension_numbers<[1], [0], [0], [1], [0, 0, 1, 1], [], []>} : vector<5x5xf32>, vector<5x8xf32>, vector<5x8xf32> -> vector<5x8xf32>
    %432 = tpu.concatenate %380, %397, %414, %431 in 1 : vector<5x8xf32>, vector<5x8xf32>, vector<5x8xf32>, vector<5x8xf32> -> vector<5x32xf32>
    %433 = tpu.concatenate %363, %432 in 0 : vector<5x32xf32>, vector<5x32xf32> -> vector<10x32xf32>
    %c1_145 = arith.constant 1 : index
    %c0_146 = arith.constant 0 : index
    %c0_147 = arith.constant 0 : index
    %434 = vector.load %arg6[%c1_145, %c0_146, %c0_147] : memref<2x32x32xbf16, #tpu.memory_space<vmem>>, vector<1x32x32xbf16>
    %435 = vector.shape_cast %434 : vector<1x32x32xbf16> to vector<32x32xbf16>
    %436 = arith.truncf %433 : vector<10x32xf32> to vector<10x32xbf16>
    %cst_148 = arith.constant dense<0.000000e+00> : vector<10x32xf32>
    %437 = tpu.matmul %436, %435, %cst_148 {dimension_numbers = #tpu.dot_dimension_numbers<[1], [0], [0], [1], [0, 0, 1, 1], [], []>} : vector<10x32xbf16>, vector<32x32xbf16>, vector<10x32xf32> -> vector<10x32xf32>
    %438 = arith.addf %256, %437 : vector<10x32xf32>
    %439 = vector.broadcast %263 : vector<1x32xf32> to vector<10x32xf32>
    %440 = arith.addf %438, %439 : vector<10x32xf32>
    %cst_149 = arith.constant dense<0.000000e+00> : vector<10xf32>
    %441 = vector.multi_reduction <add>, %440, %cst_149 [1] : vector<10x32xf32> to vector<10xf32>
    %442 = vector.shape_cast %441 : vector<10xf32> to vector<10x1xf32>
    %cst_150 = arith.constant 3.200000e+01 : f32
    %443 = vector.broadcast %cst_150 : f32 to vector<10x1xf32>
    %444 = arith.divf %442, %443 : vector<10x1xf32>
    %445 = vector.broadcast %444 : vector<10x1xf32> to vector<10x32xf32>
    %446 = arith.subf %440, %445 : vector<10x32xf32>
    %447 = arith.mulf %446, %446 : vector<10x32xf32>
    %cst_151 = arith.constant dense<0.000000e+00> : vector<10xf32>
    %448 = vector.multi_reduction <add>, %447, %cst_151 [1] : vector<10x32xf32> to vector<10xf32>
    %449 = vector.shape_cast %448 : vector<10xf32> to vector<10x1xf32>
    %cst_152 = arith.constant 3.200000e+01 : f32
    %450 = vector.broadcast %cst_152 : f32 to vector<10x1xf32>
    %451 = arith.divf %449, %450 : vector<10x1xf32>
    %452 = vector.broadcast %444 : vector<10x1xf32> to vector<10x32xf32>
    %453 = arith.subf %440, %452 : vector<10x32xf32>
    %cst_153 = arith.constant 9.99999996E-13 : f32
    %454 = vector.broadcast %cst_153 : f32 to vector<10x1xf32>
    %455 = arith.addf %451, %454 : vector<10x1xf32>
    %456 = math.rsqrt %455 : vector<10x1xf32>
    %457 = vector.broadcast %456 : vector<10x1xf32> to vector<10x32xf32>
    %458 = arith.mulf %453, %457 : vector<10x32xf32>
    %459 = vector.broadcast %261 : vector<1x32xf32> to vector<10x32xf32>
    %460 = arith.mulf %458, %459 : vector<10x32xf32>
    %461 = vector.broadcast %262 : vector<1x32xf32> to vector<10x32xf32>
    %462 = arith.addf %460, %461 : vector<10x32xf32>
    %c1_154 = arith.constant 1 : index
    %c0_155 = arith.constant 0 : index
    %c0_156 = arith.constant 0 : index
    %463 = vector.load %arg7[%c1_154, %c0_155, %c0_156] : memref<2x32x128xbf16, #tpu.memory_space<vmem>>, vector<1x32x128xbf16>
    %464 = vector.shape_cast %463 : vector<1x32x128xbf16> to vector<32x128xbf16>
    %465 = arith.truncf %462 : vector<10x32xf32> to vector<10x32xbf16>
    %cst_157 = arith.constant dense<0.000000e+00> : vector<10x128xf32>
    %466 = tpu.matmul %465, %464, %cst_157 {dimension_numbers = #tpu.dot_dimension_numbers<[1], [0], [0], [1], [0, 0, 1, 1], [], []>} : vector<10x32xbf16>, vector<32x128xbf16>, vector<10x128xf32> -> vector<10x128xf32>
    %c1_158 = arith.constant 1 : index
    %c0_159 = arith.constant 0 : index
    %c0_160 = arith.constant 0 : index
    %467 = vector.load %arg8[%c1_158, %c0_159, %c0_160] : memref<2x1x128xf32, #tpu.memory_space<vmem>>, vector<1x1x128xf32>
    %468 = vector.shape_cast %467 : vector<1x1x128xf32> to vector<1x128xf32>
    %469 = vector.broadcast %468 : vector<1x128xf32> to vector<10x128xf32>
    %470 = arith.addf %466, %469 : vector<10x128xf32>
    %471 = arith.mulf %470, %470 : vector<10x128xf32>
    %472 = arith.mulf %470, %471 : vector<10x128xf32>
    %cst_161 = arith.constant 4.471500e-02 : f32
    %473 = vector.broadcast %cst_161 : f32 to vector<10x128xf32>
    %474 = arith.mulf %473, %472 : vector<10x128xf32>
    %475 = arith.addf %470, %474 : vector<10x128xf32>
    %cst_162 = arith.constant 0.797884583 : f32
    %476 = vector.broadcast %cst_162 : f32 to vector<10x128xf32>
    %477 = arith.mulf %476, %475 : vector<10x128xf32>
    %478 = math.tanh %477 : vector<10x128xf32>
    %cst_163 = arith.constant 1.000000e+00 : f32
    %479 = vector.broadcast %cst_163 : f32 to vector<10x128xf32>
    %480 = arith.addf %479, %478 : vector<10x128xf32>
    %cst_164 = arith.constant 5.000000e-01 : f32
    %481 = vector.broadcast %cst_164 : f32 to vector<10x128xf32>
    %482 = arith.mulf %481, %480 : vector<10x128xf32>
    %483 = arith.mulf %470, %482 : vector<10x128xf32>
    %c1_165 = arith.constant 1 : index
    %c0_166 = arith.constant 0 : index
    %c0_167 = arith.constant 0 : index
    %484 = vector.load %arg9[%c1_165, %c0_166, %c0_167] : memref<2x128x32xbf16, #tpu.memory_space<vmem>>, vector<1x128x32xbf16>
    %485 = vector.shape_cast %484 : vector<1x128x32xbf16> to vector<128x32xbf16>
    %486 = arith.truncf %483 : vector<10x128xf32> to vector<10x128xbf16>
    %cst_168 = arith.constant dense<0.000000e+00> : vector<10x32xf32>
    %487 = tpu.matmul %486, %485, %cst_168 {dimension_numbers = #tpu.dot_dimension_numbers<[1], [0], [0], [1], [0, 0, 1, 1], [], []>} : vector<10x128xbf16>, vector<128x32xbf16>, vector<10x32xf32> -> vector<10x32xf32>
    %488 = arith.addf %440, %487 : vector<10x32xf32>
    %489 = vector.broadcast %264 : vector<1x32xf32> to vector<10x32xf32>
    %490 = arith.addf %488, %489 : vector<10x32xf32>
    %491 = vector.extract_strided_slice %490 {offsets = [0, 0], sizes = [1, 32], strides = [1, 1]} : vector<10x32xf32> to vector<1x32xf32>
    %492 = vector.extract_strided_slice %490 {offsets = [5, 0], sizes = [1, 32], strides = [1, 1]} : vector<10x32xf32> to vector<1x32xf32>
    %493 = tpu.concatenate %491, %492 in 0 : vector<1x32xf32>, vector<1x32xf32> -> vector<2x32xf32>
    %c0_169 = arith.constant 0 : index
    %c0_170 = arith.constant 0 : index
    %494 = vector.load %arg11[%c0_169, %c0_170] : memref<2x32xf32, #tpu.memory_space<vmem>>, vector<1x32xf32>
    %c1_171 = arith.constant 1 : index
    %c0_172 = arith.constant 0 : index
    %495 = vector.load %arg11[%c1_171, %c0_172] : memref<2x32xf32, #tpu.memory_space<vmem>>, vector<1x32xf32>
    %cst_173 = arith.constant dense<0.000000e+00> : vector<2xf32>
    %496 = vector.multi_reduction <add>, %493, %cst_173 [1] : vector<2x32xf32> to vector<2xf32>
    %497 = vector.shape_cast %496 : vector<2xf32> to vector<2x1xf32>
    %cst_174 = arith.constant 3.200000e+01 : f32
    %498 = vector.broadcast %cst_174 : f32 to vector<2x1xf32>
    %499 = arith.divf %497, %498 : vector<2x1xf32>
    %500 = vector.broadcast %499 : vector<2x1xf32> to vector<2x32xf32>
    %501 = arith.subf %493, %500 : vector<2x32xf32>
    %502 = arith.mulf %501, %501 : vector<2x32xf32>
    %cst_175 = arith.constant dense<0.000000e+00> : vector<2xf32>
    %503 = vector.multi_reduction <add>, %502, %cst_175 [1] : vector<2x32xf32> to vector<2xf32>
    %504 = vector.shape_cast %503 : vector<2xf32> to vector<2x1xf32>
    %cst_176 = arith.constant 3.200000e+01 : f32
    %505 = vector.broadcast %cst_176 : f32 to vector<2x1xf32>
    %506 = arith.divf %504, %505 : vector<2x1xf32>
    %507 = vector.broadcast %499 : vector<2x1xf32> to vector<2x32xf32>
    %508 = arith.subf %493, %507 : vector<2x32xf32>
    %cst_177 = arith.constant 9.99999996E-13 : f32
    %509 = vector.broadcast %cst_177 : f32 to vector<2x1xf32>
    %510 = arith.addf %506, %509 : vector<2x1xf32>
    %511 = math.rsqrt %510 : vector<2x1xf32>
    %512 = vector.broadcast %511 : vector<2x1xf32> to vector<2x32xf32>
    %513 = arith.mulf %508, %512 : vector<2x32xf32>
    %514 = vector.broadcast %494 : vector<1x32xf32> to vector<2x32xf32>
    %515 = arith.mulf %513, %514 : vector<2x32xf32>
    %516 = vector.broadcast %495 : vector<1x32xf32> to vector<2x32xf32>
    %517 = arith.addf %515, %516 : vector<2x32xf32>
    %c0_178 = arith.constant 0 : index
    %c0_179 = arith.constant 0 : index
    %518 = vector.load %arg12[%c0_178, %c0_179] : memref<32x3xf32, #tpu.memory_space<vmem>>, vector<32x3xf32>
    %cst_180 = arith.constant dense<0.000000e+00> : vector<2x3xf32>
    %519 = tpu.matmul %517, %518, %cst_180 {dimension_numbers = #tpu.dot_dimension_numbers<[1], [0], [0], [1], [0, 0, 1, 1], [], []>} : vector<2x32xf32>, vector<32x3xf32>, vector<2x3xf32> -> vector<2x3xf32>
    %c0_181 = arith.constant 0 : index
    %c0_182 = arith.constant 0 : index
    %520 = vector.load %arg13[%c0_181, %c0_182] : memref<1x3xf32, #tpu.memory_space<vmem>>, vector<1x3xf32>
    %521 = vector.broadcast %520 : vector<1x3xf32> to vector<2x3xf32>
    %522 = arith.addf %519, %521 : vector<2x3xf32>
    %c0_183 = arith.constant 0 : index
    %c0_184 = arith.constant 0 : index
    %523 = vector.load %arg14[%c0_183, %c0_184] : memref<2x3xf32, #tpu.memory_space<vmem>>, vector<2x3xf32>
    tpu.vector_store %arg14[%c0_183, %c0_184], %522 {strides = array<i32>} : memref<2x3xf32, #tpu.memory_space<vmem>>, vector<2x3xf32>,
    %cst_185 = arith.constant dense<0xFF800000> : vector<2xf32>
    %524 = vector.multi_reduction <maximumf>, %522, %cst_185 [1] : vector<2x3xf32> to vector<2xf32>
    %525 = vector.shape_cast %524 : vector<2xf32> to vector<2x1xf32>
    %526 = vector.broadcast %525 : vector<2x1xf32> to vector<2x3xf32>
    %527 = arith.subf %522, %526 : vector<2x3xf32>
    %528 = math.exp %527 : vector<2x3xf32>
    %cst_186 = arith.constant dense<0.000000e+00> : vector<2xf32>
    %529 = vector.multi_reduction <add>, %528, %cst_186 [1] : vector<2x3xf32> to vector<2xf32>
    %530 = vector.shape_cast %529 : vector<2xf32> to vector<2x1xf32>
    %531 = math.log %530 : vector<2x1xf32>
    %532 = arith.addf %531, %525 : vector<2x1xf32>
    %533 = vector.broadcast %532 : vector<2x1xf32> to vector<2x3xf32>
    %534 = arith.subf %522, %533 : vector<2x3xf32>
    %535 = tpu.iota {dimensions = array<i32: 1>} : vector<2x3xi32>
    %c0_187 = arith.constant 0 : index
    %536 = memref.load %arg0[%c0_187] : memref<2xi32, #tpu.memory_space<smem>>
    %537 = vector.extract_strided_slice %535 {offsets = [0, 0], sizes = [1, 3], strides = [1, 1]} : vector<2x3xi32> to vector<1x3xi32>
    %538 = vector.broadcast %536 : i32 to vector<1x3xi32>
    %539 = arith.cmpi eq, %537, %538 : vector<1x3xi32>
    %540 = vector.extract_strided_slice %534 {offsets = [0, 0], sizes = [1, 3], strides = [1, 1]} : vector<2x3xf32> to vector<1x3xf32>
    %cst_188 = arith.constant 0.000000e+00 : f32
    %541 = vector.broadcast %cst_188 : f32 to vector<1x3xf32>
    %542 = arith.select %539, %540, %541 : vector<1x3xi1>, vector<1x3xf32>
    %543 = vector.shape_cast %542 : vector<1x3xf32> to vector<1x1x3xf32>
    %cst_189 = arith.constant dense<0.000000e+00> : vector<1xf32>
    %544 = vector.multi_reduction <add>, %543, %cst_189 [1, 2] : vector<1x1x3xf32> to vector<1xf32>
    %545 = vector.shape_cast %544 : vector<1xf32> to vector<1x1x1xf32>
    %546 = vector.extract %545[0, 0, 0] : f32 from vector<1x1x1xf32>
    %cst_190 = arith.constant 0.000000e+00 : f32
    %547 = arith.subf %cst_190, %546 : f32
    %c1_191 = arith.constant 1 : index
    %548 = memref.load %arg0[%c1_191] : memref<2xi32, #tpu.memory_space<smem>>
    %549 = vector.extract_strided_slice %535 {offsets = [1, 0], sizes = [1, 3], strides = [1, 1]} : vector<2x3xi32> to vector<1x3xi32>
    %550 = vector.broadcast %548 : i32 to vector<1x3xi32>
    %551 = arith.cmpi eq, %549, %550 : vector<1x3xi32>
    %552 = vector.extract_strided_slice %534 {offsets = [1, 0], sizes = [1, 3], strides = [1, 1]} : vector<2x3xf32> to vector<1x3xf32>
    %cst_192 = arith.constant 0.000000e+00 : f32
    %553 = vector.broadcast %cst_192 : f32 to vector<1x3xf32>
    %554 = arith.select %551, %552, %553 : vector<1x3xi1>, vector<1x3xf32>
    %555 = vector.shape_cast %554 : vector<1x3xf32> to vector<1x1x3xf32>
    %cst_193 = arith.constant dense<0.000000e+00> : vector<1xf32>
    %556 = vector.multi_reduction <add>, %555, %cst_193 [1, 2] : vector<1x1x3xf32> to vector<1xf32>
    %557 = vector.shape_cast %556 : vector<1xf32> to vector<1x1x1xf32>
    %558 = vector.extract %557[0, 0, 0] : f32 from vector<1x1x1xf32>
    %559 = arith.subf %547, %558 : f32
    %cst_194 = arith.constant 2.000000e+00 : f32
    %560 = arith.divf %559, %cst_194 : f32
    %561 = vector.broadcast %560 : f32 to vector<1x1xf32>
    %c0_195 = arith.constant 0 : index
    %c0_196 = arith.constant 0 : index
    %562 = vector.load %arg15[%c0_195, %c0_196] : memref<1x1xf32, #tpu.memory_space<vmem>>, vector<1x1xf32>
    tpu.vector_store %arg15[%c0_195, %c0_196], %561 {strides = array<i32>} : memref<1x1xf32, #tpu.memory_space<vmem>>, vector<1x1xf32>,
    return
  }
}

</mosaic_0001>

<llo_original>
// kernel: vit_forward.1
$region0: #{vit_forward.1}
  #allocation0 [shape = 'u32[]', space=smem, size = 0x4, offset = 0x4, fixed_abs, tag = 'smem constant byte address 0x4 - core index']
  #allocation1 [shape = 'u32[144,128]{1,0:T(1,128)}', space=vmem, size = 0x12000, scoped, tag = 'internal scratch']
  %s0 = inlined_call_operand.vmem [shape: s32[2], index: 0, kind: input, shape index: {}]
  %s1 = inlined_call_operand.vmem [shape: f32[2,4,768], index: 1, kind: input, shape index: {}]
  %s2 = inlined_call_operand.vmem [shape: bf16[768,32], index: 2, kind: input, shape index: {}]
  %s3 = inlined_call_operand.vmem [shape: f32[7,32], index: 3, kind: input, shape index: {}]
  %s4 = inlined_call_operand.vmem [shape: bf16[2,32,96], index: 4, kind: input, shape index: {}]
  %s5 = inlined_call_operand.vmem [shape: f32[2,1,96], index: 5, kind: input, shape index: {}]
  %s6 = inlined_call_operand.vmem [shape: bf16[2,32,32], index: 6, kind: input, shape index: {}]
  %s7 = inlined_call_operand.vmem [shape: bf16[2,32,128], index: 7, kind: input, shape index: {}]
  %s8 = inlined_call_operand.vmem [shape: f32[2,1,128], index: 8, kind: input, shape index: {}]
  %s9 = inlined_call_operand.vmem [shape: bf16[2,128,32], index: 9, kind: input, shape index: {}]
  %s10 = inlined_call_operand.vmem [shape: f32[2,6,32], index: 10, kind: input, shape index: {}]
  %s11 = inlined_call_operand.vmem [shape: f32[2,32], index: 11, kind: input, shape index: {}]
  %s12 = inlined_call_operand.vmem [shape: f32[32,3], index: 12, kind: input, shape index: {}]
  %s13 = inlined_call_operand.vmem [shape: f32[1,3], index: 13, kind: input, shape index: {}]
  %s14 = inlined_call_operand.hbm [shape: f32[2,3], index: 14, kind: output, shape index: {0}]
  %s15 = inlined_call_operand.hbm [shape: f32[1,1], index: 15, kind: output, shape index: {1}]
  %16 = xla_tuple %s14, %s15
  %s17 = sld [smem:[#allocation0]]
  $region78: #{vit_forward.1} parent=0
    _
  %s19 = ssub.s32 1, %s17
  %s20 = scalar_select 0, %s19, %s17
  $region1: #{vit_forward.1} parent=0
    #allocation2 [shape = 'u8[512]{0}', space=smem, size = 0x200, scoped, tag = 'input window, operand 0, single buffered']
    #allocation3 [shape = 's32[1]{0}', space=sflag, size = 0x4, scoped, tag = 'scoped memory for vit_forward.1']
    #allocation4 [shape = 's32[1]{0}', space=sflag, size = 0x4, scoped, tag = 'scoped memory for vit_forward.1']
    #allocation5 [shape = 'u8[1024]{0}', space=vmem, size = 0x400, scoped, tag = 'output window, operand 0, single buffered']
    #allocation6 [shape = 'u8[512]{0}', space=vmem, size = 0x400, scoped, tag = 'output window, operand 1, single buffered']
    #allocation7 [shape = 's32[1]{0}', space=sflag, size = 0x4, scoped, tag = 'scoped memory for vit_forward.1']
    %21 = vsyncpa [#allocation4], 0
    %22 = vsyncpa [#allocation3], 0
    %23 = vsyncpa [#allocation7], 0
    // Predicated region
    $region2: #{vit_forward.1} parent=1 // pred_check
      _
    $region3: #{vit_forward.1} parent=1 // pred_check_branch
      %25 = sbr.rel (0) target = $region5
    $region4: #{vit_forward.1} parent=1 // pred_region
      %s27 = ssub.s32 16, 16
      %28 = vsyncadd [#allocation4], %s27
      %s30 = sshll.u32 %s0, 4
      %s31 = int_to_ptr.vmem [resolvable:$true] %s30
      %33 = dma.vmem_to_smem %s31, 16, [#allocation2], [#allocation4]
    $region5: #{vit_forward.1} parent=1 // pred_fallthru
      _
    // Predicated region
    $region6: #{vit_forward.1} parent=1 // pred_check
      _
    $region7: #{vit_forward.1} parent=1 // pred_check_branch
      %35 = sbr.rel (0) target = $region9
    $region8: #{vit_forward.1} parent=1 // pred_region
      _
    $region9: #{vit_forward.1} parent=1 // pred_fallthru
      _
    // Predicated region
    $region10: #{vit_forward.1} parent=1 // pred_check
      _
    $region11: #{vit_forward.1} parent=1 // pred_check_branch
      %37 = sbr.rel (0) target = $region13
    $region12: #{vit_forward.1} parent=1 // pred_region
      _
    $region13: #{vit_forward.1} parent=1 // pred_fallthru
      _
    // Predicated region
    $region14: #{vit_forward.1} parent=1 // pred_check
      _
    $region15: #{vit_forward.1} parent=1 // pred_check_branch
      %39 = sbr.rel (0) target = $region17
    $region16: #{vit_forward.1} parent=1 // pred_region
      _
    $region17: #{vit_forward.1} parent=1 // pred_fallthru
      _
    // Predicated region
    $region18: #{vit_forward.1} parent=1 // pred_check
      _
    $region19: #{vit_forward.1} parent=1 // pred_check_branch
      %41 = sbr.rel (0) target = $region21
    $region20: #{vit_forward.1} parent=1 // pred_region
      _
    $region21: #{vit_forward.1} parent=1 // pred_fallthru
      _
    // Predicated region
    $region22: #{vit_forward.1} parent=1 // pred_check
      _
    $region23: #{vit_forward.1} parent=1 // pred_check_branch
      %43 = sbr.rel (0) target = $region25
    $region24: #{vit_forward.1} parent=1 // pred_region
      _
    $region25: #{vit_forward.1} parent=1 // pred_fallthru
      _
    // Predicated region
    $region26: #{vit_forward.1} parent=1 // pred_check
      _
    $region27: #{vit_forward.1} parent=1 // pred_check_branch
      %45 = sbr.rel (0) target = $region29
    $region28: #{vit_forward.1} parent=1 // pred_region
      _
    $region29: #{vit_forward.1} parent=1 // pred_fallthru
      _
    // Predicated region
    $region30: #{vit_forward.1} parent=1 // pred_check
      _
    $region31: #{vit_forward.1} parent=1 // pred_check_branch
      %47 = sbr.rel (0) target = $region33
    $region32: #{vit_forward.1} parent=1 // pred_region
      _
    $region33: #{vit_forward.1} parent=1 // pred_fallthru
      _
    // Predicated region
    $region34: #{vit_forward.1} parent=1 // pred_check
      _
    $region35: #{vit_forward.1} parent=1 // pred_check_branch
      %49 = sbr.rel (0) target = $region37
    $region36: #{vit_forward.1} parent=1 // pred_region
      _
    $region37: #{vit_forward.1} parent=1 // pred_fallthru
      _
    // Predicated region
    $region38: #{vit_forward.1} parent=1 // pred_check
      _
    $region39: #{vit_forward.1} parent=1 // pred_check_branch
      %51 = sbr.rel (0) target = $region41
    $region40: #{vit_forward.1} parent=1 // pred_region
      _
    $region41: #{vit_forward.1} parent=1 // pred_fallthru
      _
    // Predicated region
    $region42: #{vit_forward.1} parent=1 // pred_check
      _
    $region43: #{vit_forward.1} parent=1 // pred_check_branch
      %53 = sbr.rel (0) target = $region45
    $region44: #{vit_forward.1} parent=1 // pred_region
      _
    $region45: #{vit_forward.1} parent=1 // pred_fallthru
      _
    // Predicated region
    $region46: #{vit_forward.1} parent=1 // pred_check
      _
    $region47: #{vit_forward.1} parent=1 // pred_check_branch
      %55 = sbr.rel (0) target = $region49
    $region48: #{vit_forward.1} parent=1 // pred_region
      _
    $region49: #{vit_forward.1} parent=1 // pred_fallthru
      _
    // Predicated region
    $region50: #{vit_forward.1} parent=1 // pred_check
      _
    $region51: #{vit_forward.1} parent=1 // pred_check_branch
      %57 = sbr.rel (0) target = $region53
    $region52: #{vit_forward.1} parent=1 // pred_region
      _
    $region53: #{vit_forward.1} parent=1 // pred_fallthru
      _
    // Predicated region
    $region54: #{vit_forward.1} parent=1 // pred_check
      _
    $region55: #{vit_forward.1} parent=1 // pred_check_branch
      %59 = sbr.rel (0) target = $region57
    $region56: #{vit_forward.1} parent=1 // pred_region
      _
    $region57: #{vit_forward.1} parent=1 // pred_fallthru
      _
    // Predicated region
    $region58: #{vit_forward.1} parent=1 // pred_check
      _
    $region59: #{vit_forward.1} parent=1 // pred_check_branch
      %61 = sbr.rel (0) target = $region61
    $region60: #{vit_forward.1} parent=1 // pred_region
      %62 = dma.done [#allocation4], 16
    $region61: #{vit_forward.1} parent=1 // pred_fallthru
      _
    %63 = sfence
    %v65 = vld [vmem:[%s3] sm:$0x7f]
    %v66 = vld [vmem:[%s1] sm:$0xff]
    %v67 = vld [vmem:[%s1 + $0x8] sm:$0xff]
    %v68 = vld [vmem:[%s1 + $0x10] sm:$0xff]
    %v69 = vld [vmem:[%s2] sm:$0xf]
    %v70 = vld [vmem:[%s2 + $0x4] sm:$0xf]
    %v71 = vld [vmem:[%s2 + $0x8] sm:$0xf]
    %v72 = vld [vmem:[%s2 + $0xc] sm:$0xf]
    %v73 = vld [vmem:[%s2 + $0x10] sm:$0xf]
    %v74 = vld [vmem:[%s2 + $0x14] sm:$0xf]
    %v75 = vld [vmem:[%s2 + $0x18] sm:$0xf]
    %v76 = vld [vmem:[%s2 + $0x1c] sm:$0xf]
    %v77 = vld [vmem:[%s2 + $0x20] sm:$0xf]
    %v78 = vld [vmem:[%s2 + $0x24] sm:$0xf]
    %v79 = vld [vmem:[%s2 + $0x28] sm:$0xf]
    %v80 = vld [vmem:[%s2 + $0x2c] sm:$0xf]
    %v81 = vld [vmem:[%s2 + $0x30] sm:$0xf]
    %v82 = vld [vmem:[%s2 + $0x34] sm:$0xf]
    %v83 = vld [vmem:[%s2 + $0x38] sm:$0xf]
    %v84 = vld [vmem:[%s2 + $0x3c] sm:$0xf]
    %v85 = vld [vmem:[%s2 + $0x40] sm:$0xf]
    %v86 = vld [vmem:[%s2 + $0x44] sm:$0xf]
    %v87 = vld [vmem:[%s2 + $0x48] sm:$0xf]
    %v88 = vld [vmem:[%s2 + $0x4c] sm:$0xf]
    %v89 = vld [vmem:[%s2 + $0x50] sm:$0xf]
    %v90 = vld [vmem:[%s2 + $0x54] sm:$0xf]
    %v91 = vld [vmem:[%s2 + $0x58] sm:$0xf]
    %v92 = vld [vmem:[%s2 + $0x5c] sm:$0xf]
    %v93 = vld [vmem:[%s2 + $0x60] sm:$0xf]
    %v94 = vld [vmem:[%s2 + $0x64] sm:$0xf]
    %v95 = vld [vmem:[%s2 + $0x68] sm:$0xf]
    %v96 = vld [vmem:[%s2 + $0x6c] sm:$0xf]
    %v97 = vld [vmem:[%s2 + $0x70] sm:$0xf]
    %v98 = vld [vmem:[%s2 + $0x74] sm:$0xf]
    %v99 = vld [vmem:[%s2 + $0x78] sm:$0xf]
    %v100 = vld [vmem:[%s2 + $0x7c] sm:$0xf]
    %v101 = vld [vmem:[%s2 + $0x80] sm:$0xf]
    %v102 = vld [vmem:[%s2 + $0x84] sm:$0xf]
    %v103 = vld [vmem:[%s2 + $0x88] sm:$0xf]
    %v104 = vld [vmem:[%s2 + $0x8c] sm:$0xf]
    %v105 = vld [vmem:[%s2 + $0x90] sm:$0xf]
    %v106 = vld [vmem:[%s2 + $0x94] sm:$0xf]
    %v107 = vld [vmem:[%s2 + $0x98] sm:$0xf]
    %v108 = vld [vmem:[%s2 + $0x9c] sm:$0xf]
    %v109 = vld [vmem:[%s2 + $0xa0] sm:$0xf]
    %v110 = vld [vmem:[%s2 + $0xa4] sm:$0xf]
    %v111 = vld [vmem:[%s2 + $0xa8] sm:$0xf]
    %v112 = vld [vmem:[%s2 + $0xac] sm:$0xf]
    %v113 = vld [vmem:[%s2 + $0xb0] sm:$0xf]
    %v114 = vld [vmem:[%s2 + $0xb4] sm:$0xf]
    %v115 = vld [vmem:[%s2 + $0xb8] sm:$0xf]
    %v116 = vld [vmem:[%s2 + $0xbc] sm:$0xf]
    %v117 = vld [vmem:[%s2 + $0xc0] sm:$0xf]
    %v118 = vld [vmem:[%s2 + $0xc4] sm:$0xf]
    %v119 = vld [vmem:[%s2 + $0xc8] sm:$0xf]
    %v120 = vld [vmem:[%s2 + $0xcc] sm:$0xf]
    %v121 = vld [vmem:[%s2 + $0xd0] sm:$0xf]
    %v122 = vld [vmem:[%s2 + $0xd4] sm:$0xf]
    %v123 = vld [vmem:[%s2 + $0xd8] sm:$0xf]
    %v124 = vld [vmem:[%s2 + $0xdc] sm:$0xf]
    %v125 = vld [vmem:[%s2 + $0xe0] sm:$0xf]
    %v126 = vld [vmem:[%s2 + $0xe4] sm:$0xf]
    %v127 = vld [vmem:[%s2 + $0xe8] sm:$0xf]
    %v128 = vld [vmem:[%s2 + $0xec] sm:$0xf]
    %v129 = vld [vmem:[%s2 + $0xf0] sm:$0xf]
    %v130 = vld [vmem:[%s2 + $0xf4] sm:$0xf]
    %v131 = vld [vmem:[%s2 + $0xf8] sm:$0xf]
    %v132 = vld [vmem:[%s2 + $0xfc] sm:$0xf]
    %v133 = vld [vmem:[%s2 + $0x100] sm:$0xf]
    %v134 = vld [vmem:[%s2 + $0x104] sm:$0xf]
    %v135 = vld [vmem:[%s2 + $0x108] sm:$0xf]
    %v136 = vld [vmem:[%s2 + $0x10c] sm:$0xf]
    %v137 = vld [vmem:[%s2 + $0x110] sm:$0xf]
    %v138 = vld [vmem:[%s2 + $0x114] sm:$0xf]
    %v139 = vld [vmem:[%s2 + $0x118] sm:$0xf]
    %v140 = vld [vmem:[%s2 + $0x11c] sm:$0xf]
    %v141 = vld [vmem:[%s2 + $0x120] sm:$0xf]
    %v142 = vld [vmem:[%s2 + $0x124] sm:$0xf]
    %v143 = vld [vmem:[%s2 + $0x128] sm:$0xf]
    %v144 = vld [vmem:[%s2 + $0x12c] sm:$0xf]
    %v145 = vld [vmem:[%s2 + $0x130] sm:$0xf]
    %v146 = vld [vmem:[%s2 + $0x134] sm:$0xf]
    %v147 = vld [vmem:[%s2 + $0x138] sm:$0xf]
    %v148 = vld [vmem:[%s2 + $0x13c] sm:$0xf]
    %v149 = vld [vmem:[%s2 + $0x140] sm:$0xf]
    %v150 = vld [vmem:[%s2 + $0x144] sm:$0xf]
    %v151 = vld [vmem:[%s2 + $0x148] sm:$0xf]
    %v152 = vld [vmem:[%s2 + $0x14c] sm:$0xf]
    %v153 = vld [vmem:[%s2 + $0x150] sm:$0xf]
    %v154 = vld [vmem:[%s2 + $0x154] sm:$0xf]
    %v155 = vld [vmem:[%s2 + $0x158] sm:$0xf]
    %v156 = vld [vmem:[%s2 + $0x15c] sm:$0xf]
    %v157 = vld [vmem:[%s2 + $0x160] sm:$0xf]
    %v158 = vld [vmem:[%s2 + $0x164] sm:$0xf]
    %v159 = vld [vmem:[%s2 + $0x168] sm:$0xf]
    %v160 = vld [vmem:[%s2 + $0x16c] sm:$0xf]
    %v161 = vld [vmem:[%s2 + $0x170] sm:$0xf]
    %v162 = vld [vmem:[%s2 + $0x174] sm:$0xf]
    %v163 = vld [vmem:[%s2 + $0x178] sm:$0xf]
    %v164 = vld [vmem:[%s2 + $0x17c] sm:$0xf]
    %v168 = vcombine.high %v66, %v66
    %v169 = vcombine.high %v67, %v67
    %v170 = vcombine.high %v68, %v68
    %v174 = vpack.c.bf16 %v66, %v66
    %v175 = vpack.c.bf16 %v168, %v168
    %v176 = vpack.c.bf16 %v67, %v67
    %v177 = vpack.c.bf16 %v169, %v169
    %v178 = vpack.c.bf16 %v68, %v68
    %v179 = vpack.c.bf16 %v170, %v170
    %v180 = vlaneseq
    %v181 = vshrl.u32 %v180, 7
    %v182 = vsub.s32 0, %v181
    %v183 = vrot.slane %v65, %v182
    %v280 = vunpack.c.l.b16 %v69
    %v281 = vunpack.c.l.b16 %v70
    %v282 = vunpack.c.l.b16 %v71
    %v283 = vunpack.c.l.b16 %v72
    %v284 = vunpack.c.l.b16 %v73
    %v285 = vunpack.c.l.b16 %v74
    %v286 = vunpack.c.l.b16 %v75
    %v287 = vunpack.c.l.b16 %v76
    %v288 = vunpack.c.l.b16 %v77
    %v289 = vunpack.c.l.b16 %v78
    %v290 = vunpack.c.l.b16 %v79
    %v291 = vunpack.c.l.b16 %v80
    %v292 = vunpack.c.l.b16 %v81
    %v293 = vunpack.c.l.b16 %v82
    %v294 = vunpack.c.l.b16 %v83
    %v295 = vunpack.c.l.b16 %v84
    %v296 = vunpack.c.l.b16 %v85
    %v297 = vunpack.c.l.b16 %v86
    %v298 = vunpack.c.l.b16 %v87
    %v299 = vunpack.c.l.b16 %v88
    %v300 = vunpack.c.l.b16 %v89
    %v301 = vunpack.c.l.b16 %v90
    %v302 = vunpack.c.l.b16 %v91
    %v303 = vunpack.c.l.b16 %v92
    %v304 = vunpack.c.l.b16 %v93
    %v305 = vunpack.c.l.b16 %v94
    %v306 = vunpack.c.l.b16 %v95
    %v307 = vunpack.c.l.b16 %v96
    %v308 = vunpack.c.l.b16 %v97
    %v309 = vunpack.c.l.b16 %v98
    %v310 = vunpack.c.l.b16 %v99
    %v311 = vunpack.c.l.b16 %v100
    %v312 = vunpack.c.l.b16 %v101
    %v313 = vunpack.c.l.b16 %v102
    %v314 = vunpack.c.l.b16 %v103
    %v315 = vunpack.c.l.b16 %v104
    %v316 = vunpack.c.l.b16 %v105
    %v317 = vunpack.c.l.b16 %v106
    %v318 = vunpack.c.l.b16 %v107
    %v319 = vunpack.c.l.b16 %v108
    %v320 = vunpack.c.l.b16 %v109
    %v321 = vunpack.c.l.b16 %v110
    %v322 = vunpack.c.l.b16 %v111
    %v323 = vunpack.c.l.b16 %v112
    %v324 = vunpack.c.l.b16 %v113
    %v325 = vunpack.c.l.b16 %v114
    %v326 = vunpack.c.l.b16 %v115
    %v327 = vunpack.c.l.b16 %v116
    %v328 = vunpack.c.l.b16 %v117
    %v329 = vunpack.c.l.b16 %v118
    %v330 = vunpack.c.l.b16 %v119
    %v331 = vunpack.c.l.b16 %v120
    %v332 = vunpack.c.l.b16 %v121
    %v333 = vunpack.c.l.b16 %v122
    %v334 = vunpack.c.l.b16 %v123
    %v335 = vunpack.c.l.b16 %v124
    %v336 = vunpack.c.l.b16 %v125
    %v337 = vunpack.c.l.b16 %v126
    %v338 = vunpack.c.l.b16 %v127
    %v339 = vunpack.c.l.b16 %v128
    %v340 = vunpack.c.l.b16 %v129
    %v341 = vunpack.c.l.b16 %v130
    %v342 = vunpack.c.l.b16 %v131
    %v343 = vunpack.c.l.b16 %v132
    %v344 = vunpack.c.l.b16 %v133
    %v345 = vunpack.c.l.b16 %v134
    %v346 = vunpack.c.l.b16 %v135
    %v347 = vunpack.c.l.b16 %v136
    %v348 = vunpack.c.l.b16 %v137
    %v349 = vunpack.c.l.b16 %v138
    %v350 = vunpack.c.l.b16 %v139
    %v351 = vunpack.c.l.b16 %v140
    %v352 = vunpack.c.l.b16 %v141
    %v353 = vunpack.c.l.b16 %v142
    %v354 = vunpack.c.l.b16 %v143
    %v355 = vunpack.c.l.b16 %v144
    %v356 = vunpack.c.l.b16 %v145
    %v357 = vunpack.c.l.b16 %v146
    %v358 = vunpack.c.l.b16 %v147
    %v359 = vunpack.c.l.b16 %v148
    %v360 = vunpack.c.l.b16 %v149
    %v361 = vunpack.c.l.b16 %v150
    %v362 = vunpack.c.l.b16 %v151
    %v363 = vunpack.c.l.b16 %v152
    %v364 = vunpack.c.l.b16 %v153
    %v365 = vunpack.c.l.b16 %v154
    %v366 = vunpack.c.l.b16 %v155
    %v367 = vunpack.c.l.b16 %v156
    %v368 = vunpack.c.l.b16 %v157
    %v369 = vunpack.c.l.b16 %v158
    %v370 = vunpack.c.l.b16 %v159
    %v371 = vunpack.c.l.b16 %v160
    %v372 = vunpack.c.l.b16 %v161
    %v373 = vunpack.c.l.b16 %v162
    %v374 = vunpack.c.l.b16 %v163
    %v375 = vunpack.c.l.b16 %v164
    %v376 = vpack.c.b16 %v281, %v280
    %v377 = vpack.c.b16 %v283, %v282
    %v378 = vpack.c.b16 %v285, %v284
    %v379 = vpack.c.b16 %v287, %v286
    %v380 = vpack.c.b16 %v289, %v288
    %v381 = vpack.c.b16 %v291, %v290
    %v382 = vpack.c.b16 %v293, %v292
    %v383 = vpack.c.b16 %v295, %v294
    %v384 = vpack.c.b16 %v297, %v296
    %v385 = vpack.c.b16 %v299, %v298
    %v386 = vpack.c.b16 %v301, %v300
    %v387 = vpack.c.b16 %v303, %v302
    %v388 = vpack.c.b16 %v305, %v304
    %v389 = vpack.c.b16 %v307, %v306
    %v390 = vpack.c.b16 %v309, %v308
    %v391 = vpack.c.b16 %v311, %v310
    %v392 = vpack.c.b16 %v313, %v312
    %v393 = vpack.c.b16 %v315, %v314
    %v394 = vpack.c.b16 %v317, %v316
    %v395 = vpack.c.b16 %v319, %v318
    %v396 = vpack.c.b16 %v321, %v320
    %v397 = vpack.c.b16 %v323, %v322
    %v398 = vpack.c.b16 %v325, %v324
    %v399 = vpack.c.b16 %v327, %v326
    %v400 = vpack.c.b16 %v329, %v328
    %v401 = vpack.c.b16 %v331, %v330
    %v402 = vpack.c.b16 %v333, %v332
    %v403 = vpack.c.b16 %v335, %v334
    %v404 = vpack.c.b16 %v337, %v336
    %v405 = vpack.c.b16 %v339, %v338
    %v406 = vpack.c.b16 %v341, %v340
    %v407 = vpack.c.b16 %v343, %v342
    %v408 = vpack.c.b16 %v345, %v344
    %v409 = vpack.c.b16 %v347, %v346
    %v410 = vpack.c.b16 %v349, %v348
    %v411 = vpack.c.b16 %v351, %v350
    %v412 = vpack.c.b16 %v353, %v352
    %v413 = vpack.c.b16 %v355, %v354
    %v414 = vpack.c.b16 %v357, %v356
    %v415 = vpack.c.b16 %v359, %v358
    %v416 = vpack.c.b16 %v361, %v360
    %v417 = vpack.c.b16 %v363, %v362
    %v418 = vpack.c.b16 %v365, %v364
    %v419 = vpack.c.b16 %v367, %v366
    %v420 = vpack.c.b16 %v369, %v368
    %v421 = vpack.c.b16 %v371, %v370
    %v422 = vpack.c.b16 %v373, %v372
    %v423 = vpack.c.b16 %v375, %v374
    %472 = vmatprep.subr.bf16.mxu0 0
    %473 = vmatpush1.bf16.msra.mxu0 %v376
    %474 = vmatprep.subr.bf16.mxu0 0
    %475 = vmatpush1.bf16.msra.mxu0 %v377
    %476 = vmatprep.subr.bf16.mxu0 0
    %477 = vmatpush1.bf16.msra.mxu0 %v378
    %478 = vmatprep.subr.bf16.mxu0 0
    %479 = vmatpush1.bf16.msra.mxu0 %v379
    %480 = vmatprep.subr.bf16.mxu0 0
    %481 = vmatpush1.bf16.msra.mxu0 %v380
    %482 = vmatprep.subr.bf16.mxu0 0
    %483 = vmatpush1.bf16.msra.mxu0 %v381
    %484 = vmatprep.subr.bf16.mxu0 0
    %485 = vmatpush1.bf16.msra.mxu0 %v382
    %486 = vmatprep.subr.bf16.mxu0 0
    %487 = vmatpush1.bf16.msra.mxu0 %v383
    %488 = vmatprep.subr.bf16.mxu0 0
    %489 = vmatpush1.bf16.msra.mxu0 %v384
    %490 = vmatprep.subr.bf16.mxu0 0
    %491 = vmatpush1.bf16.msra.mxu0 %v385
    %492 = vmatprep.subr.bf16.mxu0 0
    %493 = vmatpush1.bf16.msra.mxu0 %v386
    %494 = vmatprep.subr.bf16.mxu0 0
    %495 = vmatpush1.bf16.msra.mxu0 %v387
    %496 = vmatprep.subr.bf16.mxu0 0
    %497 = vmatpush1.bf16.msra.mxu0 %v388
    %498 = vmatprep.subr.bf16.mxu0 0
    %499 = vmatpush1.bf16.msra.mxu0 %v389
    %500 = vmatprep.subr.bf16.mxu0 0
    %501 = vmatpush1.bf16.msra.mxu0 %v390
    %502 = vmatprep.subr.bf16.mxu0 0
    %503 = vmatpush1.bf16.msra.mxu0 %v391
    %504 = vmatprep.mubr.bf16.mxu0 %v175
    %505 = vmatmul.mubr.bf16.gmra.mrb[0].mxu0 %v174
    %v506 = vpop.f32.mrb[0].mxu0
    %v507 = vadd.f32 %v183, %v506
    %v508 = vpop.f32.mrb[0].mxu0
    %v509 = vpop.f32.mrb[0].mxu0
    %v510 = vpop.f32.mrb[0].mxu0
    %511 = vdwg.mxu0
    %512 = vmatprep.subr.bf16.mxu0 0
    %513 = vmatpush1.bf16.msra.mxu0 %v392
    %514 = vmatprep.subr.bf16.mxu0 0
    %515 = vmatpush1.bf16.msra.mxu0 %v393
    %516 = vmatprep.subr.bf16.mxu0 0
    %517 = vmatpush1.bf16.msra.mxu0 %v394
    %518 = vmatprep.subr.bf16.mxu0 0
    %519 = vmatpush1.bf16.msra.mxu0 %v395
    %520 = vmatprep.subr.bf16.mxu0 0
    %521 = vmatpush1.bf16.msra.mxu0 %v396
    %522 = vmatprep.subr.bf16.mxu0 0
    %523 = vmatpush1.bf16.msra.mxu0 %v397
    %524 = vmatprep.subr.bf16.mxu0 0
    %525 = vmatpush1.bf16.msra.mxu0 %v398
    %526 = vmatprep.subr.bf16.mxu0 0
    %527 = vmatpush1.bf16.msra.mxu0 %v399
    %528 = vmatprep.subr.bf16.mxu0 0
    %529 = vmatpush1.bf16.msra.mxu0 %v400
    %530 = vmatprep.subr.bf16.mxu0 0
    %531 = vmatpush1.bf16.msra.mxu0 %v401
    %532 = vmatprep.subr.bf16.mxu0 0
    %533 = vmatpush1.bf16.msra.mxu0 %v402
    %534 = vmatprep.subr.bf16.mxu0 0
    %535 = vmatpush1.bf16.msra.mxu0 %v403
    %536 = vmatprep.subr.bf16.mxu0 0
    %537 = vmatpush1.bf16.msra.mxu0 %v404
    %538 = vmatprep.subr.bf16.mxu0 0
    %539 = vmatpush1.bf16.msra.mxu0 %v405
    %540 = vmatprep.subr.bf16.mxu0 0
    %541 = vmatpush1.bf16.msra.mxu0 %v406
    %542 = vmatprep.subr.bf16.mxu0 0
    %543 = vmatpush1.bf16.msra.mxu0 %v407
    %544 = vmatprep.mubr.bf16.mxu0 %v177
    %545 = vmatmul.mubr.bf16.gmra.mrb[0].mxu0 %v176
    %v546 = vpop.f32.mrb[0].mxu0
    %v547 = vadd.f32 %v507, %v546
    %v548 = vpop.f32.mrb[0].mxu0
    %v549 = vpop.f32.mrb[0].mxu0
    %v550 = vpop.f32.mrb[0].mxu0
    %551 = vdwg.mxu0
    %552 = vmatprep.subr.bf16.mxu0 0
    %553 = vmatpush1.bf16.msra.mxu0 %v408
    %554 = vmatprep.subr.bf16.mxu0 0
    %555 = vmatpush1.bf16.msra.mxu0 %v409
    %556 = vmatprep.subr.bf16.mxu0 0
    %557 = vmatpush1.bf16.msra.mxu0 %v410
    %558 = vmatprep.subr.bf16.mxu0 0
    %559 = vmatpush1.bf16.msra.mxu0 %v411
    %560 = vmatprep.subr.bf16.mxu0 0
    %561 = vmatpush1.bf16.msra.mxu0 %v412
    %562 = vmatprep.subr.bf16.mxu0 0
    %563 = vmatpush1.bf16.msra.mxu0 %v413
    %564 = vmatprep.subr.bf16.mxu0 0
    %565 = vmatpush1.bf16.msra.mxu0 %v414
    %566 = vmatprep.subr.bf16.mxu0 0
    %567 = vmatpush1.bf16.msra.mxu0 %v415
    %568 = vmatprep.subr.bf16.mxu0 0
    %569 = vmatpush1.bf16.msra.mxu0 %v416
    %570 = vmatprep.subr.bf16.mxu0 0
    %571 = vmatpush1.bf16.msra.mxu0 %v417
    %572 = vmatprep.subr.bf16.mxu0 0
    %573 = vmatpush1.bf16.msra.mxu0 %v418
    %574 = vmatprep.subr.bf16.mxu0 0
    %575 = vmatpush1.bf16.msra.mxu0 %v419
    %576 = vmatprep.subr.bf16.mxu0 0
    %577 = vmatpush1.bf16.msra.mxu0 %v420
    %578 = vmatprep.subr.bf16.mxu0 0
    %579 = vmatpush1.bf16.msra.mxu0 %v421
    %580 = vmatprep.subr.bf16.mxu0 0
    %581 = vmatpush1.bf16.msra.mxu0 %v422
    %582 = vmatprep.subr.bf16.mxu0 0
    %583 = vmatpush1.bf16.msra.mxu0 %v423
    %584 = vmatprep.mubr.bf16.mxu0 %v179
    %585 = vmatmul.mubr.bf16.gmra.mrb[0].mxu0 %v178
    %v586 = vpop.f32.mrb[0].mxu0
    %v587 = vadd.f32 %v547, %v586
    %v588 = vpop.f32.mrb[0].mxu0
    %v589 = vpop.f32.mrb[0].mxu0
    %v590 = vpop.f32.mrb[0].mxu0
    %591 = vdwg.mxu0
    %v593 = vrot.slane %v65, 1
    %v596 = vrot.slane %v587, 7
    %vm598 = vcmask 1040384
    %v599 = vsel %vm598, %v593, %v596
    %v600 = vrot.slane %v65, 2
    %v602 = vadd.f32 %v599, %v600
    %s603 = scalar_lea.vmem %s1, 24
    %v604 = vld [vmem:[%s603] sm:$0xff]
    %v605 = vld [vmem:[%s603 + $0x8] sm:$0xff]
    %v606 = vld [vmem:[%s603 + $0x10] sm:$0xff]
    %v610 = vcombine.high %v604, %v604
    %v611 = vcombine.high %v605, %v605
    %v612 = vcombine.high %v606, %v606
    %v616 = vpack.c.bf16 %v604, %v604
    %v617 = vpack.c.bf16 %v610, %v610
    %v618 = vpack.c.bf16 %v605, %v605
    %v619 = vpack.c.bf16 %v611, %v611
    %v620 = vpack.c.bf16 %v606, %v606
    %v621 = vpack.c.bf16 %v612, %v612
    %622 = vmatprep.subr.bf16.mxu0 0
    %623 = vmatpush1.bf16.msra.mxu0 %v376
    %624 = vmatprep.subr.bf16.mxu0 0
    %625 = vmatpush1.bf16.msra.mxu0 %v377
    %626 = vmatprep.subr.bf16.mxu0 0
    %627 = vmatpush1.bf16.msra.mxu0 %v378
    %628 = vmatprep.subr.bf16.mxu0 0
    %629 = vmatpush1.bf16.msra.mxu0 %v379
    %630 = vmatprep.subr.bf16.mxu0 0
    %631 = vmatpush1.bf16.msra.mxu0 %v380
    %632 = vmatprep.subr.bf16.mxu0 0
    %633 = vmatpush1.bf16.msra.mxu0 %v381
    %634 = vmatprep.subr.bf16.mxu0 0
    %635 = vmatpush1.bf16.msra.mxu0 %v382
    %636 = vmatprep.subr.bf16.mxu0 0
    %637 = vmatpush1.bf16.msra.mxu0 %v383
    %638 = vmatprep.subr.bf16.mxu0 0
    %639 = vmatpush1.bf16.msra.mxu0 %v384
    %640 = vmatprep.subr.bf16.mxu0 0
    %641 = vmatpush1.bf16.msra.mxu0 %v385
    %642 = vmatprep.subr.bf16.mxu0 0
    %643 = vmatpush1.bf16.msra.mxu0 %v386
    %644 = vmatprep.subr.bf16.mxu0 0
    %645 = vmatpush1.bf16.msra.mxu0 %v387
    %646 = vmatprep.subr.bf16.mxu0 0
    %647 = vmatpush1.bf16.msra.mxu0 %v388
    %648 = vmatprep.subr.bf16.mxu0 0
    %649 = vmatpush1.bf16.msra.mxu0 %v389
    %650 = vmatprep.subr.bf16.mxu0 0
    %651 = vmatpush1.bf16.msra.mxu0 %v390
    %652 = vmatprep.subr.bf16.mxu0 0
    %653 = vmatpush1.bf16.msra.mxu0 %v391
    %654 = vmatprep.mubr.bf16.mxu0 %v617
    %655 = vmatmul.mubr.bf16.gmra.mrb[0].mxu0 %v616
    %v656 = vpop.f32.mrb[0].mxu0
    %v657 = vadd.f32 %v183, %v656
    %v658 = vpop.f32.mrb[0].mxu0
    %v659 = vpop.f32.mrb[0].mxu0
    %v660 = vpop.f32.mrb[0].mxu0
    %661 = vdwg.mxu0
    %662 = vmatprep.subr.bf16.mxu0 0
    %663 = vmatpush1.bf16.msra.mxu0 %v392
    %664 = vmatprep.subr.bf16.mxu0 0
    %665 = vmatpush1.bf16.msra.mxu0 %v393
    %666 = vmatprep.subr.bf16.mxu0 0
    %667 = vmatpush1.bf16.msra.mxu0 %v394
    %668 = vmatprep.subr.bf16.mxu0 0
    %669 = vmatpush1.bf16.msra.mxu0 %v395
    %670 = vmatprep.subr.bf16.mxu0 0
    %671 = vmatpush1.bf16.msra.mxu0 %v396
    %672 = vmatprep.subr.bf16.mxu0 0
    %673 = vmatpush1.bf16.msra.mxu0 %v397
    %674 = vmatprep.subr.bf16.mxu0 0
    %675 = vmatpush1.bf16.msra.mxu0 %v398
    %676 = vmatprep.subr.bf16.mxu0 0
    %677 = vmatpush1.bf16.msra.mxu0 %v399
    %678 = vmatprep.subr.bf16.mxu0 0
    %679 = vmatpush1.bf16.msra.mxu0 %v400
    %680 = vmatprep.subr.bf16.mxu0 0
    %681 = vmatpush1.bf16.msra.mxu0 %v401
    %682 = vmatprep.subr.bf16.mxu0 0
    %683 = vmatpush1.bf16.msra.mxu0 %v402
    %684 = vmatprep.subr.bf16.mxu0 0
    %685 = vmatpush1.bf16.msra.mxu0 %v403
    %686 = vmatprep.subr.bf16.mxu0 0
    %687 = vmatpush1.bf16.msra.mxu0 %v404
    %688 = vmatprep.subr.bf16.mxu0 0
    %689 = vmatpush1.bf16.msra.mxu0 %v405
    %690 = vmatprep.subr.bf16.mxu0 0
    %691 = vmatpush1.bf16.msra.mxu0 %v406
    %692 = vmatprep.subr.bf16.mxu0 0
    %693 = vmatpush1.bf16.msra.mxu0 %v407
    %694 = vmatprep.mubr.bf16.mxu0 %v619
    %695 = vmatmul.mubr.bf16.gmra.mrb[0].mxu0 %v618
    %v696 = vpop.f32.mrb[0].mxu0
    %v697 = vadd.f32 %v657, %v696
    %v698 = vpop.f32.mrb[0].mxu0
    %v699 = vpop.f32.mrb[0].mxu0
    %v700 = vpop.f32.mrb[0].mxu0
    %701 = vdwg.mxu0
    %702 = vmatprep.subr.bf16.mxu0 0
    %703 = vmatpush1.bf16.msra.mxu0 %v408
    %704 = vmatprep.subr.bf16.mxu0 0
    %705 = vmatpush1.bf16.msra.mxu0 %v409
    %706 = vmatprep.subr.bf16.mxu0 0
    %707 = vmatpush1.bf16.msra.mxu0 %v410
    %708 = vmatprep.subr.bf16.mxu0 0
    %709 = vmatpush1.bf16.msra.mxu0 %v411
    %710 = vmatprep.subr.bf16.mxu0 0
    %711 = vmatpush1.bf16.msra.mxu0 %v412
    %712 = vmatprep.subr.bf16.mxu0 0
    %713 = vmatpush1.bf16.msra.mxu0 %v413
    %714 = vmatprep.subr.bf16.mxu0 0
    %715 = vmatpush1.bf16.msra.mxu0 %v414
    %716 = vmatprep.subr.bf16.mxu0 0
    %717 = vmatpush1.bf16.msra.mxu0 %v415
    %718 = vmatprep.subr.bf16.mxu0 0
    %719 = vmatpush1.bf16.msra.mxu0 %v416
    %720 = vmatprep.subr.bf16.mxu0 0
    %721 = vmatpush1.bf16.msra.mxu0 %v417
    %722 = vmatprep.subr.bf16.mxu0 0
    %723 = vmatpush1.bf16.msra.mxu0 %v418
    %724 = vmatprep.subr.bf16.mxu0 0
    %725 = vmatpush1.bf16.msra.mxu0 %v419
    %726 = vmatprep.subr.bf16.mxu0 0
    %727 = vmatpush1.bf16.msra.mxu0 %v420
    %728 = vmatprep.subr.bf16.mxu0 0
    %729 = vmatpush1.bf16.msra.mxu0 %v421
    %730 = vmatprep.subr.bf16.mxu0 0
    %731 = vmatpush1.bf16.msra.mxu0 %v422
    %732 = vmatprep.subr.bf16.mxu0 0
    %733 = vmatpush1.bf16.msra.mxu0 %v423
    %734 = vmatprep.mubr.bf16.mxu0 %v621
    %735 = vmatmul.mubr.bf16.gmra.mrb[0].mxu0 %v620
    %v736 = vpop.f32.mrb[0].mxu0
    %v737 = vadd.f32 %v697, %v736
    %v738 = vpop.f32.mrb[0].mxu0
    %v739 = vpop.f32.mrb[0].mxu0
    %v740 = vpop.f32.mrb[0].mxu0
    %741 = vdwg.mxu0
    %v743 = vrot.slane %v737, 7
    %v745 = vsel %vm598, %v593, %v743
    %v746 = vadd.f32 %v745, %v600
    %v748 = vrot.slane %v746, 3
    %vm750 = vcmask 1044480
    %v751 = vsel %vm750, %v602, %v748
    %v752 = vld [vmem:[%s10] sm:$0x3f]
    %vm753 = vcmask 261120
    %v754 = vsel %vm753, %v751, 0.0
    %755 = vadd.xlane.f32.xlu0 %v754
    %v756 = vpop.xlane.xlu0 %755
    %vm757 = vcmask 254976
    %v758 = vsel %vm757, %v748, 0.0
    %759 = vadd.xlane.f32.xlu0 %v758
    %v760 = vpop.xlane.xlu0 %759
    %v761 = vrcp.pop 32.0
    %v762 = vmul.f32 %v756, %v761
    %v763 = vmul.f32 %v760, %v761
    %v764 = vsub.f32 %v751, %v762
    %v765 = vsub.f32 %v748, %v763
    %v766 = vmul.f32 %v764, %v764
    %v767 = vmul.f32 %v765, %v765
    %v768 = vsel %vm753, %v766, 0.0
    %769 = vadd.xlane.f32.xlu0 %v768
    %v770 = vpop.xlane.xlu0 %769
    %v771 = vsel %vm757, %v767, 0.0
    %772 = vadd.xlane.f32.xlu0 %v771
    %v773 = vpop.xlane.xlu0 %772
    %v774 = vmul.f32 %v770, %v761
    %v775 = vmul.f32 %v773, %v761
    %v776 = vadd.f32 %v774, 1e-12
    %v777 = vadd.f32 %v775, 1e-12
    %v778 = vrsqrt.pop %v776
    %v779 = vrsqrt.pop %v777
    %v780 = vmul.f32 %v764, %v778
    %v781 = vmul.f32 %v765, %v779
    %v782 = vlaneseq
    %v783 = vshrl.u32 %v782, 7
    %v784 = vsub.s32 0, %v783
    %v785 = vrot.slane %v752, %v784
    %v786 = vmul.f32 %v780, %v785
    %v787 = vmul.f32 %v781, %v785
    %v788 = vlaneseq
    %v789 = vshrl.u32 %v788, 7
    %v790 = vsub.s32 1, %v789
    %v791 = vrot.slane %v752, %v790
    %v792 = vadd.f32 %v786, %v791
    %v793 = vadd.f32 %v787, %v791
    %v794 = vld [vmem:[%s4] sm:$0xf]
    %v795 = vld [vmem:[%s4 + $0x4] sm:$0xf]
    %v796 = vld [vmem:[%s4 + $0x8] sm:$0xf]
    %v797 = vld [vmem:[%s4 + $0xc] sm:$0xf]
    %v798 = vpack.c.bf16 %v793, %v792
    %v799 = vld [vmem:[%s5] sm:$0x1]
    %v801 = vlaneseq
    %v802 = vshrl.u32 %v801, 7
    %v803 = vsub.s32 0, %v802
    %v804 = vrot.slane %v799, %v803
    %v810 = vunpack.c.l.b16 %v794
    %v811 = vunpack.c.l.b16 %v795
    %v812 = vunpack.c.l.b16 %v796
    %v813 = vunpack.c.l.b16 %v797
    %v814 = vpack.c.b16 %v811, %v810
    %v815 = vpack.c.b16 %v813, %v812
    %v819 = vsel %vm753, %v798, 0
    %821 = vmatprep.subr.bf16.mxu0 0
    %822 = vmatpush1.bf16.msra.mxu0 %v814
    %823 = vmatprep.subr.bf16.mxu0 0
    %824 = vmatpush1.bf16.msra.mxu0 %v815
    %825 = vmatprep.subr.bf16.mxu0 0
    %826 = vmatpush1.bf16.msra.mxu0 0
    %827 = vmatprep.subr.bf16.mxu0 0
    %828 = vmatpush1.bf16.msra.mxu0 0
    %829 = vmatprep.subr.bf16.mxu0 0
    %830 = vmatpush1.bf16.msra.mxu0 0
    %831 = vmatprep.subr.bf16.mxu0 0
    %832 = vmatpush1.bf16.msra.mxu0 0
    %833 = vmatprep.subr.bf16.mxu0 0
    %834 = vmatpush1.bf16.msra.mxu0 0
    %835 = vmatprep.subr.bf16.mxu0 0
    %836 = vmatpush1.bf16.msra.mxu0 0
    %837 = vmatprep.subr.bf16.mxu0 0
    %838 = vmatpush1.bf16.msra.mxu0 0
    %839 = vmatprep.subr.bf16.mxu0 0
    %840 = vmatpush1.bf16.msra.mxu0 0
    %841 = vmatprep.subr.bf16.mxu0 0
    %842 = vmatpush1.bf16.msra.mxu0 0
    %843 = vmatprep.subr.bf16.mxu0 0
    %844 = vmatpush1.bf16.msra.mxu0 0
    %845 = vmatprep.subr.bf16.mxu0 0
    %846 = vmatpush1.bf16.msra.mxu0 0
    %847 = vmatprep.subr.bf16.mxu0 0
    %848 = vmatpush1.bf16.msra.mxu0 0
    %849 = vmatprep.subr.bf16.mxu0 0
    %850 = vmatpush1.bf16.msra.mxu0 0
    %851 = vmatprep.subr.bf16.mxu0 0
    %852 = vmatpush1.bf16.msra.mxu0 0
    %853 = vmatprep.mubr.bf16.mxu0 0
    %854 = vmatmul.mubr.bf16.gmra.mrb[0].mxu0 %v819
    %v855 = vpop.f32.mrb[0].mxu0
    %v856 = vadd.f32 %v804, %v855
    %v857 = vpop.f32.mrb[0].mxu0
    %v858 = vpop.f32.mrb[0].mxu0
    %v859 = vadd.f32 %v804, %v858
    %v860 = vpop.f32.mrb[0].mxu0
    %861 = vdwg.mxu0
    %863 = vrot.lane.b32.xlu0 %v856, 96
    %v864 = vpop.permute.xlu0 %863
    %vm865 = vcmask 64512
    %v866 = vsel %vm865, %v856, 0
    %v868 = vsel %vm865, %v864, 0
    %870 = vmatprep.subr.mxu0 0.0
    %871 = vmatpush1.xpose.msra.mxu0 %v868
    %872 = vmatprep.subr.mxu0 0.0
    %873 = vmatpush1.xpose.msra.mxu0 0.0
    %874 = vmatprep.subr.mxu0 0.0
    %875 = vmatpush1.xpose.msra.mxu0 0.0
    %876 = vmatprep.subr.mxu0 0.0
    %877 = vmatpush1.xpose.msra.mxu0 0.0
    %878 = vmatprep.subr.mxu0 0.0
    %879 = vmatpush1.xpose.msra.mxu0 0.0
    %880 = vmatprep.subr.mxu0 0.0
    %881 = vmatpush1.xpose.msra.mxu0 0.0
    %882 = vmatprep.subr.mxu0 0.0
    %883 = vmatpush1.xpose.msra.mxu0 0.0
    %884 = vmatprep.subr.mxu0 0.0
    %885 = vmatpush1.xpose.msra.mxu0 0.0
    %886 = vmatprep.subr.mxu0 0.0
    %887 = vmatpush1.xpose.msra.mxu0 0.0
    %888 = vmatprep.subr.mxu0 0.0
    %889 = vmatpush1.xpose.msra.mxu0 0.0
    %890 = vmatprep.subr.mxu0 0.0
    %891 = vmatpush1.xpose.msra.mxu0 0.0
    %892 = vmatprep.subr.mxu0 0.0
    %893 = vmatpush1.xpose.msra.mxu0 0.0
    %894 = vmatprep.subr.mxu0 0.0
    %895 = vmatpush1.xpose.msra.mxu0 0.0
    %896 = vmatprep.subr.mxu0 0.0
    %897 = vmatpush1.xpose.msra.mxu0 0.0
    %898 = vmatprep.subr.mxu0 0.0
    %899 = vmatpush1.xpose.msra.mxu0 0.0
    %900 = vmatprep.subr.mxu0 0.0
    %901 = vmatpush1.xpose.msra.mxu0 0.0
    %902 = vmatprep.subr.mxu0 0.0
    %903 = vmatpush1.xpose.msra.mxu0 0.0
    %904 = vmatprep.subr.mxu0 0.0
    %905 = vmatpush1.xpose.msra.mxu0 0.0
    %906 = vmatprep.subr.mxu0 0.0
    %907 = vmatpush1.xpose.msra.mxu0 0.0
    %908 = vmatprep.subr.mxu0 0.0
    %909 = vmatpush1.xpose.msra.mxu0 0.0
    %910 = vmatprep.subr.mxu0 0.0
    %911 = vmatpush1.xpose.msra.mxu0 0.0
    %912 = vmatprep.subr.mxu0 0.0
    %913 = vmatpush1.xpose.msra.mxu0 0.0
    %914 = vmatprep.subr.mxu0 0.0
    %915 = vmatpush1.xpose.msra.mxu0 0.0
    %916 = vmatprep.subr.mxu0 0.0
    %917 = vmatpush1.xpose.msra.mxu0 0.0
    %918 = vmatprep.subr.mxu0 0.0
    %919 = vmatpush1.xpose.msra.mxu0 0.0
    %920 = vmatprep.subr.mxu0 0.0
    %921 = vmatpush1.xpose.msra.mxu0 0.0
    %922 = vmatprep.subr.mxu0 0.0
    %923 = vmatpush1.xpose.msra.mxu0 0.0
    %924 = vmatprep.subr.mxu0 0.0
    %925 = vmatpush1.xpose.msra.mxu0 0.0
    %926 = vmatprep.subr.mxu0 0.0
    %927 = vmatpush1.xpose.msra.mxu0 0.0
    %928 = vmatprep.subr.mxu0 0.0
    %929 = vmatpush1.xpose.msra.mxu0 0.0
    %930 = vmatprep.subr.mxu0 0.0
    %931 = vmatpush1.xpose.msra.mxu0 0.0
    %932 = vmatprep.subr.mxu0 0.0
    %933 = vmatpush1.xpose.msra.mxu0 0.0
    %934 = vmatprep.mubr.f32.mxu0 0.0
    %935 = vmatmul.mubr.f32.gmra.mrb[0].mxu0 %v866
    %v936 = vpop.f32.mrb[0].mxu0
    %v937 = vadd.f32 0.0, %v936
    %v938 = vpop.f32.mrb[0].mxu0
    %939 = vdwg.mxu0
    %v940 = vmul.f32 %v937, 0.35355338
    %vm941 = vcmask 36864
    %v942 = vsel %vm941, %v940, -inf
    %943 = vmax.xlane.f32.xlu0 %v942
    %v944 = vpop.xlane.xlu0 %943
    %v945 = vsub.f32 %v940, %v944
    %v946 = vmul.f32 %v945, 1.442695
    %v947 = vpow.pop %v946
    %v948 = vsel %vm941, %v947, 0.0
    %949 = vadd.xlane.f32.xlu0 %v948
    %v950 = vpop.xlane.xlu0 %949
    %v951 = vrcp.pop %v950
    %v952 = vmul.f32 %v947, %v951
    %953 = vrot.lane.b32.xlu0 %v856, 64
    %v954 = vpop.permute.xlu0 %953
    %vm955 = vcmask 39936
    %v957 = vsel %vm955, %v952, 0
    %v959 = vsel %vm750, %v954, 0
    %961 = vmatprep.subr.mxu0 0.0
    %962 = vmatpush1.msra.mxu0 %v959
    %963 = vmatprep.subr.mxu0 0.0
    %964 = vmatpush1.msra.mxu0 0.0
    %965 = vmatprep.subr.mxu0 0.0
    %966 = vmatpush1.msra.mxu0 0.0
    %967 = vmatprep.subr.mxu0 0.0
    %968 = vmatpush1.msra.mxu0 0.0
    %969 = vmatprep.subr.mxu0 0.0
    %970 = vmatpush1.msra.mxu0 0.0
    %971 = vmatprep.subr.mxu0 0.0
    %972 = vmatpush1.msra.mxu0 0.0
    %973 = vmatprep.subr.mxu0 0.0
    %974 = vmatpush1.msra.mxu0 0.0
    %975 = vmatprep.subr.mxu0 0.0
    %976 = vmatpush1.msra.mxu0 0.0
    %977 = vmatprep.subr.mxu0 0.0
    %978 = vmatpush1.msra.mxu0 0.0
    %979 = vmatprep.subr.mxu0 0.0
    %980 = vmatpush1.msra.mxu0 0.0
    %981 = vmatprep.subr.mxu0 0.0
    %982 = vmatpush1.msra.mxu0 0.0
    %983 = vmatprep.subr.mxu0 0.0
    %984 = vmatpush1.msra.mxu0 0.0
    %985 = vmatprep.subr.mxu0 0.0
    %986 = vmatpush1.msra.mxu0 0.0
    %987 = vmatprep.subr.mxu0 0.0
    %988 = vmatpush1.msra.mxu0 0.0
    %989 = vmatprep.subr.mxu0 0.0
    %990 = vmatpush1.msra.mxu0 0.0
    %991 = vmatprep.subr.mxu0 0.0
    %992 = vmatpush1.msra.mxu0 0.0
    %993 = vmatprep.subr.mxu0 0.0
    %994 = vmatpush1.msra.mxu0 0.0
    %995 = vmatprep.subr.mxu0 0.0
    %996 = vmatpush1.msra.mxu0 0.0
    %997 = vmatprep.subr.mxu0 0.0
    %998 = vmatpush1.msra.mxu0 0.0
    %999 = vmatprep.subr.mxu0 0.0
    %1000 = vmatpush1.msra.mxu0 0.0
    %1001 = vmatprep.subr.mxu0 0.0
    %1002 = vmatpush1.msra.mxu0 0.0
    %1003 = vmatprep.subr.mxu0 0.0
    %1004 = vmatpush1.msra.mxu0 0.0
    %1005 = vmatprep.subr.mxu0 0.0
    %1006 = vmatpush1.msra.mxu0 0.0
    %1007 = vmatprep.subr.mxu0 0.0
    %1008 = vmatpush1.msra.mxu0 0.0
    %1009 = vmatprep.subr.mxu0 0.0
    %1010 = vmatpush1.msra.mxu0 0.0
    %1011 = vmatprep.subr.mxu0 0.0
    %1012 = vmatpush1.msra.mxu0 0.0
    %1013 = vmatprep.subr.mxu0 0.0
    %1014 = vmatpush1.msra.mxu0 0.0
    %1015 = vmatprep.subr.mxu0 0.0
    %1016 = vmatpush1.msra.mxu0 0.0
    %1017 = vmatprep.subr.mxu0 0.0
    %1018 = vmatpush1.msra.mxu0 0.0
    %1019 = vmatprep.subr.mxu0 0.0
    %1020 = vmatpush1.msra.mxu0 0.0
    %1021 = vmatprep.subr.mxu0 0.0
    %1022 = vmatpush1.msra.mxu0 0.0
    %1023 = vmatprep.subr.mxu0 0.0
    %1024 = vmatpush1.msra.mxu0 0.0
    %1025 = vmatprep.mubr.f32.mxu0 0.0
    %1026 = vmatmul.mubr.f32.gmra.mrb[0].mxu0 %v957
    %v1027 = vpop.f32.mrb[0].mxu0
    %v1028 = vadd.f32 0.0, %v1027
    %v1029 = vpop.f32.mrb[0].mxu0
    %1030 = vdwg.mxu0
    %1031 = vrot.lane.b32.xlu0 %v856, 120
    %v1032 = vpop.permute.xlu0 %1031
    %1033 = vrot.lane.b32.xlu0 %v856, 88
    %v1034 = vpop.permute.xlu0 %1033
    %v1035 = vsel %vm865, %v1032, 0
    %v1037 = vsel %vm865, %v1034, 0
    %1039 = vmatprep.subr.mxu0 0.0
    %1040 = vmatpush1.xpose.msra.mxu0 %v1037
    %1041 = vmatprep.subr.mxu0 0.0
    %1042 = vmatpush1.xpose.msra.mxu0 0.0
    %1043 = vmatprep.subr.mxu0 0.0
    %1044 = vmatpush1.xpose.msra.mxu0 0.0
    %1045 = vmatprep.subr.mxu0 0.0
    %1046 = vmatpush1.xpose.msra.mxu0 0.0
    %1047 = vmatprep.subr.mxu0 0.0
    %1048 = vmatpush1.xpose.msra.mxu0 0.0
    %1049 = vmatprep.subr.mxu0 0.0
    %1050 = vmatpush1.xpose.msra.mxu0 0.0
    %1051 = vmatprep.subr.mxu0 0.0
    %1052 = vmatpush1.xpose.msra.mxu0 0.0
    %1053 = vmatprep.subr.mxu0 0.0
    %1054 = vmatpush1.xpose.msra.mxu0 0.0
    %1055 = vmatprep.subr.mxu0 0.0
    %1056 = vmatpush1.xpose.msra.mxu0 0.0
    %1057 = vmatprep.subr.mxu0 0.0
    %1058 = vmatpush1.xpose.msra.mxu0 0.0
    %1059 = vmatprep.subr.mxu0 0.0
    %1060 = vmatpush1.xpose.msra.mxu0 0.0
    %1061 = vmatprep.subr.mxu0 0.0
    %1062 = vmatpush1.xpose.msra.mxu0 0.0
    %1063 = vmatprep.subr.mxu0 0.0
    %1064 = vmatpush1.xpose.msra.mxu0 0.0
    %1065 = vmatprep.subr.mxu0 0.0
    %1066 = vmatpush1.xpose.msra.mxu0 0.0
    %1067 = vmatprep.subr.mxu0 0.0
    %1068 = vmatpush1.xpose.msra.mxu0 0.0
    %1069 = vmatprep.subr.mxu0 0.0
    %1070 = vmatpush1.xpose.msra.mxu0 0.0
    %1071 = vmatprep.subr.mxu0 0.0
    %1072 = vmatpush1.xpose.msra.mxu0 0.0
    %1073 = vmatprep.subr.mxu0 0.0
    %1074 = vmatpush1.xpose.msra.mxu0 0.0
    %1075 = vmatprep.subr.mxu0 0.0
    %1076 = vmatpush1.xpose.msra.mxu0 0.0
    %1077 = vmatprep.subr.mxu0 0.0
    %1078 = vmatpush1.xpose.msra.mxu0 0.0
    %1079 = vmatprep.subr.mxu0 0.0
    %1080 = vmatpush1.xpose.msra.mxu0 0.0
    %1081 = vmatprep.subr.mxu0 0.0
    %1082 = vmatpush1.xpose.msra.mxu0 0.0
    %1083 = vmatprep.subr.mxu0 0.0
    %1084 = vmatpush1.xpose.msra.mxu0 0.0
    %1085 = vmatprep.subr.mxu0 0.0
    %1086 = vmatpush1.xpose.msra.mxu0 0.0
    %1087 = vmatprep.subr.mxu0 0.0
    %1088 = vmatpush1.xpose.msra.mxu0 0.0
    %1089 = vmatprep.subr.mxu0 0.0
    %1090 = vmatpush1.xpose.msra.mxu0 0.0
    %1091 = vmatprep.subr.mxu0 0.0
    %1092 = vmatpush1.xpose.msra.mxu0 0.0
    %1093 = vmatprep.subr.mxu0 0.0
    %1094 = vmatpush1.xpose.msra.mxu0 0.0
    %1095 = vmatprep.subr.mxu0 0.0
    %1096 = vmatpush1.xpose.msra.mxu0 0.0
    %1097 = vmatprep.subr.mxu0 0.0
    %1098 = vmatpush1.xpose.msra.mxu0 0.0
    %1099 = vmatprep.subr.mxu0 0.0
    %1100 = vmatpush1.xpose.msra.mxu0 0.0
    %1101 = vmatprep.subr.mxu0 0.0
    %1102 = vmatpush1.xpose.msra.mxu0 0.0
    %1103 = vmatprep.mubr.f32.mxu0 0.0
    %1104 = vmatmul.mubr.f32.gmra.mrb[0].mxu0 %v1035
    %v1105 = vpop.f32.mrb[0].mxu0
    %v1106 = vadd.f32 0.0, %v1105
    %v1107 = vpop.f32.mrb[0].mxu0
    %1108 = vdwg.mxu0
    %v1109 = vmul.f32 %v1106, 0.35355338
    %v1110 = vsel %vm941, %v1109, -inf
    %1111 = vmax.xlane.f32.xlu0 %v1110
    %v1112 = vpop.xlane.xlu0 %1111
    %v1113 = vsub.f32 %v1109, %v1112
    %v1114 = vmul.f32 %v1113, 1.442695
    %v1115 = vpow.pop %v1114
    %v1116 = vsel %vm941, %v1115, 0.0
    %1117 = vadd.xlane.f32.xlu0 %v1116
    %v1118 = vpop.xlane.xlu0 %1117
    %v1119 = vrcp.pop %v1118
    %v1120 = vmul.f32 %v1115, %v1119
    %1121 = vrot.lane.b32.xlu0 %v856, 56
    %v1122 = vpop.permute.xlu0 %1121
    %v1124 = vsel %vm955, %v1120, 0
    %v1126 = vsel %vm750, %v1122, 0
    %1128 = vmatprep.subr.mxu0 0.0
    %1129 = vmatpush1.msra.mxu0 %v1126
    %1130 = vmatprep.subr.mxu0 0.0
    %1131 = vmatpush1.msra.mxu0 0.0
    %1132 = vmatprep.subr.mxu0 0.0
    %1133 = vmatpush1.msra.mxu0 0.0
    %1134 = vmatprep.subr.mxu0 0.0
    %1135 = vmatpush1.msra.mxu0 0.0
    %1136 = vmatprep.subr.mxu0 0.0
    %1137 = vmatpush1.msra.mxu0 0.0
    %1138 = vmatprep.subr.mxu0 0.0
    %1139 = vmatpush1.msra.mxu0 0.0
    %1140 = vmatprep.subr.mxu0 0.0
    %1141 = vmatpush1.msra.mxu0 0.0
    %1142 = vmatprep.subr.mxu0 0.0
    %1143 = vmatpush1.msra.mxu0 0.0
    %1144 = vmatprep.subr.mxu0 0.0
    %1145 = vmatpush1.msra.mxu0 0.0
    %1146 = vmatprep.subr.mxu0 0.0
    %1147 = vmatpush1.msra.mxu0 0.0
    %1148 = vmatprep.subr.mxu0 0.0
    %1149 = vmatpush1.msra.mxu0 0.0
    %1150 = vmatprep.subr.mxu0 0.0
    %1151 = vmatpush1.msra.mxu0 0.0
    %1152 = vmatprep.subr.mxu0 0.0
    %1153 = vmatpush1.msra.mxu0 0.0
    %1154 = vmatprep.subr.mxu0 0.0
    %1155 = vmatpush1.msra.mxu0 0.0
    %1156 = vmatprep.subr.mxu0 0.0
    %1157 = vmatpush1.msra.mxu0 0.0
    %1158 = vmatprep.subr.mxu0 0.0
    %1159 = vmatpush1.msra.mxu0 0.0
    %1160 = vmatprep.subr.mxu0 0.0
    %1161 = vmatpush1.msra.mxu0 0.0
    %1162 = vmatprep.subr.mxu0 0.0
    %1163 = vmatpush1.msra.mxu0 0.0
    %1164 = vmatprep.subr.mxu0 0.0
    %1165 = vmatpush1.msra.mxu0 0.0
    %1166 = vmatprep.subr.mxu0 0.0
    %1167 = vmatpush1.msra.mxu0 0.0
    %1168 = vmatprep.subr.mxu0 0.0
    %1169 = vmatpush1.msra.mxu0 0.0
    %1170 = vmatprep.subr.mxu0 0.0
    %1171 = vmatpush1.msra.mxu0 0.0
    %1172 = vmatprep.subr.mxu0 0.0
    %1173 = vmatpush1.msra.mxu0 0.0
    %1174 = vmatprep.subr.mxu0 0.0
    %1175 = vmatpush1.msra.mxu0 0.0
    %1176 = vmatprep.subr.mxu0 0.0
    %1177 = vmatpush1.msra.mxu0 0.0
    %1178 = vmatprep.subr.mxu0 0.0
    %1179 = vmatpush1.msra.mxu0 0.0
    %1180 = vmatprep.subr.mxu0 0.0
    %1181 = vmatpush1.msra.mxu0 0.0
    %1182 = vmatprep.subr.mxu0 0.0
    %1183 = vmatpush1.msra.mxu0 0.0
    %1184 = vmatprep.subr.mxu0 0.0
    %1185 = vmatpush1.msra.mxu0 0.0
    %1186 = vmatprep.subr.mxu0 0.0
    %1187 = vmatpush1.msra.mxu0 0.0
    %1188 = vmatprep.subr.mxu0 0.0
    %1189 = vmatpush1.msra.mxu0 0.0
    %1190 = vmatprep.subr.mxu0 0.0
    %1191 = vmatpush1.msra.mxu0 0.0
    %1192 = vmatprep.mubr.f32.mxu0 0.0
    %1193 = vmatmul.mubr.f32.gmra.mrb[0].mxu0 %v1124
    %v1194 = vpop.f32.mrb[0].mxu0
    %v1195 = vadd.f32 0.0, %v1194
    %v1196 = vpop.f32.mrb[0].mxu0
    %1197 = vdwg.mxu0
    %1198 = vrot.lane.b32.xlu0 %v856, 112
    %v1199 = vpop.permute.xlu0 %1198
    %1200 = vrot.lane.b32.xlu0 %v856, 80
    %v1201 = vpop.permute.xlu0 %1200
    %v1202 = vsel %vm865, %v1199, 0
    %v1204 = vsel %vm865, %v1201, 0
    %1206 = vmatprep.subr.mxu0 0.0
    %1207 = vmatpush1.xpose.msra.mxu0 %v1204
    %1208 = vmatprep.subr.mxu0 0.0
    %1209 = vmatpush1.xpose.msra.mxu0 0.0
    %1210 = vmatprep.subr.mxu0 0.0
    %1211 = vmatpush1.xpose.msra.mxu0 0.0
    %1212 = vmatprep.subr.mxu0 0.0
    %1213 = vmatpush1.xpose.msra.mxu0 0.0
    %1214 = vmatprep.subr.mxu0 0.0
    %1215 = vmatpush1.xpose.msra.mxu0 0.0
    %1216 = vmatprep.subr.mxu0 0.0
    %1217 = vmatpush1.xpose.msra.mxu0 0.0
    %1218 = vmatprep.subr.mxu0 0.0
    %1219 = vmatpush1.xpose.msra.mxu0 0.0
    %1220 = vmatprep.subr.mxu0 0.0
    %1221 = vmatpush1.xpose.msra.mxu0 0.0
    %1222 = vmatprep.subr.mxu0 0.0
    %1223 = vmatpush1.xpose.msra.mxu0 0.0
    %1224 = vmatprep.subr.mxu0 0.0
    %1225 = vmatpush1.xpose.msra.mxu0 0.0
    %1226 = vmatprep.subr.mxu0 0.0
    %1227 = vmatpush1.xpose.msra.mxu0 0.0
    %1228 = vmatprep.subr.mxu0 0.0
    %1229 = vmatpush1.xpose.msra.mxu0 0.0
    %1230 = vmatprep.subr.mxu0 0.0
    %1231 = vmatpush1.xpose.msra.mxu0 0.0
    %1232 = vmatprep.subr.mxu0 0.0
    %1233 = vmatpush1.xpose.msra.mxu0 0.0
    %1234 = vmatprep.subr.mxu0 0.0
    %1235 = vmatpush1.xpose.msra.mxu0 0.0
    %1236 = vmatprep.subr.mxu0 0.0
    %1237 = vmatpush1.xpose.msra.mxu0 0.0
    %1238 = vmatprep.subr.mxu0 0.0
    %1239 = vmatpush1.xpose.msra.mxu0 0.0
    %1240 = vmatprep.subr.mxu0 0.0
    %1241 = vmatpush1.xpose.msra.mxu0 0.0
    %1242 = vmatprep.subr.mxu0 0.0
    %1243 = vmatpush1.xpose.msra.mxu0 0.0
    %1244 = vmatprep.subr.mxu0 0.0
    %1245 = vmatpush1.xpose.msra.mxu0 0.0
    %1246 = vmatprep.subr.mxu0 0.0
    %1247 = vmatpush1.xpose.msra.mxu0 0.0
    %1248 = vmatprep.subr.mxu0 0.0
    %1249 = vmatpush1.xpose.msra.mxu0 0.0
    %1250 = vmatprep.subr.mxu0 0.0
    %1251 = vmatpush1.xpose.msra.mxu0 0.0
    %1252 = vmatprep.subr.mxu0 0.0
    %1253 = vmatpush1.xpose.msra.mxu0 0.0
    %1254 = vmatprep.subr.mxu0 0.0
    %1255 = vmatpush1.xpose.msra.mxu0 0.0
    %1256 = vmatprep.subr.mxu0 0.0
    %1257 = vmatpush1.xpose.msra.mxu0 0.0
    %1258 = vmatprep.subr.mxu0 0.0
    %1259 = vmatpush1.xpose.msra.mxu0 0.0
    %1260 = vmatprep.subr.mxu0 0.0
    %1261 = vmatpush1.xpose.msra.mxu0 0.0
    %1262 = vmatprep.subr.mxu0 0.0
    %1263 = vmatpush1.xpose.msra.mxu0 0.0
    %1264 = vmatprep.subr.mxu0 0.0
    %1265 = vmatpush1.xpose.msra.mxu0 0.0
    %1266 = vmatprep.subr.mxu0 0.0
    %1267 = vmatpush1.xpose.msra.mxu0 0.0
    %1268 = vmatprep.subr.mxu0 0.0
    %1269 = vmatpush1.xpose.msra.mxu0 0.0
    %1270 = vmatprep.mubr.f32.mxu0 0.0
    %1271 = vmatmul.mubr.f32.gmra.mrb[0].mxu0 %v1202
    %v1272 = vpop.f32.mrb[0].mxu0
    %v1273 = vadd.f32 0.0, %v1272
    %v1274 = vpop.f32.mrb[0].mxu0
    %1275 = vdwg.mxu0
    %v1276 = vmul.f32 %v1273, 0.35355338
    %v1277 = vsel %vm941, %v1276, -inf
    %1278 = vmax.xlane.f32.xlu0 %v1277
    %v1279 = vpop.xlane.xlu0 %1278
    %v1280 = vsub.f32 %v1276, %v1279
    %v1281 = vmul.f32 %v1280, 1.442695
    %v1282 = vpow.pop %v1281
    %v1283 = vsel %vm941, %v1282, 0.0
    %1284 = vadd.xlane.f32.xlu0 %v1283
    %v1285 = vpop.xlane.xlu0 %1284
    %v1286 = vrcp.pop %v1285
    %v1287 = vmul.f32 %v1282, %v1286
    %1288 = vrot.lane.b32.xlu0 %v856, 48
    %v1289 = vpop.permute.xlu0 %1288
    %v1291 = vsel %vm955, %v1287, 0
    %v1293 = vsel %vm750, %v1289, 0
    %1295 = vmatprep.subr.mxu0 0.0
    %1296 = vmatpush1.msra.mxu0 %v1293
    %1297 = vmatprep.subr.mxu0 0.0
    %1298 = vmatpush1.msra.mxu0 0.0
    %1299 = vmatprep.subr.mxu0 0.0
    %1300 = vmatpush1.msra.mxu0 0.0
    %1301 = vmatprep.subr.mxu0 0.0
    %1302 = vmatpush1.msra.mxu0 0.0
    %1303 = vmatprep.subr.mxu0 0.0
    %1304 = vmatpush1.msra.mxu0 0.0
    %1305 = vmatprep.subr.mxu0 0.0
    %1306 = vmatpush1.msra.mxu0 0.0
    %1307 = vmatprep.subr.mxu0 0.0
    %1308 = vmatpush1.msra.mxu0 0.0
    %1309 = vmatprep.subr.mxu0 0.0
    %1310 = vmatpush1.msra.mxu0 0.0
    %1311 = vmatprep.subr.mxu0 0.0
    %1312 = vmatpush1.msra.mxu0 0.0
    %1313 = vmatprep.subr.mxu0 0.0
    %1314 = vmatpush1.msra.mxu0 0.0
    %1315 = vmatprep.subr.mxu0 0.0
    %1316 = vmatpush1.msra.mxu0 0.0
    %1317 = vmatprep.subr.mxu0 0.0
    %1318 = vmatpush1.msra.mxu0 0.0
    %1319 = vmatprep.subr.mxu0 0.0
    %1320 = vmatpush1.msra.mxu0 0.0
    %1321 = vmatprep.subr.mxu0 0.0
    %1322 = vmatpush1.msra.mxu0 0.0
    %1323 = vmatprep.subr.mxu0 0.0
    %1324 = vmatpush1.msra.mxu0 0.0
    %1325 = vmatprep.subr.mxu0 0.0
    %1326 = vmatpush1.msra.mxu0 0.0
    %1327 = vmatprep.subr.mxu0 0.0
    %1328 = vmatpush1.msra.mxu0 0.0
    %1329 = vmatprep.subr.mxu0 0.0
    %1330 = vmatpush1.msra.mxu0 0.0
    %1331 = vmatprep.subr.mxu0 0.0
    %1332 = vmatpush1.msra.mxu0 0.0
    %1333 = vmatprep.subr.mxu0 0.0
    %1334 = vmatpush1.msra.mxu0 0.0
    %1335 = vmatprep.subr.mxu0 0.0
    %1336 = vmatpush1.msra.mxu0 0.0
    %1337 = vmatprep.subr.mxu0 0.0
    %1338 = vmatpush1.msra.mxu0 0.0
    %1339 = vmatprep.subr.mxu0 0.0
    %1340 = vmatpush1.msra.mxu0 0.0
    %1341 = vmatprep.subr.mxu0 0.0
    %1342 = vmatpush1.msra.mxu0 0.0
    %1343 = vmatprep.subr.mxu0 0.0
    %1344 = vmatpush1.msra.mxu0 0.0
    %1345 = vmatprep.subr.mxu0 0.0
    %1346 = vmatpush1.msra.mxu0 0.0
    %1347 = vmatprep.subr.mxu0 0.0
    %1348 = vmatpush1.msra.mxu0 0.0
    %1349 = vmatprep.subr.mxu0 0.0
    %1350 = vmatpush1.msra.mxu0 0.0
    %1351 = vmatprep.subr.mxu0 0.0
    %1352 = vmatpush1.msra.mxu0 0.0
    %1353 = vmatprep.subr.mxu0 0.0
    %1354 = vmatpush1.msra.mxu0 0.0
    %1355 = vmatprep.subr.mxu0 0.0
    %1356 = vmatpush1.msra.mxu0 0.0
    %1357 = vmatprep.subr.mxu0 0.0
    %1358 = vmatpush1.msra.mxu0 0.0
    %1359 = vmatprep.mubr.f32.mxu0 0.0
    %1360 = vmatmul.mubr.f32.gmra.mrb[0].mxu0 %v1291
    %v1361 = vpop.f32.mrb[0].mxu0
    %v1362 = vadd.f32 0.0, %v1361
    %v1363 = vpop.f32.mrb[0].mxu0
    %1364 = vdwg.mxu0
    %1365 = vrot.lane.b32.xlu0 %v856, 104
    %v1366 = vpop.permute.xlu0 %1365
    %1367 = vrot.lane.b32.xlu0 %v856, 72
    %v1368 = vpop.permute.xlu0 %1367
    %v1369 = vsel %vm865, %v1366, 0
    %v1371 = vsel %vm865, %v1368, 0
    %1373 = vmatprep.subr.mxu0 0.0
    %1374 = vmatpush1.xpose.msra.mxu0 %v1371
    %1375 = vmatprep.subr.mxu0 0.0
    %1376 = vmatpush1.xpose.msra.mxu0 0.0
    %1377 = vmatprep.subr.mxu0 0.0
    %1378 = vmatpush1.xpose.msra.mxu0 0.0
    %1379 = vmatprep.subr.mxu0 0.0
    %1380 = vmatpush1.xpose.msra.mxu0 0.0
    %1381 = vmatprep.subr.mxu0 0.0
    %1382 = vmatpush1.xpose.msra.mxu0 0.0
    %1383 = vmatprep.subr.mxu0 0.0
    %1384 = vmatpush1.xpose.msra.mxu0 0.0
    %1385 = vmatprep.subr.mxu0 0.0
    %1386 = vmatpush1.xpose.msra.mxu0 0.0
    %1387 = vmatprep.subr.mxu0 0.0
    %1388 = vmatpush1.xpose.msra.mxu0 0.0
    %1389 = vmatprep.subr.mxu0 0.0
    %1390 = vmatpush1.xpose.msra.mxu0 0.0
    %1391 = vmatprep.subr.mxu0 0.0
    %1392 = vmatpush1.xpose.msra.mxu0 0.0
    %1393 = vmatprep.subr.mxu0 0.0
    %1394 = vmatpush1.xpose.msra.mxu0 0.0
    %1395 = vmatprep.subr.mxu0 0.0
    %1396 = vmatpush1.xpose.msra.mxu0 0.0
    %1397 = vmatprep.subr.mxu0 0.0
    %1398 = vmatpush1.xpose.msra.mxu0 0.0
    %1399 = vmatprep.subr.mxu0 0.0
    %1400 = vmatpush1.xpose.msra.mxu0 0.0
    %1401 = vmatprep.subr.mxu0 0.0
    %1402 = vmatpush1.xpose.msra.mxu0 0.0
    %1403 = vmatprep.subr.mxu0 0.0
    %1404 = vmatpush1.xpose.msra.mxu0 0.0
    %1405 = vmatprep.subr.mxu0 0.0
    %1406 = vmatpush1.xpose.msra.mxu0 0.0
    %1407 = vmatprep.subr.mxu0 0.0
    %1408 = vmatpush1.xpose.msra.mxu0 0.0
    %1409 = vmatprep.subr.mxu0 0.0
    %1410 = vmatpush1.xpose.msra.mxu0 0.0
    %1411 = vmatprep.subr.mxu0 0.0
    %1412 = vmatpush1.xpose.msra.mxu0 0.0
    %1413 = vmatprep.subr.mxu0 0.0
    %1414 = vmatpush1.xpose.msra.mxu0 0.0
    %1415 = vmatprep.subr.mxu0 0.0
    %1416 = vmatpush1.xpose.msra.mxu0 0.0
    %1417 = vmatprep.subr.mxu0 0.0
    %1418 = vmatpush1.xpose.msra.mxu0 0.0
    %1419 = vmatprep.subr.mxu0 0.0
    %1420 = vmatpush1.xpose.msra.mxu0 0.0
    %1421 = vmatprep.subr.mxu0 0.0
    %1422 = vmatpush1.xpose.msra.mxu0 0.0
    %1423 = vmatprep.subr.mxu0 0.0
    %1424 = vmatpush1.xpose.msra.mxu0 0.0
    %1425 = vmatprep.subr.mxu0 0.0
    %1426 = vmatpush1.xpose.msra.mxu0 0.0
    %1427 = vmatprep.subr.mxu0 0.0
    %1428 = vmatpush1.xpose.msra.mxu0 0.0
    %1429 = vmatprep.subr.mxu0 0.0
    %1430 = vmatpush1.xpose.msra.mxu0 0.0
    %1431 = vmatprep.subr.mxu0 0.0
    %1432 = vmatpush1.xpose.msra.mxu0 0.0
    %1433 = vmatprep.subr.mxu0 0.0
    %1434 = vmatpush1.xpose.msra.mxu0 0.0
    %1435 = vmatprep.subr.mxu0 0.0
    %1436 = vmatpush1.xpose.msra.mxu0 0.0
    %1437 = vmatprep.mubr.f32.mxu0 0.0
    %1438 = vmatmul.mubr.f32.gmra.mrb[0].mxu0 %v1369
    %v1439 = vpop.f32.mrb[0].mxu0
    %v1440 = vadd.f32 0.0, %v1439
    %v1441 = vpop.f32.mrb[0].mxu0
    %1442 = vdwg.mxu0
    %v1443 = vmul.f32 %v1440, 0.35355338
    %v1444 = vsel %vm941, %v1443, -inf
    %1445 = vmax.xlane.f32.xlu0 %v1444
    %v1446 = vpop.xlane.xlu0 %1445
    %v1447 = vsub.f32 %v1443, %v1446
    %v1448 = vmul.f32 %v1447, 1.442695
    %v1449 = vpow.pop %v1448
    %v1450 = vsel %vm941, %v1449, 0.0
    %1451 = vadd.xlane.f32.xlu0 %v1450
    %v1452 = vpop.xlane.xlu0 %1451
    %v1453 = vrcp.pop %v1452
    %v1454 = vmul.f32 %v1449, %v1453
    %1455 = vrot.lane.b32.xlu0 %v856, 40
    %v1456 = vpop.permute.xlu0 %1455
    %v1458 = vsel %vm955, %v1454, 0
    %v1460 = vsel %vm750, %v1456, 0
    %1462 = vmatprep.subr.mxu0 0.0
    %1463 = vmatpush1.msra.mxu0 %v1460
    %1464 = vmatprep.subr.mxu0 0.0
    %1465 = vmatpush1.msra.mxu0 0.0
    %1466 = vmatprep.subr.mxu0 0.0
    %1467 = vmatpush1.msra.mxu0 0.0
    %1468 = vmatprep.subr.mxu0 0.0
    %1469 = vmatpush1.msra.mxu0 0.0
    %1470 = vmatprep.subr.mxu0 0.0
    %1471 = vmatpush1.msra.mxu0 0.0
    %1472 = vmatprep.subr.mxu0 0.0
    %1473 = vmatpush1.msra.mxu0 0.0
    %1474 = vmatprep.subr.mxu0 0.0
    %1475 = vmatpush1.msra.mxu0 0.0
    %1476 = vmatprep.subr.mxu0 0.0
    %1477 = vmatpush1.msra.mxu0 0.0
    %1478 = vmatprep.subr.mxu0 0.0
    %1479 = vmatpush1.msra.mxu0 0.0
    %1480 = vmatprep.subr.mxu0 0.0
    %1481 = vmatpush1.msra.mxu0 0.0
    %1482 = vmatprep.subr.mxu0 0.0
    %1483 = vmatpush1.msra.mxu0 0.0
    %1484 = vmatprep.subr.mxu0 0.0
    %1485 = vmatpush1.msra.mxu0 0.0
    %1486 = vmatprep.subr.mxu0 0.0
    %1487 = vmatpush1.msra.mxu0 0.0
    %1488 = vmatprep.subr.mxu0 0.0
    %1489 = vmatpush1.msra.mxu0 0.0
    %1490 = vmatprep.subr.mxu0 0.0
    %1491 = vmatpush1.msra.mxu0 0.0
    %1492 = vmatprep.subr.mxu0 0.0
    %1493 = vmatpush1.msra.mxu0 0.0
    %1494 = vmatprep.subr.mxu0 0.0
    %1495 = vmatpush1.msra.mxu0 0.0
    %1496 = vmatprep.subr.mxu0 0.0
    %1497 = vmatpush1.msra.mxu0 0.0
    %1498 = vmatprep.subr.mxu0 0.0
    %1499 = vmatpush1.msra.mxu0 0.0
    %1500 = vmatprep.subr.mxu0 0.0
    %1501 = vmatpush1.msra.mxu0 0.0
    %1502 = vmatprep.subr.mxu0 0.0
    %1503 = vmatpush1.msra.mxu0 0.0
    %1504 = vmatprep.subr.mxu0 0.0
    %1505 = vmatpush1.msra.mxu0 0.0
    %1506 = vmatprep.subr.mxu0 0.0
    %1507 = vmatpush1.msra.mxu0 0.0
    %1508 = vmatprep.subr.mxu0 0.0
    %1509 = vmatpush1.msra.mxu0 0.0
    %1510 = vmatprep.subr.mxu0 0.0
    %1511 = vmatpush1.msra.mxu0 0.0
    %1512 = vmatprep.subr.mxu0 0.0
    %1513 = vmatpush1.msra.mxu0 0.0
    %1514 = vmatprep.subr.mxu0 0.0
    %1515 = vmatpush1.msra.mxu0 0.0
    %1516 = vmatprep.subr.mxu0 0.0
    %1517 = vmatpush1.msra.mxu0 0.0
    %1518 = vmatprep.subr.mxu0 0.0
    %1519 = vmatpush1.msra.mxu0 0.0
    %1520 = vmatprep.subr.mxu0 0.0
    %1521 = vmatpush1.msra.mxu0 0.0
    %1522 = vmatprep.subr.mxu0 0.0
    %1523 = vmatpush1.msra.mxu0 0.0
    %1524 = vmatprep.subr.mxu0 0.0
    %1525 = vmatpush1.msra.mxu0 0.0
    %1526 = vmatprep.mubr.f32.mxu0 0.0
    %1527 = vmatmul.mubr.f32.gmra.mrb[0].mxu0 %v1458
    %v1528 = vpop.f32.mrb[0].mxu0
    %v1529 = vadd.f32 0.0, %v1528
    %v1530 = vpop.f32.mrb[0].mxu0
    %1531 = vdwg.mxu0
    %1533 = vrot.lane.b32.xlu0 %v1195, 8
    %v1534 = vpop.permute.xlu0 %1533
    %1537 = vrot.lane.b32.xlu0 %v1362, 16
    %v1538 = vpop.permute.xlu0 %1537
    %1541 = vrot.lane.b32.xlu0 %v1529, 24
    %v1542 = vpop.permute.xlu0 %1541
    %v1544 = vsel %vm865, %v1028, %v1534
    %vm1545 = vcmask 130048
    %v1546 = vsel %vm1545, %v1544, %v1538
    %vm1547 = vcmask 195584
    %v1548 = vsel %vm1547, %v1546, %v1542
    %vm1550 = vcmask 1042432
    %v1551 = vrot.slane %v856, 5
    %v1552 = vrot.slane %v859, 5
    %v1553 = vsel %vm1550, %v1551, %v1552
    %1554 = vrot.lane.b32.xlu0 %v1553, 96
    %v1555 = vpop.permute.xlu0 %1554
    %v1556 = vsel %vm865, %v1553, 0
    %v1558 = vsel %vm865, %v1555, 0
    %1560 = vmatprep.subr.mxu0 0.0
    %1561 = vmatpush1.xpose.msra.mxu0 %v1558
    %1562 = vmatprep.subr.mxu0 0.0
    %1563 = vmatpush1.xpose.msra.mxu0 0.0
    %1564 = vmatprep.subr.mxu0 0.0
    %1565 = vmatpush1.xpose.msra.mxu0 0.0
    %1566 = vmatprep.subr.mxu0 0.0
    %1567 = vmatpush1.xpose.msra.mxu0 0.0
    %1568 = vmatprep.subr.mxu0 0.0
    %1569 = vmatpush1.xpose.msra.mxu0 0.0
    %1570 = vmatprep.subr.mxu0 0.0
    %1571 = vmatpush1.xpose.msra.mxu0 0.0
    %1572 = vmatprep.subr.mxu0 0.0
    %1573 = vmatpush1.xpose.msra.mxu0 0.0
    %1574 = vmatprep.subr.mxu0 0.0
    %1575 = vmatpush1.xpose.msra.mxu0 0.0
    %1576 = vmatprep.subr.mxu0 0.0
    %1577 = vmatpush1.xpose.msra.mxu0 0.0
    %1578 = vmatprep.subr.mxu0 0.0
    %1579 = vmatpush1.xpose.msra.mxu0 0.0
    %1580 = vmatprep.subr.mxu0 0.0
    %1581 = vmatpush1.xpose.msra.mxu0 0.0
    %1582 = vmatprep.subr.mxu0 0.0
    %1583 = vmatpush1.xpose.msra.mxu0 0.0
    %1584 = vmatprep.subr.mxu0 0.0
    %1585 = vmatpush1.xpose.msra.mxu0 0.0
    %1586 = vmatprep.subr.mxu0 0.0
    %1587 = vmatpush1.xpose.msra.mxu0 0.0
    %1588 = vmatprep.subr.mxu0 0.0
    %1589 = vmatpush1.xpose.msra.mxu0 0.0
    %1590 = vmatprep.subr.mxu0 0.0
    %1591 = vmatpush1.xpose.msra.mxu0 0.0
    %1592 = vmatprep.subr.mxu0 0.0
    %1593 = vmatpush1.xpose.msra.mxu0 0.0
    %1594 = vmatprep.subr.mxu0 0.0
    %1595 = vmatpush1.xpose.msra.mxu0 0.0
    %1596 = vmatprep.subr.mxu0 0.0
    %1597 = vmatpush1.xpose.msra.mxu0 0.0
    %1598 = vmatprep.subr.mxu0 0.0
    %1599 = vmatpush1.xpose.msra.mxu0 0.0
    %1600 = vmatprep.subr.mxu0 0.0
    %1601 = vmatpush1.xpose.msra.mxu0 0.0
    %1602 = vmatprep.subr.mxu0 0.0
    %1603 = vmatpush1.xpose.msra.mxu0 0.0
    %1604 = vmatprep.subr.mxu0 0.0
    %1605 = vmatpush1.xpose.msra.mxu0 0.0
    %1606 = vmatprep.subr.mxu0 0.0
    %1607 = vmatpush1.xpose.msra.mxu0 0.0
    %1608 = vmatprep.subr.mxu0 0.0
    %1609 = vmatpush1.xpose.msra.mxu0 0.0
    %1610 = vmatprep.subr.mxu0 0.0
    %1611 = vmatpush1.xpose.msra.mxu0 0.0
    %1612 = vmatprep.subr.mxu0 0.0
    %1613 = vmatpush1.xpose.msra.mxu0 0.0
    %1614 = vmatprep.subr.mxu0 0.0
    %1615 = vmatpush1.xpose.msra.mxu0 0.0
    %1616 = vmatprep.subr.mxu0 0.0
    %1617 = vmatpush1.xpose.msra.mxu0 0.0
    %1618 = vmatprep.subr.mxu0 0.0
    %1619 = vmatpush1.xpose.msra.mxu0 0.0
    %1620 = vmatprep.subr.mxu0 0.0
    %1621 = vmatpush1.xpose.msra.mxu0 0.0
    %1622 = vmatprep.subr.mxu0 0.0
    %1623 = vmatpush1.xpose.msra.mxu0 0.0
    %1624 = vmatprep.mubr.f32.mxu0 0.0
    %1625 = vmatmul.mubr.f32.gmra.mrb[0].mxu0 %v1556
    %v1626 = vpop.f32.mrb[0].mxu0
    %v1627 = vadd.f32 0.0, %v1626
    %v1628 = vpop.f32.mrb[0].mxu0
    %1629 = vdwg.mxu0
    %v1630 = vmul.f32 %v1627, 0.35355338
    %v1631 = vsel %vm941, %v1630, -inf
    %1632 = vmax.xlane.f32.xlu0 %v1631
    %v1633 = vpop.xlane.xlu0 %1632
    %v1634 = vsub.f32 %v1630, %v1633
    %v1635 = vmul.f32 %v1634, 1.442695
    %v1636 = vpow.pop %v1635
    %v1637 = vsel %vm941, %v1636, 0.0
    %1638 = vadd.xlane.f32.xlu0 %v1637
    %v1639 = vpop.xlane.xlu0 %1638
    %v1640 = vrcp.pop %v1639
    %v1641 = vmul.f32 %v1636, %v1640
    %1642 = vrot.lane.b32.xlu0 %v1553, 64
    %v1643 = vpop.permute.xlu0 %1642
    %v1645 = vsel %vm955, %v1641, 0
    %v1647 = vsel %vm750, %v1643, 0
    %1649 = vmatprep.subr.mxu0 0.0
    %1650 = vmatpush1.msra.mxu0 %v1647
    %1651 = vmatprep.subr.mxu0 0.0
    %1652 = vmatpush1.msra.mxu0 0.0
    %1653 = vmatprep.subr.mxu0 0.0
    %1654 = vmatpush1.msra.mxu0 0.0
    %1655 = vmatprep.subr.mxu0 0.0
    %1656 = vmatpush1.msra.mxu0 0.0
    %1657 = vmatprep.subr.mxu0 0.0
    %1658 = vmatpush1.msra.mxu0 0.0
    %1659 = vmatprep.subr.mxu0 0.0
    %1660 = vmatpush1.msra.mxu0 0.0
    %1661 = vmatprep.subr.mxu0 0.0
    %1662 = vmatpush1.msra.mxu0 0.0
    %1663 = vmatprep.subr.mxu0 0.0
    %1664 = vmatpush1.msra.mxu0 0.0
    %1665 = vmatprep.subr.mxu0 0.0
    %1666 = vmatpush1.msra.mxu0 0.0
    %1667 = vmatprep.subr.mxu0 0.0
    %1668 = vmatpush1.msra.mxu0 0.0
    %1669 = vmatprep.subr.mxu0 0.0
    %1670 = vmatpush1.msra.mxu0 0.0
    %1671 = vmatprep.subr.mxu0 0.0
    %1672 = vmatpush1.msra.mxu0 0.0
    %1673 = vmatprep.subr.mxu0 0.0
    %1674 = vmatpush1.msra.mxu0 0.0
    %1675 = vmatprep.subr.mxu0 0.0
    %1676 = vmatpush1.msra.mxu0 0.0
    %1677 = vmatprep.subr.mxu0 0.0
    %1678 = vmatpush1.msra.mxu0 0.0
    %1679 = vmatprep.subr.mxu0 0.0
    %1680 = vmatpush1.msra.mxu0 0.0
    %1681 = vmatprep.subr.mxu0 0.0
    %1682 = vmatpush1.msra.mxu0 0.0
    %1683 = vmatprep.subr.mxu0 0.0
    %1684 = vmatpush1.msra.mxu0 0.0
    %1685 = vmatprep.subr.mxu0 0.0
    %1686 = vmatpush1.msra.mxu0 0.0
    %1687 = vmatprep.subr.mxu0 0.0
    %1688 = vmatpush1.msra.mxu0 0.0
    %1689 = vmatprep.subr.mxu0 0.0
    %1690 = vmatpush1.msra.mxu0 0.0
    %1691 = vmatprep.subr.mxu0 0.0
    %1692 = vmatpush1.msra.mxu0 0.0
    %1693 = vmatprep.subr.mxu0 0.0
    %1694 = vmatpush1.msra.mxu0 0.0
    %1695 = vmatprep.subr.mxu0 0.0
    %1696 = vmatpush1.msra.mxu0 0.0
    %1697 = vmatprep.subr.mxu0 0.0
    %1698 = vmatpush1.msra.mxu0 0.0
    %1699 = vmatprep.subr.mxu0 0.0
    %1700 = vmatpush1.msra.mxu0 0.0
    %1701 = vmatprep.subr.mxu0 0.0
    %1702 = vmatpush1.msra.mxu0 0.0
    %1703 = vmatprep.subr.mxu0 0.0
    %1704 = vmatpush1.msra.mxu0 0.0
    %1705 = vmatprep.subr.mxu0 0.0
    %1706 = vmatpush1.msra.mxu0 0.0
    %1707 = vmatprep.subr.mxu0 0.0
    %1708 = vmatpush1.msra.mxu0 0.0
    %1709 = vmatprep.subr.mxu0 0.0
    %1710 = vmatpush1.msra.mxu0 0.0
    %1711 = vmatprep.subr.mxu0 0.0
    %1712 = vmatpush1.msra.mxu0 0.0
    %1713 = vmatprep.mubr.f32.mxu0 0.0
    %1714 = vmatmul.mubr.f32.gmra.mrb[0].mxu0 %v1645
    %v1715 = vpop.f32.mrb[0].mxu0
    %v1716 = vadd.f32 0.0, %v1715
    %v1717 = vpop.f32.mrb[0].mxu0
    %1718 = vdwg.mxu0
    %1719 = vrot.lane.b32.xlu0 %v1553, 120
    %v1720 = vpop.permute.xlu0 %1719
    %1721 = vrot.lane.b32.xlu0 %v1553, 88
    %v1722 = vpop.permute.xlu0 %1721
    %v1723 = vsel %vm865, %v1720, 0
    %v1725 = vsel %vm865, %v1722, 0
    %1727 = vmatprep.subr.mxu0 0.0
    %1728 = vmatpush1.xpose.msra.mxu0 %v1725
    %1729 = vmatprep.subr.mxu0 0.0
    %1730 = vmatpush1.xpose.msra.mxu0 0.0
    %1731 = vmatprep.subr.mxu0 0.0
    %1732 = vmatpush1.xpose.msra.mxu0 0.0
    %1733 = vmatprep.subr.mxu0 0.0
    %1734 = vmatpush1.xpose.msra.mxu0 0.0
    %1735 = vmatprep.subr.mxu0 0.0
    %1736 = vmatpush1.xpose.msra.mxu0 0.0
    %1737 = vmatprep.subr.mxu0 0.0
    %1738 = vmatpush1.xpose.msra.mxu0 0.0
    %1739 = vmatprep.subr.mxu0 0.0
    %1740 = vmatpush1.xpose.msra.mxu0 0.0
    %1741 = vmatprep.subr.mxu0 0.0
    %1742 = vmatpush1.xpose.msra.mxu0 0.0
    %1743 = vmatprep.subr.mxu0 0.0
    %1744 = vmatpush1.xpose.msra.mxu0 0.0
    %1745 = vmatprep.subr.mxu0 0.0
    %1746 = vmatpush1.xpose.msra.mxu0 0.0
    %1747 = vmatprep.subr.mxu0 0.0
    %1748 = vmatpush1.xpose.msra.mxu0 0.0
    %1749 = vmatprep.subr.mxu0 0.0
    %1750 = vmatpush1.xpose.msra.mxu0 0.0
    %1751 = vmatprep.subr.mxu0 0.0
    %1752 = vmatpush1.xpose.msra.mxu0 0.0
    %1753 = vmatprep.subr.mxu0 0.0
    %1754 = vmatpush1.xpose.msra.mxu0 0.0
    %1755 = vmatprep.subr.mxu0 0.0
    %1756 = vmatpush1.xpose.msra.mxu0 0.0
    %1757 = vmatprep.subr.mxu0 0.0
    %1758 = vmatpush1.xpose.msra.mxu0 0.0
    %1759 = vmatprep.subr.mxu0 0.0
    %1760 = vmatpush1.xpose.msra.mxu0 0.0
    %1761 = vmatprep.subr.mxu0 0.0
    %1762 = vmatpush1.xpose.msra.mxu0 0.0
    %1763 = vmatprep.subr.mxu0 0.0
    %1764 = vmatpush1.xpose.msra.mxu0 0.0
    %1765 = vmatprep.subr.mxu0 0.0
    %1766 = vmatpush1.xpose.msra.mxu0 0.0
    %1767 = vmatprep.subr.mxu0 0.0
    %1768 = vmatpush1.xpose.msra.mxu0 0.0
    %1769 = vmatprep.subr.mxu0 0.0
    %1770 = vmatpush1.xpose.msra.mxu0 0.0
    %1771 = vmatprep.subr.mxu0 0.0
    %1772 = vmatpush1.xpose.msra.mxu0 0.0
    %1773 = vmatprep.subr.mxu0 0.0
    %1774 = vmatpush1.xpose.msra.mxu0 0.0
    %1775 = vmatprep.subr.mxu0 0.0
    %1776 = vmatpush1.xpose.msra.mxu0 0.0
    %1777 = vmatprep.subr.mxu0 0.0
    %1778 = vmatpush1.xpose.msra.mxu0 0.0
    %1779 = vmatprep.subr.mxu0 0.0
    %1780 = vmatpush1.xpose.msra.mxu0 0.0
    %1781 = vmatprep.subr.mxu0 0.0
    %1782 = vmatpush1.xpose.msra.mxu0 0.0
    %1783 = vmatprep.subr.mxu0 0.0
    %1784 = vmatpush1.xpose.msra.mxu0 0.0
    %1785 = vmatprep.subr.mxu0 0.0
    %1786 = vmatpush1.xpose.msra.mxu0 0.0
    %1787 = vmatprep.subr.mxu0 0.0
    %1788 = vmatpush1.xpose.msra.mxu0 0.0
    %1789 = vmatprep.subr.mxu0 0.0
    %1790 = vmatpush1.xpose.msra.mxu0 0.0
    %1791 = vmatprep.mubr.f32.mxu0 0.0
    %1792 = vmatmul.mubr.f32.gmra.mrb[0].mxu0 %v1723
    %v1793 = vpop.f32.mrb[0].mxu0
    %v1794 = vadd.f32 0.0, %v1793
    %v1795 = vpop.f32.mrb[0].mxu0
    %1796 = vdwg.mxu0
    %v1797 = vmul.f32 %v1794, 0.35355338
    %v1798 = vsel %vm941, %v1797, -inf
    %1799 = vmax.xlane.f32.xlu0 %v1798
    %v1800 = vpop.xlane.xlu0 %1799
    %v1801 = vsub.f32 %v1797, %v1800
    %v1802 = vmul.f32 %v1801, 1.442695
    %v1803 = vpow.pop %v1802
    %v1804 = vsel %vm941, %v1803, 0.0
    %1805 = vadd.xlane.f32.xlu0 %v1804
    %v1806 = vpop.xlane.xlu0 %1805
    %v1807 = vrcp.pop %v1806
    %v1808 = vmul.f32 %v1803, %v1807
    %1809 = vrot.lane.b32.xlu0 %v1553, 56
    %v1810 = vpop.permute.xlu0 %1809
    %v1812 = vsel %vm955, %v1808, 0
    %v1814 = vsel %vm750, %v1810, 0
    %1816 = vmatprep.subr.mxu0 0.0
    %1817 = vmatpush1.msra.mxu0 %v1814
    %1818 = vmatprep.subr.mxu0 0.0
    %1819 = vmatpush1.msra.mxu0 0.0
    %1820 = vmatprep.subr.mxu0 0.0
    %1821 = vmatpush1.msra.mxu0 0.0
    %1822 = vmatprep.subr.mxu0 0.0
    %1823 = vmatpush1.msra.mxu0 0.0
    %1824 = vmatprep.subr.mxu0 0.0
    %1825 = vmatpush1.msra.mxu0 0.0
    %1826 = vmatprep.subr.mxu0 0.0
    %1827 = vmatpush1.msra.mxu0 0.0
    %1828 = vmatprep.subr.mxu0 0.0
    %1829 = vmatpush1.msra.mxu0 0.0
    %1830 = vmatprep.subr.mxu0 0.0
    %1831 = vmatpush1.msra.mxu0 0.0
    %1832 = vmatprep.subr.mxu0 0.0
    %1833 = vmatpush1.msra.mxu0 0.0
    %1834 = vmatprep.subr.mxu0 0.0
    %1835 = vmatpush1.msra.mxu0 0.0
    %1836 = vmatprep.subr.mxu0 0.0
    %1837 = vmatpush1.msra.mxu0 0.0
    %1838 = vmatprep.subr.mxu0 0.0
    %1839 = vmatpush1.msra.mxu0 0.0
    %1840 = vmatprep.subr.mxu0 0.0
    %1841 = vmatpush1.msra.mxu0 0.0
    %1842 = vmatprep.subr.mxu0 0.0
    %1843 = vmatpush1.msra.mxu0 0.0
    %1844 = vmatprep.subr.mxu0 0.0
    %1845 = vmatpush1.msra.mxu0 0.0
    %1846 = vmatprep.subr.mxu0 0.0
    %1847 = vmatpush1.msra.mxu0 0.0
    %1848 = vmatprep.subr.mxu0 0.0
    %1849 = vmatpush1.msra.mxu0 0.0
    %1850 = vmatprep.subr.mxu0 0.0
    %1851 = vmatpush1.msra.mxu0 0.0
    %1852 = vmatprep.subr.mxu0 0.0
    %1853 = vmatpush1.msra.mxu0 0.0
    %1854 = vmatprep.subr.mxu0 0.0
    %1855 = vmatpush1.msra.mxu0 0.0
    %1856 = vmatprep.subr.mxu0 0.0
    %1857 = vmatpush1.msra.mxu0 0.0
    %1858 = vmatprep.subr.mxu0 0.0
    %1859 = vmatpush1.msra.mxu0 0.0
    %1860 = vmatprep.subr.mxu0 0.0
    %1861 = vmatpush1.msra.mxu0 0.0
    %1862 = vmatprep.subr.mxu0 0.0
    %1863 = vmatpush1.msra.mxu0 0.0
    %1864 = vmatprep.subr.mxu0 0.0
    %1865 = vmatpush1.msra.mxu0 0.0
    %1866 = vmatprep.subr.mxu0 0.0
    %1867 = vmatpush1.msra.mxu0 0.0
    %1868 = vmatprep.subr.mxu0 0.0
    %1869 = vmatpush1.msra.mxu0 0.0
    %1870 = vmatprep.subr.mxu0 0.0
    %1871 = vmatpush1.msra.mxu0 0.0
    %1872 = vmatprep.subr.mxu0 0.0
    %1873 = vmatpush1.msra.mxu0 0.0
    %1874 = vmatprep.subr.mxu0 0.0
    %1875 = vmatpush1.msra.mxu0 0.0
    %1876 = vmatprep.subr.mxu0 0.0
    %1877 = vmatpush1.msra.mxu0 0.0
    %1878 = vmatprep.subr.mxu0 0.0
    %1879 = vmatpush1.msra.mxu0 0.0
    %1880 = vmatprep.mubr.f32.mxu0 0.0
    %1881 = vmatmul.mubr.f32.gmra.mrb[0].mxu0 %v1812
    %v1882 = vpop.f32.mrb[0].mxu0
    %v1883 = vadd.f32 0.0, %v1882
    %v1884 = vpop.f32.mrb[0].mxu0
    %1885 = vdwg.mxu0
    %1886 = vrot.lane.b32.xlu0 %v1553, 112
    %v1887 = vpop.permute.xlu0 %1886
    %1888 = vrot.lane.b32.xlu0 %v1553, 80
    %v1889 = vpop.permute.xlu0 %1888
    %v1890 = vsel %vm865, %v1887, 0
    %v1892 = vsel %vm865, %v1889, 0
    %1894 = vmatprep.subr.mxu0 0.0
    %1895 = vmatpush1.xpose.msra.mxu0 %v1892
    %1896 = vmatprep.subr.mxu0 0.0
    %1897 = vmatpush1.xpose.msra.mxu0 0.0
    %1898 = vmatprep.subr.mxu0 0.0
    %1899 = vmatpush1.xpose.msra.mxu0 0.0
    %1900 = vmatprep.subr.mxu0 0.0
    %1901 = vmatpush1.xpose.msra.mxu0 0.0
    %1902 = vmatprep.subr.mxu0 0.0
    %1903 = vmatpush1.xpose.msra.mxu0 0.0
    %1904 = vmatprep.subr.mxu0 0.0
    %1905 = vmatpush1.xpose.msra.mxu0 0.0
    %1906 = vmatprep.subr.mxu0 0.0
    %1907 = vmatpush1.xpose.msra.mxu0 0.0
    %1908 = vmatprep.subr.mxu0 0.0
    %1909 = vmatpush1.xpose.msra.mxu0 0.0
    %1910 = vmatprep.subr.mxu0 0.0
    %1911 = vmatpush1.xpose.msra.mxu0 0.0
    %1912 = vmatprep.subr.mxu0 0.0
    %1913 = vmatpush1.xpose.msra.mxu0 0.0
    %1914 = vmatprep.subr.mxu0 0.0
    %1915 = vmatpush1.xpose.msra.mxu0 0.0
    %1916 = vmatprep.subr.mxu0 0.0
    %1917 = vmatpush1.xpose.msra.mxu0 0.0
    %1918 = vmatprep.subr.mxu0 0.0
    %1919 = vmatpush1.xpose.msra.mxu0 0.0
    %1920 = vmatprep.subr.mxu0 0.0
    %1921 = vmatpush1.xpose.msra.mxu0 0.0
    %1922 = vmatprep.subr.mxu0 0.0
    %1923 = vmatpush1.xpose.msra.mxu0 0.0
    %1924 = vmatprep.subr.mxu0 0.0
    %1925 = vmatpush1.xpose.msra.mxu0 0.0
    %1926 = vmatprep.subr.mxu0 0.0
    %1927 = vmatpush1.xpose.msra.mxu0 0.0
    %1928 = vmatprep.subr.mxu0 0.0
    %1929 = vmatpush1.xpose.msra.mxu0 0.0
    %1930 = vmatprep.subr.mxu0 0.0
    %1931 = vmatpush1.xpose.msra.mxu0 0.0
    %1932 = vmatprep.subr.mxu0 0.0
    %1933 = vmatpush1.xpose.msra.mxu0 0.0
    %1934 = vmatprep.subr.mxu0 0.0
    %1935 = vmatpush1.xpose.msra.mxu0 0.0
    %1936 = vmatprep.subr.mxu0 0.0
    %1937 = vmatpush1.xpose.msra.mxu0 0.0
    %1938 = vmatprep.subr.mxu0 0.0
    %1939 = vmatpush1.xpose.msra.mxu0 0.0
    %1940 = vmatprep.subr.mxu0 0.0
    %1941 = vmatpush1.xpose.msra.mxu0 0.0
    %1942 = vmatprep.subr.mxu0 0.0
    %1943 = vmatpush1.xpose.msra.mxu0 0.0
    %1944 = vmatprep.subr.mxu0 0.0
    %1945 = vmatpush1.xpose.msra.mxu0 0.0
    %1946 = vmatprep.subr.mxu0 0.0
    %1947 = vmatpush1.xpose.msra.mxu0 0.0
    %1948 = vmatprep.subr.mxu0 0.0
    %1949 = vmatpush1.xpose.msra.mxu0 0.0
    %1950 = vmatprep.subr.mxu0 0.0
    %1951 = vmatpush1.xpose.msra.mxu0 0.0
    %1952 = vmatprep.subr.mxu0 0.0
    %1953 = vmatpush1.xpose.msra.mxu0 0.0
    %1954 = vmatprep.subr.mxu0 0.0
    %1955 = vmatpush1.xpose.msra.mxu0 0.0
    %1956 = vmatprep.subr.mxu0 0.0
    %1957 = vmatpush1.xpose.msra.mxu0 0.0
    %1958 = vmatprep.mubr.f32.mxu0 0.0
    %1959 = vmatmul.mubr.f32.gmra.mrb[0].mxu0 %v1890
    %v1960 = vpop.f32.mrb[0].mxu0
    %v1961 = vadd.f32 0.0, %v1960
    %v1962 = vpop.f32.mrb[0].mxu0
    %1963 = vdwg.mxu0
    %v1964 = vmul.f32 %v1961, 0.35355338
    %v1965 = vsel %vm941, %v1964, -inf
    %1966 = vmax.xlane.f32.xlu0 %v1965
    %v1967 = vpop.xlane.xlu0 %1966
    %v1968 = vsub.f32 %v1964, %v1967
    %v1969 = vmul.f32 %v1968, 1.442695
    %v1970 = vpow.pop %v1969
    %v1971 = vsel %vm941, %v1970, 0.0
    %1972 = vadd.xlane.f32.xlu0 %v1971
    %v1973 = vpop.xlane.xlu0 %1972
    %v1974 = vrcp.pop %v1973
    %v1975 = vmul.f32 %v1970, %v1974
    %1976 = vrot.lane.b32.xlu0 %v1553, 48
    %v1977 = vpop.permute.xlu0 %1976
    %v1979 = vsel %vm955, %v1975, 0
    %v1981 = vsel %vm750, %v1977, 0
    %1983 = vmatprep.subr.mxu0 0.0
    %1984 = vmatpush1.msra.mxu0 %v1981
    %1985 = vmatprep.subr.mxu0 0.0
    %1986 = vmatpush1.msra.mxu0 0.0
    %1987 = vmatprep.subr.mxu0 0.0
    %1988 = vmatpush1.msra.mxu0 0.0
    %1989 = vmatprep.subr.mxu0 0.0
    %1990 = vmatpush1.msra.mxu0 0.0
    %1991 = vmatprep.subr.mxu0 0.0
    %1992 = vmatpush1.msra.mxu0 0.0
    %1993 = vmatprep.subr.mxu0 0.0
    %1994 = vmatpush1.msra.mxu0 0.0
    %1995 = vmatprep.subr.mxu0 0.0
    %1996 = vmatpush1.msra.mxu0 0.0
    %1997 = vmatprep.subr.mxu0 0.0
    %1998 = vmatpush1.msra.mxu0 0.0
    %1999 = vmatprep.subr.mxu0 0.0
    %2000 = vmatpush1.msra.mxu0 0.0
    %2001 = vmatprep.subr.mxu0 0.0
    %2002 = vmatpush1.msra.mxu0 0.0
    %2003 = vmatprep.subr.mxu0 0.0
    %2004 = vmatpush1.msra.mxu0 0.0
    %2005 = vmatprep.subr.mxu0 0.0
    %2006 = vmatpush1.msra.mxu0 0.0
    %2007 = vmatprep.subr.mxu0 0.0
    %2008 = vmatpush1.msra.mxu0 0.0
    %2009 = vmatprep.subr.mxu0 0.0
    %2010 = vmatpush1.msra.mxu0 0.0
    %2011 = vmatprep.subr.mxu0 0.0
    %2012 = vmatpush1.msra.mxu0 0.0
    %2013 = vmatprep.subr.mxu0 0.0
    %2014 = vmatpush1.msra.mxu0 0.0
    %2015 = vmatprep.subr.mxu0 0.0
    %2016 = vmatpush1.msra.mxu0 0.0
    %2017 = vmatprep.subr.mxu0 0.0
    %2018 = vmatpush1.msra.mxu0 0.0
    %2019 = vmatprep.subr.mxu0 0.0
    %2020 = vmatpush1.msra.mxu0 0.0
    %2021 = vmatprep.subr.mxu0 0.0
    %2022 = vmatpush1.msra.mxu0 0.0
    %2023 = vmatprep.subr.mxu0 0.0
    %2024 = vmatpush1.msra.mxu0 0.0
    %2025 = vmatprep.subr.mxu0 0.0
    %2026 = vmatpush1.msra.mxu0 0.0
    %2027 = vmatprep.subr.mxu0 0.0
    %2028 = vmatpush1.msra.mxu0 0.0
    %2029 = vmatprep.subr.mxu0 0.0
    %2030 = vmatpush1.msra.mxu0 0.0
    %2031 = vmatprep.subr.mxu0 0.0
    %2032 = vmatpush1.msra.mxu0 0.0
    %2033 = vmatprep.subr.mxu0 0.0
    %2034 = vmatpush1.msra.mxu0 0.0
    %2035 = vmatprep.subr.mxu0 0.0
    %2036 = vmatpush1.msra.mxu0 0.0
    %2037 = vmatprep.subr.mxu0 0.0
    %2038 = vmatpush1.msra.mxu0 0.0
    %2039 = vmatprep.subr.mxu0 0.0
    %2040 = vmatpush1.msra.mxu0 0.0
    %2041 = vmatprep.subr.mxu0 0.0
    %2042 = vmatpush1.msra.mxu0 0.0
    %2043 = vmatprep.subr.mxu0 0.0
    %2044 = vmatpush1.msra.mxu0 0.0
    %2045 = vmatprep.subr.mxu0 0.0
    %2046 = vmatpush1.msra.mxu0 0.0
    %2047 = vmatprep.mubr.f32.mxu0 0.0
    %2048 = vmatmul.mubr.f32.gmra.mrb[0].mxu0 %v1979
    %v2049 = vpop.f32.mrb[0].mxu0
    %v2050 = vadd.f32 0.0, %v2049
    %v2051 = vpop.f32.mrb[0].mxu0
    %2052 = vdwg.mxu0
    %2053 = vrot.lane.b32.xlu0 %v1553, 104
    %v2054 = vpop.permute.xlu0 %2053
    %2055 = vrot.lane.b32.xlu0 %v1553, 72
    %v2056 = vpop.permute.xlu0 %2055
    %v2057 = vsel %vm865, %v2054, 0
    %v2059 = vsel %vm865, %v2056, 0
    %2061 = vmatprep.subr.mxu0 0.0
    %2062 = vmatpush1.xpose.msra.mxu0 %v2059
    %2063 = vmatprep.subr.mxu0 0.0
    %2064 = vmatpush1.xpose.msra.mxu0 0.0
    %2065 = vmatprep.subr.mxu0 0.0
    %2066 = vmatpush1.xpose.msra.mxu0 0.0
    %2067 = vmatprep.subr.mxu0 0.0
    %2068 = vmatpush1.xpose.msra.mxu0 0.0
    %2069 = vmatprep.subr.mxu0 0.0
    %2070 = vmatpush1.xpose.msra.mxu0 0.0
    %2071 = vmatprep.subr.mxu0 0.0
    %2072 = vmatpush1.xpose.msra.mxu0 0.0
    %2073 = vmatprep.subr.mxu0 0.0
    %2074 = vmatpush1.xpose.msra.mxu0 0.0
    %2075 = vmatprep.subr.mxu0 0.0
    %2076 = vmatpush1.xpose.msra.mxu0 0.0
    %2077 = vmatprep.subr.mxu0 0.0
    %2078 = vmatpush1.xpose.msra.mxu0 0.0
    %2079 = vmatprep.subr.mxu0 0.0
    %2080 = vmatpush1.xpose.msra.mxu0 0.0
    %2081 = vmatprep.subr.mxu0 0.0
    %2082 = vmatpush1.xpose.msra.mxu0 0.0
    %2083 = vmatprep.subr.mxu0 0.0
    %2084 = vmatpush1.xpose.msra.mxu0 0.0
    %2085 = vmatprep.subr.mxu0 0.0
    %2086 = vmatpush1.xpose.msra.mxu0 0.0
    %2087 = vmatprep.subr.mxu0 0.0
    %2088 = vmatpush1.xpose.msra.mxu0 0.0
    %2089 = vmatprep.subr.mxu0 0.0
    %2090 = vmatpush1.xpose.msra.mxu0 0.0
    %2091 = vmatprep.subr.mxu0 0.0
    %2092 = vmatpush1.xpose.msra.mxu0 0.0
    %2093 = vmatprep.subr.mxu0 0.0
    %2094 = vmatpush1.xpose.msra.mxu0 0.0
    %2095 = vmatprep.subr.mxu0 0.0
    %2096 = vmatpush1.xpose.msra.mxu0 0.0
    %2097 = vmatprep.subr.mxu0 0.0
    %2098 = vmatpush1.xpose.msra.mxu0 0.0
    %2099 = vmatprep.subr.mxu0 0.0
    %2100 = vmatpush1.xpose.msra.mxu0 0.0
    %2101 = vmatprep.subr.mxu0 0.0
    %2102 = vmatpush1.xpose.msra.mxu0 0.0
    %2103 = vmatprep.subr.mxu0 0.0
    %2104 = vmatpush1.xpose.msra.mxu0 0.0
    %2105 = vmatprep.subr.mxu0 0.0
    %2106 = vmatpush1.xpose.msra.mxu0 0.0
    %2107 = vmatprep.subr.mxu0 0.0
    %2108 = vmatpush1.xpose.msra.mxu0 0.0
    %2109 = vmatprep.subr.mxu0 0.0
    %2110 = vmatpush1.xpose.msra.mxu0 0.0
    %2111 = vmatprep.subr.mxu0 0.0
    %2112 = vmatpush1.xpose.msra.mxu0 0.0
    %2113 = vmatprep.subr.mxu0 0.0
    %2114 = vmatpush1.xpose.msra.mxu0 0.0
    %2115 = vmatprep.subr.mxu0 0.0
    %2116 = vmatpush1.xpose.msra.mxu0 0.0
    %2117 = vmatprep.subr.mxu0 0.0
    %2118 = vmatpush1.xpose.msra.mxu0 0.0
    %2119 = vmatprep.subr.mxu0 0.0
    %2120 = vmatpush1.xpose.msra.mxu0 0.0
    %2121 = vmatprep.subr.mxu0 0.0
    %2122 = vmatpush1.xpose.msra.mxu0 0.0
    %2123 = vmatprep.subr.mxu0 0.0
    %2124 = vmatpush1.xpose.msra.mxu0 0.0
    %2125 = vmatprep.mubr.f32.mxu0 0.0
    %2126 = vmatmul.mubr.f32.gmra.mrb[0].mxu0 %v2057
    %v2127 = vpop.f32.mrb[0].mxu0
    %v2128 = vadd.f32 0.0, %v2127
    %v2129 = vpop.f32.mrb[0].mxu0
    %2130 = vdwg.mxu0
    %v2131 = vmul.f32 %v2128, 0.35355338
    %v2132 = vsel %vm941, %v2131, -inf
    %2133 = vmax.xlane.f32.xlu0 %v2132
    %v2134 = vpop.xlane.xlu0 %2133
    %v2135 = vsub.f32 %v2131, %v2134
    %v2136 = vmul.f32 %v2135, 1.442695
    %v2137 = vpow.pop %v2136
    %v2138 = vsel %vm941, %v2137, 0.0
    %2139 = vadd.xlane.f32.xlu0 %v2138
    %v2140 = vpop.xlane.xlu0 %2139
    %v2141 = vrcp.pop %v2140
    %v2142 = vmul.f32 %v2137, %v2141
    %2143 = vrot.lane.b32.xlu0 %v1553, 40
    %v2144 = vpop.permute.xlu0 %2143
    %v2146 = vsel %vm955, %v2142, 0
    %v2148 = vsel %vm750, %v2144, 0
    %2150 = vmatprep.subr.mxu0 0.0
    %2151 = vmatpush1.msra.mxu0 %v2148
    %2152 = vmatprep.subr.mxu0 0.0
    %2153 = vmatpush1.msra.mxu0 0.0
    %2154 = vmatprep.subr.mxu0 0.0
    %2155 = vmatpush1.msra.mxu0 0.0
    %2156 = vmatprep.subr.mxu0 0.0
    %2157 = vmatpush1.msra.mxu0 0.0
    %2158 = vmatprep.subr.mxu0 0.0
    %2159 = vmatpush1.msra.mxu0 0.0
    %2160 = vmatprep.subr.mxu0 0.0
    %2161 = vmatpush1.msra.mxu0 0.0
    %2162 = vmatprep.subr.mxu0 0.0
    %2163 = vmatpush1.msra.mxu0 0.0
    %2164 = vmatprep.subr.mxu0 0.0
    %2165 = vmatpush1.msra.mxu0 0.0
    %2166 = vmatprep.subr.mxu0 0.0
    %2167 = vmatpush1.msra.mxu0 0.0
    %2168 = vmatprep.subr.mxu0 0.0
    %2169 = vmatpush1.msra.mxu0 0.0
    %2170 = vmatprep.subr.mxu0 0.0
    %2171 = vmatpush1.msra.mxu0 0.0
    %2172 = vmatprep.subr.mxu0 0.0
    %2173 = vmatpush1.msra.mxu0 0.0
    %2174 = vmatprep.subr.mxu0 0.0
    %2175 = vmatpush1.msra.mxu0 0.0
    %2176 = vmatprep.subr.mxu0 0.0
    %2177 = vmatpush1.msra.mxu0 0.0
    %2178 = vmatprep.subr.mxu0 0.0
    %2179 = vmatpush1.msra.mxu0 0.0
    %2180 = vmatprep.subr.mxu0 0.0
    %2181 = vmatpush1.msra.mxu0 0.0
    %2182 = vmatprep.subr.mxu0 0.0
    %2183 = vmatpush1.msra.mxu0 0.0
    %2184 = vmatprep.subr.mxu0 0.0
    %2185 = vmatpush1.msra.mxu0 0.0
    %2186 = vmatprep.subr.mxu0 0.0
    %2187 = vmatpush1.msra.mxu0 0.0
    %2188 = vmatprep.subr.mxu0 0.0
    %2189 = vmatpush1.msra.mxu0 0.0
    %2190 = vmatprep.subr.mxu0 0.0
    %2191 = vmatpush1.msra.mxu0 0.0
    %2192 = vmatprep.subr.mxu0 0.0
    %2193 = vmatpush1.msra.mxu0 0.0
    %2194 = vmatprep.subr.mxu0 0.0
    %2195 = vmatpush1.msra.mxu0 0.0
    %2196 = vmatprep.subr.mxu0 0.0
    %2197 = vmatpush1.msra.mxu0 0.0
    %2198 = vmatprep.subr.mxu0 0.0
    %2199 = vmatpush1.msra.mxu0 0.0
    %2200 = vmatprep.subr.mxu0 0.0
    %2201 = vmatpush1.msra.mxu0 0.0
    %2202 = vmatprep.subr.mxu0 0.0
    %2203 = vmatpush1.msra.mxu0 0.0
    %2204 = vmatprep.subr.mxu0 0.0
    %2205 = vmatpush1.msra.mxu0 0.0
    %2206 = vmatprep.subr.mxu0 0.0
    %2207 = vmatpush1.msra.mxu0 0.0
    %2208 = vmatprep.subr.mxu0 0.0
    %2209 = vmatpush1.msra.mxu0 0.0
    %2210 = vmatprep.subr.mxu0 0.0
    %2211 = vmatpush1.msra.mxu0 0.0
    %2212 = vmatprep.subr.mxu0 0.0
    %2213 = vmatpush1.msra.mxu0 0.0
    %2214 = vmatprep.mubr.f32.mxu0 0.0
    %2215 = vmatmul.mubr.f32.gmra.mrb[0].mxu0 %v2146
    %v2216 = vpop.f32.mrb[0].mxu0
    %v2217 = vadd.f32 0.0, %v2216
    %v2218 = vpop.f32.mrb[0].mxu0
    %2219 = vdwg.mxu0
    %2221 = vrot.lane.b32.xlu0 %v1883, 8
    %v2222 = vpop.permute.xlu0 %2221
    %2225 = vrot.lane.b32.xlu0 %v2050, 16
    %v2226 = vpop.permute.xlu0 %2225
    %2229 = vrot.lane.b32.xlu0 %v2217, 24
    %v2230 = vpop.permute.xlu0 %2229
    %v2232 = vsel %vm865, %v1716, %v2222
    %v2233 = vsel %vm1545, %v2232, %v2226
    %v2234 = vsel %vm1547, %v2233, %v2230
    %v2236 = vrot.slane %v2234, 3
    %v2238 = vsel %vm750, %v1548, %v2236
    %v2239 = vld [vmem:[%s6] sm:$0xf]
    %v2240 = vld [vmem:[%s6 + $0x4] sm:$0xf]
    %v2241 = vld [vmem:[%s6 + $0x8] sm:$0xf]
    %v2242 = vld [vmem:[%s6 + $0xc] sm:$0xf]
    %v2243 = vpack.c.bf16 %v2236, %v2238
    %v2248 = vunpack.c.l.b16 %v2239
    %v2249 = vunpack.c.l.b16 %v2240
    %v2250 = vunpack.c.l.b16 %v2241
    %v2251 = vunpack.c.l.b16 %v2242
    %v2252 = vpack.c.b16 %v2249, %v2248
    %v2253 = vpack.c.b16 %v2251, %v2250
    %v2257 = vsel %vm753, %v2243, 0
    %2259 = vmatprep.subr.bf16.mxu0 0
    %2260 = vmatpush1.bf16.msra.mxu0 %v2252
    %2261 = vmatprep.subr.bf16.mxu0 0
    %2262 = vmatpush1.bf16.msra.mxu0 %v2253
    %2263 = vmatprep.subr.bf16.mxu0 0
    %2264 = vmatpush1.bf16.msra.mxu0 0
    %2265 = vmatprep.subr.bf16.mxu0 0
    %2266 = vmatpush1.bf16.msra.mxu0 0
    %2267 = vmatprep.subr.bf16.mxu0 0
    %2268 = vmatpush1.bf16.msra.mxu0 0
    %2269 = vmatprep.subr.bf16.mxu0 0
    %2270 = vmatpush1.bf16.msra.mxu0 0
    %2271 = vmatprep.subr.bf16.mxu0 0
    %2272 = vmatpush1.bf16.msra.mxu0 0
    %2273 = vmatprep.subr.bf16.mxu0 0
    %2274 = vmatpush1.bf16.msra.mxu0 0
    %2275 = vmatprep.subr.bf16.mxu0 0
    %2276 = vmatpush1.bf16.msra.mxu0 0
    %2277 = vmatprep.subr.bf16.mxu0 0
    %2278 = vmatpush1.bf16.msra.mxu0 0
    %2279 = vmatprep.subr.bf16.mxu0 0
    %2280 = vmatpush1.bf16.msra.mxu0 0
    %2281 = vmatprep.subr.bf16.mxu0 0
    %2282 = vmatpush1.bf16.msra.mxu0 0
    %2283 = vmatprep.subr.bf16.mxu0 0
    %2284 = vmatpush1.bf16.msra.mxu0 0
    %2285 = vmatprep.subr.bf16.mxu0 0
    %2286 = vmatpush1.bf16.msra.mxu0 0
    %2287 = vmatprep.subr.bf16.mxu0 0
    %2288 = vmatpush1.bf16.msra.mxu0 0
    %2289 = vmatprep.subr.bf16.mxu0 0
    %2290 = vmatpush1.bf16.msra.mxu0 0
    %2291 = vmatprep.mubr.bf16.mxu0 0
    %2292 = vmatmul.mubr.bf16.gmra.mrb[0].mxu0 %v2257
    %v2293 = vpop.f32.mrb[0].mxu0
    %v2294 = vadd.f32 0.0, %v2293
    %v2295 = vpop.f32.mrb[0].mxu0
    %v2296 = vpop.f32.mrb[0].mxu0
    %v2297 = vadd.f32 0.0, %v2296
    %v2298 = vpop.f32.mrb[0].mxu0
    %2299 = vdwg.mxu0
    %v2300 = vadd.f32 %v751, %v2294
    %v2301 = vadd.f32 %v748, %v2297
    %v2302 = vlaneseq
    %v2303 = vshrl.u32 %v2302, 7
    %v2304 = vsub.s32 4, %v2303
    %v2305 = vrot.slane %v752, %v2304
    %v2306 = vadd.f32 %v2300, %v2305
    %v2307 = vadd.f32 %v2301, %v2305
    %v2308 = vsel %vm753, %v2306, 0.0
    %2309 = vadd.xlane.f32.xlu0 %v2308
    %v2310 = vpop.xlane.xlu0 %2309
    %v2311 = vsel %vm757, %v2307, 0.0
    %2312 = vadd.xlane.f32.xlu0 %v2311
    %v2313 = vpop.xlane.xlu0 %2312
    %v2314 = vmul.f32 %v2310, %v761
    %v2315 = vmul.f32 %v2313, %v761
    %v2316 = vsub.f32 %v2306, %v2314
    %v2317 = vsub.f32 %v2307, %v2315
    %v2318 = vmul.f32 %v2316, %v2316
    %v2319 = vmul.f32 %v2317, %v2317
    %v2320 = vsel %vm753, %v2318, 0.0
    %2321 = vadd.xlane.f32.xlu0 %v2320
    %v2322 = vpop.xlane.xlu0 %2321
    %v2323 = vsel %vm757, %v2319, 0.0
    %2324 = vadd.xlane.f32.xlu0 %v2323
    %v2325 = vpop.xlane.xlu0 %2324
    %v2326 = vmul.f32 %v2322, %v761
    %v2327 = vmul.f32 %v2325, %v761
    %v2328 = vadd.f32 %v2326, 1e-12
    %v2329 = vadd.f32 %v2327, 1e-12
    %v2330 = vrsqrt.pop %v2328
    %v2331 = vrsqrt.pop %v2329
    %v2332 = vmul.f32 %v2316, %v2330
    %v2333 = vmul.f32 %v2317, %v2331
    %v2334 = vlaneseq
    %v2335 = vshrl.u32 %v2334, 7
    %v2336 = vsub.s32 2, %v2335
    %v2337 = vrot.slane %v752, %v2336
    %v2338 = vmul.f32 %v2332, %v2337
    %v2339 = vmul.f32 %v2333, %v2337
    %v2340 = vlaneseq
    %v2341 = vshrl.u32 %v2340, 7
    %v2342 = vsub.s32 3, %v2341
    %v2343 = vrot.slane %v752, %v2342
    %v2344 = vadd.f32 %v2338, %v2343
    %v2345 = vadd.f32 %v2339, %v2343
    %v2346 = vld [vmem:[%s7] sm:$0xf]
    %v2347 = vld [vmem:[%s7 + $0x4] sm:$0xf]
    %v2348 = vld [vmem:[%s7 + $0x8] sm:$0xf]
    %v2349 = vld [vmem:[%s7 + $0xc] sm:$0xf]
    %v2350 = vpack.c.bf16 %v2345, %v2344
    %v2351 = vld [vmem:[%s8] sm:$0x1]
    %v2353 = vlaneseq
    %v2354 = vshrl.u32 %v2353, 7
    %v2355 = vsub.s32 0, %v2354
    %v2356 = vrot.slane %v2351, %v2355
    %v2362 = vunpack.c.l.b16 %v2346
    %v2363 = vunpack.c.l.b16 %v2347
    %v2364 = vunpack.c.l.b16 %v2348
    %v2365 = vunpack.c.l.b16 %v2349
    %v2366 = vpack.c.b16 %v2363, %v2362
    %v2367 = vpack.c.b16 %v2365, %v2364
    %v2371 = vsel %vm753, %v2350, 0
    %2373 = vmatprep.subr.bf16.mxu0 0
    %2374 = vmatpush1.bf16.msra.mxu0 %v2366
    %2375 = vmatprep.subr.bf16.mxu0 0
    %2376 = vmatpush1.bf16.msra.mxu0 %v2367
    %2377 = vmatprep.subr.bf16.mxu0 0
    %2378 = vmatpush1.bf16.msra.mxu0 0
    %2379 = vmatprep.subr.bf16.mxu0 0
    %2380 = vmatpush1.bf16.msra.mxu0 0
    %2381 = vmatprep.subr.bf16.mxu0 0
    %2382 = vmatpush1.bf16.msra.mxu0 0
    %2383 = vmatprep.subr.bf16.mxu0 0
    %2384 = vmatpush1.bf16.msra.mxu0 0
    %2385 = vmatprep.subr.bf16.mxu0 0
    %2386 = vmatpush1.bf16.msra.mxu0 0
    %2387 = vmatprep.subr.bf16.mxu0 0
    %2388 = vmatpush1.bf16.msra.mxu0 0
    %2389 = vmatprep.subr.bf16.mxu0 0
    %2390 = vmatpush1.bf16.msra.mxu0 0
    %2391 = vmatprep.subr.bf16.mxu0 0
    %2392 = vmatpush1.bf16.msra.mxu0 0
    %2393 = vmatprep.subr.bf16.mxu0 0
    %2394 = vmatpush1.bf16.msra.mxu0 0
    %2395 = vmatprep.subr.bf16.mxu0 0
    %2396 = vmatpush1.bf16.msra.mxu0 0
    %2397 = vmatprep.subr.bf16.mxu0 0
    %2398 = vmatpush1.bf16.msra.mxu0 0
    %2399 = vmatprep.subr.bf16.mxu0 0
    %2400 = vmatpush1.bf16.msra.mxu0 0
    %2401 = vmatprep.subr.bf16.mxu0 0
    %2402 = vmatpush1.bf16.msra.mxu0 0
    %2403 = vmatprep.subr.bf16.mxu0 0
    %2404 = vmatpush1.bf16.msra.mxu0 0
    %2405 = vmatprep.mubr.bf16.mxu0 0
    %2406 = vmatmul.mubr.bf16.gmra.mrb[0].mxu0 %v2371
    %v2407 = vpop.f32.mrb[0].mxu0
    %v2408 = vadd.f32 %v2356, %v2407
    %v2409 = vpop.f32.mrb[0].mxu0
    %v2410 = vpop.f32.mrb[0].mxu0
    %v2411 = vadd.f32 %v2356, %v2410
    %v2412 = vpop.f32.mrb[0].mxu0
    %2413 = vdwg.mxu0
    %v2414 = vmul.f32 %v2408, %v2408
    %v2415 = vmul.f32 %v2411, %v2411
    %v2416 = vmul.f32 %v2408, %v2414
    %v2417 = vmul.f32 %v2411, %v2415
    %v2418 = vmul.f32 %v2416, 0.044715
    %v2419 = vmul.f32 %v2417, 0.044715
    %v2420 = vadd.f32 %v2408, %v2418
    %v2421 = vadd.f32 %v2411, %v2419
    %v2422 = vmul.f32 %v2420, 0.7978846
    %v2423 = vmul.f32 %v2421, 0.7978846
    %v2424 = vtanh.pop %v2422
    %v2425 = vtanh.pop %v2423
    %v2426 = vadd.f32 %v2424, 1.0
    %v2427 = vadd.f32 %v2425, 1.0
    %v2428 = vmul.f32 %v2426, 0.5
    %v2429 = vmul.f32 %v2427, 0.5
    %v2430 = vmul.f32 %v2408, %v2428
    %v2431 = vmul.f32 %v2411, %v2429
    %v2432 = vld [vmem:[%s9] sm:$0xf]
    %v2433 = vld [vmem:[%s9 + $0x4] sm:$0xf]
    %v2434 = vld [vmem:[%s9 + $0x8] sm:$0xf]
    %v2435 = vld [vmem:[%s9 + $0xc] sm:$0xf]
    %v2436 = vld [vmem:[%s9 + $0x10] sm:$0xf]
    %v2437 = vld [vmem:[%s9 + $0x14] sm:$0xf]
    %v2438 = vld [vmem:[%s9 + $0x18] sm:$0xf]
    %v2439 = vld [vmem:[%s9 + $0x1c] sm:$0xf]
    %v2440 = vld [vmem:[%s9 + $0x20] sm:$0xf]
    %v2441 = vld [vmem:[%s9 + $0x24] sm:$0xf]
    %v2442 = vld [vmem:[%s9 + $0x28] sm:$0xf]
    %v2443 = vld [vmem:[%s9 + $0x2c] sm:$0xf]
    %v2444 = vld [vmem:[%s9 + $0x30] sm:$0xf]
    %v2445 = vld [vmem:[%s9 + $0x34] sm:$0xf]
    %v2446 = vld [vmem:[%s9 + $0x38] sm:$0xf]
    %v2447 = vld [vmem:[%s9 + $0x3c] sm:$0xf]
    %v2448 = vpack.c.bf16 %v2431, %v2430
    %v2465 = vunpack.c.l.b16 %v2432
    %v2466 = vunpack.c.l.b16 %v2433
    %v2467 = vunpack.c.l.b16 %v2434
    %v2468 = vunpack.c.l.b16 %v2435
    %v2469 = vunpack.c.l.b16 %v2436
    %v2470 = vunpack.c.l.b16 %v2437
    %v2471 = vunpack.c.l.b16 %v2438
    %v2472 = vunpack.c.l.b16 %v2439
    %v2473 = vunpack.c.l.b16 %v2440
    %v2474 = vunpack.c.l.b16 %v2441
    %v2475 = vunpack.c.l.b16 %v2442
    %v2476 = vunpack.c.l.b16 %v2443
    %v2477 = vunpack.c.l.b16 %v2444
    %v2478 = vunpack.c.l.b16 %v2445
    %v2479 = vunpack.c.l.b16 %v2446
    %v2480 = vunpack.c.l.b16 %v2447
    %v2481 = vpack.c.b16 %v2466, %v2465
    %v2482 = vpack.c.b16 %v2468, %v2467
    %v2483 = vpack.c.b16 %v2470, %v2469
    %v2484 = vpack.c.b16 %v2472, %v2471
    %v2485 = vpack.c.b16 %v2474, %v2473
    %v2486 = vpack.c.b16 %v2476, %v2475
    %v2487 = vpack.c.b16 %v2478, %v2477
    %v2488 = vpack.c.b16 %v2480, %v2479
    %2497 = vmatprep.subr.bf16.mxu0 0
    %2498 = vmatpush1.bf16.msra.mxu0 %v2481
    %2499 = vmatprep.subr.bf16.mxu0 0
    %2500 = vmatpush1.bf16.msra.mxu0 %v2482
    %2501 = vmatprep.subr.bf16.mxu0 0
    %2502 = vmatpush1.bf16.msra.mxu0 %v2483
    %2503 = vmatprep.subr.bf16.mxu0 0
    %2504 = vmatpush1.bf16.msra.mxu0 %v2484
    %2505 = vmatprep.subr.bf16.mxu0 0
    %2506 = vmatpush1.bf16.msra.mxu0 %v2485
    %2507 = vmatprep.subr.bf16.mxu0 0
    %2508 = vmatpush1.bf16.msra.mxu0 %v2486
    %2509 = vmatprep.subr.bf16.mxu0 0
    %2510 = vmatpush1.bf16.msra.mxu0 %v2487
    %2511 = vmatprep.subr.bf16.mxu0 0
    %2512 = vmatpush1.bf16.msra.mxu0 %v2488
    %2513 = vmatprep.subr.bf16.mxu0 0
    %2514 = vmatpush1.bf16.msra.mxu0 0
    %2515 = vmatprep.subr.bf16.mxu0 0
    %2516 = vmatpush1.bf16.msra.mxu0 0
    %2517 = vmatprep.subr.bf16.mxu0 0
    %2518 = vmatpush1.bf16.msra.mxu0 0
    %2519 = vmatprep.subr.bf16.mxu0 0
    %2520 = vmatpush1.bf16.msra.mxu0 0
    %2521 = vmatprep.subr.bf16.mxu0 0
    %2522 = vmatpush1.bf16.msra.mxu0 0
    %2523 = vmatprep.subr.bf16.mxu0 0
    %2524 = vmatpush1.bf16.msra.mxu0 0
    %2525 = vmatprep.subr.bf16.mxu0 0
    %2526 = vmatpush1.bf16.msra.mxu0 0
    %2527 = vmatprep.subr.bf16.mxu0 0
    %2528 = vmatpush1.bf16.msra.mxu0 0
    %2529 = vmatprep.mubr.bf16.mxu0 0
    %2530 = vmatmul.mubr.bf16.gmra.mrb[0].mxu0 %v2448
    %v2531 = vpop.f32.mrb[0].mxu0
    %v2532 = vadd.f32 0.0, %v2531
    %v2533 = vpop.f32.mrb[0].mxu0
    %v2534 = vpop.f32.mrb[0].mxu0
    %v2535 = vadd.f32 0.0, %v2534
    %v2536 = vpop.f32.mrb[0].mxu0
    %2537 = vdwg.mxu0
    %v2538 = vadd.f32 %v2306, %v2532
    %v2539 = vadd.f32 %v2307, %v2535
    %v2540 = vlaneseq
    %v2541 = vshrl.u32 %v2540, 7
    %v2542 = vsub.s32 5, %v2541
    %v2543 = vrot.slane %v752, %v2542
    %v2544 = vadd.f32 %v2538, %v2543
    %v2545 = vadd.f32 %v2539, %v2543
    %s2546 = scalar_lea.vmem %s10, 8
    %v2547 = vld [vmem:[%s2546] sm:$0x3f]
    %v2548 = vsel %vm753, %v2544, 0.0
    %2549 = vadd.xlane.f32.xlu0 %v2548
    %v2550 = vpop.xlane.xlu0 %2549
    %v2551 = vsel %vm757, %v2545, 0.0
    %2552 = vadd.xlane.f32.xlu0 %v2551
    %v2553 = vpop.xlane.xlu0 %2552
    %v2554 = vmul.f32 %v2550, %v761
    %v2555 = vmul.f32 %v2553, %v761
    %v2556 = vsub.f32 %v2544, %v2554
    %v2557 = vsub.f32 %v2545, %v2555
    %v2558 = vmul.f32 %v2556, %v2556
    %v2559 = vmul.f32 %v2557, %v2557
    %v2560 = vsel %vm753, %v2558, 0.0
    %2561 = vadd.xlane.f32.xlu0 %v2560
    %v2562 = vpop.xlane.xlu0 %2561
    %v2563 = vsel %vm757, %v2559, 0.0
    %2564 = vadd.xlane.f32.xlu0 %v2563
    %v2565 = vpop.xlane.xlu0 %2564
    %v2566 = vmul.f32 %v2562, %v761
    %v2567 = vmul.f32 %v2565, %v761
    %v2568 = vadd.f32 %v2566, 1e-12
    %v2569 = vadd.f32 %v2567, 1e-12
    %v2570 = vrsqrt.pop %v2568
    %v2571 = vrsqrt.pop %v2569
    %v2572 = vmul.f32 %v2556, %v2570
    %v2573 = vmul.f32 %v2557, %v2571
    %v2574 = vlaneseq
    %v2575 = vshrl.u32 %v2574, 7
    %v2576 = vsub.s32 0, %v2575
    %v2577 = vrot.slane %v2547, %v2576
    %v2578 = vmul.f32 %v2572, %v2577
    %v2579 = vmul.f32 %v2573, %v2577
    %v2580 = vlaneseq
    %v2581 = vshrl.u32 %v2580, 7
    %v2582 = vsub.s32 1, %v2581
    %v2583 = vrot.slane %v2547, %v2582
    %v2584 = vadd.f32 %v2578, %v2583
    %v2585 = vadd.f32 %v2579, %v2583
    %s2586 = scalar_lea.vmem %s4, 16
    %v2587 = vld [vmem:[%s2586] sm:$0xf]
    %v2588 = vld [vmem:[%s2586 + $0x4] sm:$0xf]
    %v2589 = vld [vmem:[%s2586 + $0x8] sm:$0xf]
    %v2590 = vld [vmem:[%s2586 + $0xc] sm:$0xf]
    %v2591 = vpack.c.bf16 %v2585, %v2584
    %s2592 = scalar_lea.vmem %s5, 1
    %v2593 = vld [vmem:[%s2592] sm:$0x1]
    %v2595 = vlaneseq
    %v2596 = vshrl.u32 %v2595, 7
    %v2597 = vsub.s32 0, %v2596
    %v2598 = vrot.slane %v2593, %v2597
    %v2604 = vunpack.c.l.b16 %v2587
    %v2605 = vunpack.c.l.b16 %v2588
    %v2606 = vunpack.c.l.b16 %v2589
    %v2607 = vunpack.c.l.b16 %v2590
    %v2608 = vpack.c.b16 %v2605, %v2604
    %v2609 = vpack.c.b16 %v2607, %v2606
    %v2613 = vsel %vm753, %v2591, 0
    %2615 = vmatprep.subr.bf16.mxu0 0
    %2616 = vmatpush1.bf16.msra.mxu0 %v2608
    %2617 = vmatprep.subr.bf16.mxu0 0
    %2618 = vmatpush1.bf16.msra.mxu0 %v2609
    %2619 = vmatprep.subr.bf16.mxu0 0
    %2620 = vmatpush1.bf16.msra.mxu0 0
    %2621 = vmatprep.subr.bf16.mxu0 0
    %2622 = vmatpush1.bf16.msra.mxu0 0
    %2623 = vmatprep.subr.bf16.mxu0 0
    %2624 = vmatpush1.bf16.msra.mxu0 0
    %2625 = vmatprep.subr.bf16.mxu0 0
    %2626 = vmatpush1.bf16.msra.mxu0 0
    %2627 = vmatprep.subr.bf16.mxu0 0
    %2628 = vmatpush1.bf16.msra.mxu0 0
    %2629 = vmatprep.subr.bf16.mxu0 0
    %2630 = vmatpush1.bf16.msra.mxu0 0
    %2631 = vmatprep.subr.bf16.mxu0 0
    %2632 = vmatpush1.bf16.msra.mxu0 0
    %2633 = vmatprep.subr.bf16.mxu0 0
    %2634 = vmatpush1.bf16.msra.mxu0 0
    %2635 = vmatprep.subr.bf16.mxu0 0
    %2636 = vmatpush1.bf16.msra.mxu0 0
    %2637 = vmatprep.subr.bf16.mxu0 0
    %2638 = vmatpush1.bf16.msra.mxu0 0
    %2639 = vmatprep.subr.bf16.mxu0 0
    %2640 = vmatpush1.bf16.msra.mxu0 0
    %2641 = vmatprep.subr.bf16.mxu0 0
    %2642 = vmatpush1.bf16.msra.mxu0 0
    %2643 = vmatprep.subr.bf16.mxu0 0
    %2644 = vmatpush1.bf16.msra.mxu0 0
    %2645 = vmatprep.subr.bf16.mxu0 0
    %2646 = vmatpush1.bf16.msra.mxu0 0
    %2647 = vmatprep.mubr.bf16.mxu0 0
    %2648 = vmatmul.mubr.bf16.gmra.mrb[0].mxu0 %v2613
    %v2649 = vpop.f32.mrb[0].mxu0
    %v2650 = vadd.f32 %v2598, %v2649
    %v2651 = vpop.f32.mrb[0].mxu0
    %v2652 = vpop.f32.mrb[0].mxu0
    %v2653 = vadd.f32 %v2598, %v2652
    %v2654 = vpop.f32.mrb[0].mxu0
    %2655 = vdwg.mxu0
    %2657 = vrot.lane.b32.xlu0 %v2650, 96
    %v2658 = vpop.permute.xlu0 %2657
    %v2659 = vsel %vm865, %v2650, 0
    %v2661 = vsel %vm865, %v2658, 0
    %2663 = vmatprep.subr.mxu0 0.0
    %2664 = vmatpush1.xpose.msra.mxu0 %v2661
    %2665 = vmatprep.subr.mxu0 0.0
    %2666 = vmatpush1.xpose.msra.mxu0 0.0
    %2667 = vmatprep.subr.mxu0 0.0
    %2668 = vmatpush1.xpose.msra.mxu0 0.0
    %2669 = vmatprep.subr.mxu0 0.0
    %2670 = vmatpush1.xpose.msra.mxu0 0.0
    %2671 = vmatprep.subr.mxu0 0.0
    %2672 = vmatpush1.xpose.msra.mxu0 0.0
    %2673 = vmatprep.subr.mxu0 0.0
    %2674 = vmatpush1.xpose.msra.mxu0 0.0
    %2675 = vmatprep.subr.mxu0 0.0
    %2676 = vmatpush1.xpose.msra.mxu0 0.0
    %2677 = vmatprep.subr.mxu0 0.0
    %2678 = vmatpush1.xpose.msra.mxu0 0.0
    %2679 = vmatprep.subr.mxu0 0.0
    %2680 = vmatpush1.xpose.msra.mxu0 0.0
    %2681 = vmatprep.subr.mxu0 0.0
    %2682 = vmatpush1.xpose.msra.mxu0 0.0
    %2683 = vmatprep.subr.mxu0 0.0
    %2684 = vmatpush1.xpose.msra.mxu0 0.0
    %2685 = vmatprep.subr.mxu0 0.0
    %2686 = vmatpush1.xpose.msra.mxu0 0.0
    %2687 = vmatprep.subr.mxu0 0.0
    %2688 = vmatpush1.xpose.msra.mxu0 0.0
    %2689 = vmatprep.subr.mxu0 0.0
    %2690 = vmatpush1.xpose.msra.mxu0 0.0
    %2691 = vmatprep.subr.mxu0 0.0
    %2692 = vmatpush1.xpose.msra.mxu0 0.0
    %2693 = vmatprep.subr.mxu0 0.0
    %2694 = vmatpush1.xpose.msra.mxu0 0.0
    %2695 = vmatprep.subr.mxu0 0.0
    %2696 = vmatpush1.xpose.msra.mxu0 0.0
    %2697 = vmatprep.subr.mxu0 0.0
    %2698 = vmatpush1.xpose.msra.mxu0 0.0
    %2699 = vmatprep.subr.mxu0 0.0
    %2700 = vmatpush1.xpose.msra.mxu0 0.0
    %2701 = vmatprep.subr.mxu0 0.0
    %2702 = vmatpush1.xpose.msra.mxu0 0.0
    %2703 = vmatprep.subr.mxu0 0.0
    %2704 = vmatpush1.xpose.msra.mxu0 0.0
    %2705 = vmatprep.subr.mxu0 0.0
    %2706 = vmatpush1.xpose.msra.mxu0 0.0
    %2707 = vmatprep.subr.mxu0 0.0
    %2708 = vmatpush1.xpose.msra.mxu0 0.0
    %2709 = vmatprep.subr.mxu0 0.0
    %2710 = vmatpush1.xpose.msra.mxu0 0.0
    %2711 = vmatprep.subr.mxu0 0.0
    %2712 = vmatpush1.xpose.msra.mxu0 0.0
    %2713 = vmatprep.subr.mxu0 0.0
    %2714 = vmatpush1.xpose.msra.mxu0 0.0
    %2715 = vmatprep.subr.mxu0 0.0
    %2716 = vmatpush1.xpose.msra.mxu0 0.0
    %2717 = vmatprep.subr.mxu0 0.0
    %2718 = vmatpush1.xpose.msra.mxu0 0.0
    %2719 = vmatprep.subr.mxu0 0.0
    %2720 = vmatpush1.xpose.msra.mxu0 0.0
    %2721 = vmatprep.subr.mxu0 0.0
    %2722 = vmatpush1.xpose.msra.mxu0 0.0
    %2723 = vmatprep.subr.mxu0 0.0
    %2724 = vmatpush1.xpose.msra.mxu0 0.0
    %2725 = vmatprep.subr.mxu0 0.0
    %2726 = vmatpush1.xpose.msra.mxu0 0.0
    %2727 = vmatprep.mubr.f32.mxu0 0.0
    %2728 = vmatmul.mubr.f32.gmra.mrb[0].mxu0 %v2659
    %v2729 = vpop.f32.mrb[0].mxu0
    %v2730 = vadd.f32 0.0, %v2729
    %v2731 = vpop.f32.mrb[0].mxu0
    %2732 = vdwg.mxu0
    %v2733 = vmul.f32 %v2730, 0.35355338
    %v2734 = vsel %vm941, %v2733, -inf
    %2735 = vmax.xlane.f32.xlu0 %v2734
    %v2736 = vpop.xlane.xlu0 %2735
    %v2737 = vsub.f32 %v2733, %v2736
    %v2738 = vmul.f32 %v2737, 1.442695
    %v2739 = vpow.pop %v2738
    %v2740 = vsel %vm941, %v2739, 0.0
    %2741 = vadd.xlane.f32.xlu0 %v2740
    %v2742 = vpop.xlane.xlu0 %2741
    %v2743 = vrcp.pop %v2742
    %v2744 = vmul.f32 %v2739, %v2743
    %2745 = vrot.lane.b32.xlu0 %v2650, 64
    %v2746 = vpop.permute.xlu0 %2745
    %v2748 = vsel %vm955, %v2744, 0
    %v2750 = vsel %vm750, %v2746, 0
    %2752 = vmatprep.subr.mxu0 0.0
    %2753 = vmatpush1.msra.mxu0 %v2750
    %2754 = vmatprep.subr.mxu0 0.0
    %2755 = vmatpush1.msra.mxu0 0.0
    %2756 = vmatprep.subr.mxu0 0.0
    %2757 = vmatpush1.msra.mxu0 0.0
    %2758 = vmatprep.subr.mxu0 0.0
    %2759 = vmatpush1.msra.mxu0 0.0
    %2760 = vmatprep.subr.mxu0 0.0
    %2761 = vmatpush1.msra.mxu0 0.0
    %2762 = vmatprep.subr.mxu0 0.0
    %2763 = vmatpush1.msra.mxu0 0.0
    %2764 = vmatprep.subr.mxu0 0.0
    %2765 = vmatpush1.msra.mxu0 0.0
    %2766 = vmatprep.subr.mxu0 0.0
    %2767 = vmatpush1.msra.mxu0 0.0
    %2768 = vmatprep.subr.mxu0 0.0
    %2769 = vmatpush1.msra.mxu0 0.0
    %2770 = vmatprep.subr.mxu0 0.0
    %2771 = vmatpush1.msra.mxu0 0.0
    %2772 = vmatprep.subr.mxu0 0.0
    %2773 = vmatpush1.msra.mxu0 0.0
    %2774 = vmatprep.subr.mxu0 0.0
    %2775 = vmatpush1.msra.mxu0 0.0
    %2776 = vmatprep.subr.mxu0 0.0
    %2777 = vmatpush1.msra.mxu0 0.0
    %2778 = vmatprep.subr.mxu0 0.0
    %2779 = vmatpush1.msra.mxu0 0.0
    %2780 = vmatprep.subr.mxu0 0.0
    %2781 = vmatpush1.msra.mxu0 0.0
    %2782 = vmatprep.subr.mxu0 0.0
    %2783 = vmatpush1.msra.mxu0 0.0
    %2784 = vmatprep.subr.mxu0 0.0
    %2785 = vmatpush1.msra.mxu0 0.0
    %2786 = vmatprep.subr.mxu0 0.0
    %2787 = vmatpush1.msra.mxu0 0.0
    %2788 = vmatprep.subr.mxu0 0.0
    %2789 = vmatpush1.msra.mxu0 0.0
    %2790 = vmatprep.subr.mxu0 0.0
    %2791 = vmatpush1.msra.mxu0 0.0
    %2792 = vmatprep.subr.mxu0 0.0
    %2793 = vmatpush1.msra.mxu0 0.0
    %2794 = vmatprep.subr.mxu0 0.0
    %2795 = vmatpush1.msra.mxu0 0.0
    %2796 = vmatprep.subr.mxu0 0.0
    %2797 = vmatpush1.msra.mxu0 0.0
    %2798 = vmatprep.subr.mxu0 0.0
    %2799 = vmatpush1.msra.mxu0 0.0
    %2800 = vmatprep.subr.mxu0 0.0
    %2801 = vmatpush1.msra.mxu0 0.0
    %2802 = vmatprep.subr.mxu0 0.0
    %2803 = vmatpush1.msra.mxu0 0.0
    %2804 = vmatprep.subr.mxu0 0.0
    %2805 = vmatpush1.msra.mxu0 0.0
    %2806 = vmatprep.subr.mxu0 0.0
    %2807 = vmatpush1.msra.mxu0 0.0
    %2808 = vmatprep.subr.mxu0 0.0
    %2809 = vmatpush1.msra.mxu0 0.0
    %2810 = vmatprep.subr.mxu0 0.0
    %2811 = vmatpush1.msra.mxu0 0.0
    %2812 = vmatprep.subr.mxu0 0.0
    %2813 = vmatpush1.msra.mxu0 0.0
    %2814 = vmatprep.subr.mxu0 0.0
    %2815 = vmatpush1.msra.mxu0 0.0
    %2816 = vmatprep.mubr.f32.mxu0 0.0
    %2817 = vmatmul.mubr.f32.gmra.mrb[0].mxu0 %v2748
    %v2818 = vpop.f32.mrb[0].mxu0
    %v2819 = vadd.f32 0.0, %v2818
    %v2820 = vpop.f32.mrb[0].mxu0
    %2821 = vdwg.mxu0
    %2822 = vrot.lane.b32.xlu0 %v2650, 120
    %v2823 = vpop.permute.xlu0 %2822
    %2824 = vrot.lane.b32.xlu0 %v2650, 88
    %v2825 = vpop.permute.xlu0 %2824
    %v2826 = vsel %vm865, %v2823, 0
    %v2828 = vsel %vm865, %v2825, 0
    %2830 = vmatprep.subr.mxu0 0.0
    %2831 = vmatpush1.xpose.msra.mxu0 %v2828
    %2832 = vmatprep.subr.mxu0 0.0
    %2833 = vmatpush1.xpose.msra.mxu0 0.0
    %2834 = vmatprep.subr.mxu0 0.0
    %2835 = vmatpush1.xpose.msra.mxu0 0.0
    %2836 = vmatprep.subr.mxu0 0.0
    %2837 = vmatpush1.xpose.msra.mxu0 0.0
    %2838 = vmatprep.subr.mxu0 0.0
    %2839 = vmatpush1.xpose.msra.mxu0 0.0
    %2840 = vmatprep.subr.mxu0 0.0
    %2841 = vmatpush1.xpose.msra.mxu0 0.0
    %2842 = vmatprep.subr.mxu0 0.0
    %2843 = vmatpush1.xpose.msra.mxu0 0.0
    %2844 = vmatprep.subr.mxu0 0.0
    %2845 = vmatpush1.xpose.msra.mxu0 0.0
    %2846 = vmatprep.subr.mxu0 0.0
    %2847 = vmatpush1.xpose.msra.mxu0 0.0
    %2848 = vmatprep.subr.mxu0 0.0
    %2849 = vmatpush1.xpose.msra.mxu0 0.0
    %2850 = vmatprep.subr.mxu0 0.0
    %2851 = vmatpush1.xpose.msra.mxu0 0.0
    %2852 = vmatprep.subr.mxu0 0.0
    %2853 = vmatpush1.xpose.msra.mxu0 0.0
    %2854 = vmatprep.subr.mxu0 0.0
    %2855 = vmatpush1.xpose.msra.mxu0 0.0
    %2856 = vmatprep.subr.mxu0 0.0
    %2857 = vmatpush1.xpose.msra.mxu0 0.0
    %2858 = vmatprep.subr.mxu0 0.0
    %2859 = vmatpush1.xpose.msra.mxu0 0.0
    %2860 = vmatprep.subr.mxu0 0.0
    %2861 = vmatpush1.xpose.msra.mxu0 0.0
    %2862 = vmatprep.subr.mxu0 0.0
    %2863 = vmatpush1.xpose.msra.mxu0 0.0
    %2864 = vmatprep.subr.mxu0 0.0
    %2865 = vmatpush1.xpose.msra.mxu0 0.0
    %2866 = vmatprep.subr.mxu0 0.0
    %2867 = vmatpush1.xpose.msra.mxu0 0.0
    %2868 = vmatprep.subr.mxu0 0.0
    %2869 = vmatpush1.xpose.msra.mxu0 0.0
    %2870 = vmatprep.subr.mxu0 0.0
    %2871 = vmatpush1.xpose.msra.mxu0 0.0
    %2872 = vmatprep.subr.mxu0 0.0
    %2873 = vmatpush1.xpose.msra.mxu0 0.0
    %2874 = vmatprep.subr.mxu0 0.0
    %2875 = vmatpush1.xpose.msra.mxu0 0.0
    %2876 = vmatprep.subr.mxu0 0.0
    %2877 = vmatpush1.xpose.msra.mxu0 0.0
    %2878 = vmatprep.subr.mxu0 0.0
    %2879 = vmatpush1.xpose.msra.mxu0 0.0
    %2880 = vmatprep.subr.mxu0 0.0
    %2881 = vmatpush1.xpose.msra.mxu0 0.0
    %2882 = vmatprep.subr.mxu0 0.0
    %2883 = vmatpush1.xpose.msra.mxu0 0.0
    %2884 = vmatprep.subr.mxu0 0.0
    %2885 = vmatpush1.xpose.msra.mxu0 0.0
    %2886 = vmatprep.subr.mxu0 0.0
    %2887 = vmatpush1.xpose.msra.mxu0 0.0
    %2888 = vmatprep.subr.mxu0 0.0
    %2889 = vmatpush1.xpose.msra.mxu0 0.0
    %2890 = vmatprep.subr.mxu0 0.0
    %2891 = vmatpush1.xpose.msra.mxu0 0.0
    %2892 = vmatprep.subr.mxu0 0.0
    %2893 = vmatpush1.xpose.msra.mxu0 0.0
    %2894 = vmatprep.mubr.f32.mxu0 0.0
    %2895 = vmatmul.mubr.f32.gmra.mrb[0].mxu0 %v2826
    %v2896 = vpop.f32.mrb[0].mxu0
    %v2897 = vadd.f32 0.0, %v2896
    %v2898 = vpop.f32.mrb[0].mxu0
    %2899 = vdwg.mxu0
    %v2900 = vmul.f32 %v2897, 0.35355338
    %v2901 = vsel %vm941, %v2900, -inf
    %2902 = vmax.xlane.f32.xlu0 %v2901
    %v2903 = vpop.xlane.xlu0 %2902
    %v2904 = vsub.f32 %v2900, %v2903
    %v2905 = vmul.f32 %v2904, 1.442695
    %v2906 = vpow.pop %v2905
    %v2907 = vsel %vm941, %v2906, 0.0
    %2908 = vadd.xlane.f32.xlu0 %v2907
    %v2909 = vpop.xlane.xlu0 %2908
    %v2910 = vrcp.pop %v2909
    %v2911 = vmul.f32 %v2906, %v2910
    %2912 = vrot.lane.b32.xlu0 %v2650, 56
    %v2913 = vpop.permute.xlu0 %2912
    %v2915 = vsel %vm955, %v2911, 0
    %v2917 = vsel %vm750, %v2913, 0
    %2919 = vmatprep.subr.mxu0 0.0
    %2920 = vmatpush1.msra.mxu0 %v2917
    %2921 = vmatprep.subr.mxu0 0.0
    %2922 = vmatpush1.msra.mxu0 0.0
    %2923 = vmatprep.subr.mxu0 0.0
    %2924 = vmatpush1.msra.mxu0 0.0
    %2925 = vmatprep.subr.mxu0 0.0
    %2926 = vmatpush1.msra.mxu0 0.0
    %2927 = vmatprep.subr.mxu0 0.0
    %2928 = vmatpush1.msra.mxu0 0.0
    %2929 = vmatprep.subr.mxu0 0.0
    %2930 = vmatpush1.msra.mxu0 0.0
    %2931 = vmatprep.subr.mxu0 0.0
    %2932 = vmatpush1.msra.mxu0 0.0
    %2933 = vmatprep.subr.mxu0 0.0
    %2934 = vmatpush1.msra.mxu0 0.0
    %2935 = vmatprep.subr.mxu0 0.0
    %2936 = vmatpush1.msra.mxu0 0.0
    %2937 = vmatprep.subr.mxu0 0.0
    %2938 = vmatpush1.msra.mxu0 0.0
    %2939 = vmatprep.subr.mxu0 0.0
    %2940 = vmatpush1.msra.mxu0 0.0
    %2941 = vmatprep.subr.mxu0 0.0
    %2942 = vmatpush1.msra.mxu0 0.0
    %2943 = vmatprep.subr.mxu0 0.0
    %2944 = vmatpush1.msra.mxu0 0.0
    %2945 = vmatprep.subr.mxu0 0.0
    %2946 = vmatpush1.msra.mxu0 0.0
    %2947 = vmatprep.subr.mxu0 0.0
    %2948 = vmatpush1.msra.mxu0 0.0
    %2949 = vmatprep.subr.mxu0 0.0
    %2950 = vmatpush1.msra.mxu0 0.0
    %2951 = vmatprep.subr.mxu0 0.0
    %2952 = vmatpush1.msra.mxu0 0.0
    %2953 = vmatprep.subr.mxu0 0.0
    %2954 = vmatpush1.msra.mxu0 0.0
    %2955 = vmatprep.subr.mxu0 0.0
    %2956 = vmatpush1.msra.mxu0 0.0
    %2957 = vmatprep.subr.mxu0 0.0
    %2958 = vmatpush1.msra.mxu0 0.0
    %2959 = vmatprep.subr.mxu0 0.0
    %2960 = vmatpush1.msra.mxu0 0.0
    %2961 = vmatprep.subr.mxu0 0.0
    %2962 = vmatpush1.msra.mxu0 0.0
    %2963 = vmatprep.subr.mxu0 0.0
    %2964 = vmatpush1.msra.mxu0 0.0
    %2965 = vmatprep.subr.mxu0 0.0
    %2966 = vmatpush1.msra.mxu0 0.0
    %2967 = vmatprep.subr.mxu0 0.0
    %2968 = vmatpush1.msra.mxu0 0.0
    %2969 = vmatprep.subr.mxu0 0.0
    %2970 = vmatpush1.msra.mxu0 0.0
    %2971 = vmatprep.subr.mxu0 0.0
    %2972 = vmatpush1.msra.mxu0 0.0
    %2973 = vmatprep.subr.mxu0 0.0
    %2974 = vmatpush1.msra.mxu0 0.0
    %2975 = vmatprep.subr.mxu0 0.0
    %2976 = vmatpush1.msra.mxu0 0.0
    %2977 = vmatprep.subr.mxu0 0.0
    %2978 = vmatpush1.msra.mxu0 0.0
    %2979 = vmatprep.subr.mxu0 0.0
    %2980 = vmatpush1.msra.mxu0 0.0
    %2981 = vmatprep.subr.mxu0 0.0
    %2982 = vmatpush1.msra.mxu0 0.0
    %2983 = vmatprep.mubr.f32.mxu0 0.0
    %2984 = vmatmul.mubr.f32.gmra.mrb[0].mxu0 %v2915
    %v2985 = vpop.f32.mrb[0].mxu0
    %v2986 = vadd.f32 0.0, %v2985
    %v2987 = vpop.f32.mrb[0].mxu0
    %2988 = vdwg.mxu0
    %2989 = vrot.lane.b32.xlu0 %v2650, 112
    %v2990 = vpop.permute.xlu0 %2989
    %2991 = vrot.lane.b32.xlu0 %v2650, 80
    %v2992 = vpop.permute.xlu0 %2991
    %v2993 = vsel %vm865, %v2990, 0
    %v2995 = vsel %vm865, %v2992, 0
    %2997 = vmatprep.subr.mxu0 0.0
    %2998 = vmatpush1.xpose.msra.mxu0 %v2995
    %2999 = vmatprep.subr.mxu0 0.0
    %3000 = vmatpush1.xpose.msra.mxu0 0.0
    %3001 = vmatprep.subr.mxu0 0.0
    %3002 = vmatpush1.xpose.msra.mxu0 0.0
    %3003 = vmatprep.subr.mxu0 0.0
    %3004 = vmatpush1.xpose.msra.mxu0 0.0
    %3005 = vmatprep.subr.mxu0 0.0
    %3006 = vmatpush1.xpose.msra.mxu0 0.0
    %3007 = vmatprep.subr.mxu0 0.0
    %3008 = vmatpush1.xpose.msra.mxu0 0.0
    %3009 = vmatprep.subr.mxu0 0.0
    %3010 = vmatpush1.xpose.msra.mxu0 0.0
    %3011 = vmatprep.subr.mxu0 0.0
    %3012 = vmatpush1.xpose.msra.mxu0 0.0
    %3013 = vmatprep.subr.mxu0 0.0
    %3014 = vmatpush1.xpose.msra.mxu0 0.0
    %3015 = vmatprep.subr.mxu0 0.0
    %3016 = vmatpush1.xpose.msra.mxu0 0.0
    %3017 = vmatprep.subr.mxu0 0.0
    %3018 = vmatpush1.xpose.msra.mxu0 0.0
    %3019 = vmatprep.subr.mxu0 0.0
    %3020 = vmatpush1.xpose.msra.mxu0 0.0
    %3021 = vmatprep.subr.mxu0 0.0
    %3022 = vmatpush1.xpose.msra.mxu0 0.0
    %3023 = vmatprep.subr.mxu0 0.0
    %3024 = vmatpush1.xpose.msra.mxu0 0.0
    %3025 = vmatprep.subr.mxu0 0.0
    %3026 = vmatpush1.xpose.msra.mxu0 0.0
    %3027 = vmatprep.subr.mxu0 0.0
    %3028 = vmatpush1.xpose.msra.mxu0 0.0
    %3029 = vmatprep.subr.mxu0 0.0
    %3030 = vmatpush1.xpose.msra.mxu0 0.0
    %3031 = vmatprep.subr.mxu0 0.0
    %3032 = vmatpush1.xpose.msra.mxu0 0.0
    %3033 = vmatprep.subr.mxu0 0.0
    %3034 = vmatpush1.xpose.msra.mxu0 0.0
    %3035 = vmatprep.subr.mxu0 0.0
    %3036 = vmatpush1.xpose.msra.mxu0 0.0
    %3037 = vmatprep.subr.mxu0 0.0
    %3038 = vmatpush1.xpose.msra.mxu0 0.0
    %3039 = vmatprep.subr.mxu0 0.0
    %3040 = vmatpush1.xpose.msra.mxu0 0.0
    %3041 = vmatprep.subr.mxu0 0.0
    %3042 = vmatpush1.xpose.msra.mxu0 0.0
    %3043 = vmatprep.subr.mxu0 0.0
    %3044 = vmatpush1.xpose.msra.mxu0 0.0
    %3045 = vmatprep.subr.mxu0 0.0
    %3046 = vmatpush1.xpose.msra.mxu0 0.0
    %3047 = vmatprep.subr.mxu0 0.0
    %3048 = vmatpush1.xpose.msra.mxu0 0.0
    %3049 = vmatprep.subr.mxu0 0.0
    %3050 = vmatpush1.xpose.msra.mxu0 0.0
    %3051 = vmatprep.subr.mxu0 0.0
    %3052 = vmatpush1.xpose.msra.mxu0 0.0
    %3053 = vmatprep.subr.mxu0 0.0
    %3054 = vmatpush1.xpose.msra.mxu0 0.0
    %3055 = vmatprep.subr.mxu0 0.0
    %3056 = vmatpush1.xpose.msra.mxu0 0.0
    %3057 = vmatprep.subr.mxu0 0.0
    %3058 = vmatpush1.xpose.msra.mxu0 0.0
    %3059 = vmatprep.subr.mxu0 0.0
    %3060 = vmatpush1.xpose.msra.mxu0 0.0
    %3061 = vmatprep.mubr.f32.mxu0 0.0
    %3062 = vmatmul.mubr.f32.gmra.mrb[0].mxu0 %v2993
    %v3063 = vpop.f32.mrb[0].mxu0
    %v3064 = vadd.f32 0.0, %v3063
    %v3065 = vpop.f32.mrb[0].mxu0
    %3066 = vdwg.mxu0
    %v3067 = vmul.f32 %v3064, 0.35355338
    %v3068 = vsel %vm941, %v3067, -inf
    %3069 = vmax.xlane.f32.xlu0 %v3068
    %v3070 = vpop.xlane.xlu0 %3069
    %v3071 = vsub.f32 %v3067, %v3070
    %v3072 = vmul.f32 %v3071, 1.442695
    %v3073 = vpow.pop %v3072
    %v3074 = vsel %vm941, %v3073, 0.0
    %3075 = vadd.xlane.f32.xlu0 %v3074
    %v3076 = vpop.xlane.xlu0 %3075
    %v3077 = vrcp.pop %v3076
    %v3078 = vmul.f32 %v3073, %v3077
    %3079 = vrot.lane.b32.xlu0 %v2650, 48
    %v3080 = vpop.permute.xlu0 %3079
    %v3082 = vsel %vm955, %v3078, 0
    %v3084 = vsel %vm750, %v3080, 0
    %3086 = vmatprep.subr.mxu0 0.0
    %3087 = vmatpush1.msra.mxu0 %v3084
    %3088 = vmatprep.subr.mxu0 0.0
    %3089 = vmatpush1.msra.mxu0 0.0
    %3090 = vmatprep.subr.mxu0 0.0
    %3091 = vmatpush1.msra.mxu0 0.0
    %3092 = vmatprep.subr.mxu0 0.0
    %3093 = vmatpush1.msra.mxu0 0.0
    %3094 = vmatprep.subr.mxu0 0.0
    %3095 = vmatpush1.msra.mxu0 0.0
    %3096 = vmatprep.subr.mxu0 0.0
    %3097 = vmatpush1.msra.mxu0 0.0
    %3098 = vmatprep.subr.mxu0 0.0
    %3099 = vmatpush1.msra.mxu0 0.0
    %3100 = vmatprep.subr.mxu0 0.0
    %3101 = vmatpush1.msra.mxu0 0.0
    %3102 = vmatprep.subr.mxu0 0.0
    %3103 = vmatpush1.msra.mxu0 0.0
    %3104 = vmatprep.subr.mxu0 0.0
    %3105 = vmatpush1.msra.mxu0 0.0
    %3106 = vmatprep.subr.mxu0 0.0
    %3107 = vmatpush1.msra.mxu0 0.0
    %3108 = vmatprep.subr.mxu0 0.0
    %3109 = vmatpush1.msra.mxu0 0.0
    %3110 = vmatprep.subr.mxu0 0.0
    %3111 = vmatpush1.msra.mxu0 0.0
    %3112 = vmatprep.subr.mxu0 0.0
    %3113 = vmatpush1.msra.mxu0 0.0
    %3114 = vmatprep.subr.mxu0 0.0
    %3115 = vmatpush1.msra.mxu0 0.0
    %3116 = vmatprep.subr.mxu0 0.0
    %3117 = vmatpush1.msra.mxu0 0.0
    %3118 = vmatprep.subr.mxu0 0.0
    %3119 = vmatpush1.msra.mxu0 0.0
    %3120 = vmatprep.subr.mxu0 0.0
    %3121 = vmatpush1.msra.mxu0 0.0
    %3122 = vmatprep.subr.mxu0 0.0
    %3123 = vmatpush1.msra.mxu0 0.0
    %3124 = vmatprep.subr.mxu0 0.0
    %3125 = vmatpush1.msra.mxu0 0.0
    %3126 = vmatprep.subr.mxu0 0.0
    %3127 = vmatpush1.msra.mxu0 0.0
    %3128 = vmatprep.subr.mxu0 0.0
    %3129 = vmatpush1.msra.mxu0 0.0
    %3130 = vmatprep.subr.mxu0 0.0
    %3131 = vmatpush1.msra.mxu0 0.0
    %3132 = vmatprep.subr.mxu0 0.0
    %3133 = vmatpush1.msra.mxu0 0.0
    %3134 = vmatprep.subr.mxu0 0.0
    %3135 = vmatpush1.msra.mxu0 0.0
    %3136 = vmatprep.subr.mxu0 0.0
    %3137 = vmatpush1.msra.mxu0 0.0
    %3138 = vmatprep.subr.mxu0 0.0
    %3139 = vmatpush1.msra.mxu0 0.0
    %3140 = vmatprep.subr.mxu0 0.0
    %3141 = vmatpush1.msra.mxu0 0.0
    %3142 = vmatprep.subr.mxu0 0.0
    %3143 = vmatpush1.msra.mxu0 0.0
    %3144 = vmatprep.subr.mxu0 0.0
    %3145 = vmatpush1.msra.mxu0 0.0
    %3146 = vmatprep.subr.mxu0 0.0
    %3147 = vmatpush1.msra.mxu0 0.0
    %3148 = vmatprep.subr.mxu0 0.0
    %3149 = vmatpush1.msra.mxu0 0.0
    %3150 = vmatprep.mubr.f32.mxu0 0.0
    %3151 = vmatmul.mubr.f32.gmra.mrb[0].mxu0 %v3082
    %v3152 = vpop.f32.mrb[0].mxu0
    %v3153 = vadd.f32 0.0, %v3152
    %v3154 = vpop.f32.mrb[0].mxu0
    %3155 = vdwg.mxu0
    %3156 = vrot.lane.b32.xlu0 %v2650, 104
    %v3157 = vpop.permute.xlu0 %3156
    %3158 = vrot.lane.b32.xlu0 %v2650, 72
    %v3159 = vpop.permute.xlu0 %3158
    %v3160 = vsel %vm865, %v3157, 0
    %v3162 = vsel %vm865, %v3159, 0
    %3164 = vmatprep.subr.mxu0 0.0
    %3165 = vmatpush1.xpose.msra.mxu0 %v3162
    %3166 = vmatprep.subr.mxu0 0.0
    %3167 = vmatpush1.xpose.msra.mxu0 0.0
    %3168 = vmatprep.subr.mxu0 0.0
    %3169 = vmatpush1.xpose.msra.mxu0 0.0
    %3170 = vmatprep.subr.mxu0 0.0
    %3171 = vmatpush1.xpose.msra.mxu0 0.0
    %3172 = vmatprep.subr.mxu0 0.0
    %3173 = vmatpush1.xpose.msra.mxu0 0.0
    %3174 = vmatprep.subr.mxu0 0.0
    %3175 = vmatpush1.xpose.msra.mxu0 0.0
    %3176 = vmatprep.subr.mxu0 0.0
    %3177 = vmatpush1.xpose.msra.mxu0 0.0
    %3178 = vmatprep.subr.mxu0 0.0
    %3179 = vmatpush1.xpose.msra.mxu0 0.0
    %3180 = vmatprep.subr.mxu0 0.0
    %3181 = vmatpush1.xpose.msra.mxu0 0.0
    %3182 = vmatprep.subr.mxu0 0.0
    %3183 = vmatpush1.xpose.msra.mxu0 0.0
    %3184 = vmatprep.subr.mxu0 0.0
    %3185 = vmatpush1.xpose.msra.mxu0 0.0
    %3186 = vmatprep.subr.mxu0 0.0
    %3187 = vmatpush1.xpose.msra.mxu0 0.0
    %3188 = vmatprep.subr.mxu0 0.0
    %3189 = vmatpush1.xpose.msra.mxu0 0.0
    %3190 = vmatprep.subr.mxu0 0.0
    %3191 = vmatpush1.xpose.msra.mxu0 0.0
    %3192 = vmatprep.subr.mxu0 0.0
    %3193 = vmatpush1.xpose.msra.mxu0 0.0
    %3194 = vmatprep.subr.mxu0 0.0
    %3195 = vmatpush1.xpose.msra.mxu0 0.0
    %3196 = vmatprep.subr.mxu0 0.0
    %3197 = vmatpush1.xpose.msra.mxu0 0.0
    %3198 = vmatprep.subr.mxu0 0.0
    %3199 = vmatpush1.xpose.msra.mxu0 0.0
    %3200 = vmatprep.subr.mxu0 0.0
    %3201 = vmatpush1.xpose.msra.mxu0 0.0
    %3202 = vmatprep.subr.mxu0 0.0
    %3203 = vmatpush1.xpose.msra.mxu0 0.0
    %3204 = vmatprep.subr.mxu0 0.0
    %3205 = vmatpush1.xpose.msra.mxu0 0.0
    %3206 = vmatprep.subr.mxu0 0.0
    %3207 = vmatpush1.xpose.msra.mxu0 0.0
    %3208 = vmatprep.subr.mxu0 0.0
    %3209 = vmatpush1.xpose.msra.mxu0 0.0
    %3210 = vmatprep.subr.mxu0 0.0
    %3211 = vmatpush1.xpose.msra.mxu0 0.0
    %3212 = vmatprep.subr.mxu0 0.0
    %3213 = vmatpush1.xpose.msra.mxu0 0.0
    %3214 = vmatprep.subr.mxu0 0.0
    %3215 = vmatpush1.xpose.msra.mxu0 0.0
    %3216 = vmatprep.subr.mxu0 0.0
    %3217 = vmatpush1.xpose.msra.mxu0 0.0
    %3218 = vmatprep.subr.mxu0 0.0
    %3219 = vmatpush1.xpose.msra.mxu0 0.0
    %3220 = vmatprep.subr.mxu0 0.0
    %3221 = vmatpush1.xpose.msra.mxu0 0.0
    %3222 = vmatprep.subr.mxu0 0.0
    %3223 = vmatpush1.xpose.msra.mxu0 0.0
    %3224 = vmatprep.subr.mxu0 0.0
    %3225 = vmatpush1.xpose.msra.mxu0 0.0
    %3226 = vmatprep.subr.mxu0 0.0
    %3227 = vmatpush1.xpose.msra.mxu0 0.0
    %3228 = vmatprep.mubr.f32.mxu0 0.0
    %3229 = vmatmul.mubr.f32.gmra.mrb[0].mxu0 %v3160
    %v3230 = vpop.f32.mrb[0].mxu0
    %v3231 = vadd.f32 0.0, %v3230
    %v3232 = vpop.f32.mrb[0].mxu0
    %3233 = vdwg.mxu0
    %v3234 = vmul.f32 %v3231, 0.35355338
    %v3235 = vsel %vm941, %v3234, -inf
    %3236 = vmax.xlane.f32.xlu0 %v3235
    %v3237 = vpop.xlane.xlu0 %3236
    %v3238 = vsub.f32 %v3234, %v3237
    %v3239 = vmul.f32 %v3238, 1.442695
    %v3240 = vpow.pop %v3239
    %v3241 = vsel %vm941, %v3240, 0.0
    %3242 = vadd.xlane.f32.xlu0 %v3241
    %v3243 = vpop.xlane.xlu0 %3242
    %v3244 = vrcp.pop %v3243
    %v3245 = vmul.f32 %v3240, %v3244
    %3246 = vrot.lane.b32.xlu0 %v2650, 40
    %v3247 = vpop.permute.xlu0 %3246
    %v3249 = vsel %vm955, %v3245, 0
    %v3251 = vsel %vm750, %v3247, 0
    %3253 = vmatprep.subr.mxu0 0.0
    %3254 = vmatpush1.msra.mxu0 %v3251
    %3255 = vmatprep.subr.mxu0 0.0
    %3256 = vmatpush1.msra.mxu0 0.0
    %3257 = vmatprep.subr.mxu0 0.0
    %3258 = vmatpush1.msra.mxu0 0.0
    %3259 = vmatprep.subr.mxu0 0.0
    %3260 = vmatpush1.msra.mxu0 0.0
    %3261 = vmatprep.subr.mxu0 0.0
    %3262 = vmatpush1.msra.mxu0 0.0
    %3263 = vmatprep.subr.mxu0 0.0
    %3264 = vmatpush1.msra.mxu0 0.0
    %3265 = vmatprep.subr.mxu0 0.0
    %3266 = vmatpush1.msra.mxu0 0.0
    %3267 = vmatprep.subr.mxu0 0.0
    %3268 = vmatpush1.msra.mxu0 0.0
    %3269 = vmatprep.subr.mxu0 0.0
    %3270 = vmatpush1.msra.mxu0 0.0
    %3271 = vmatprep.subr.mxu0 0.0
    %3272 = vmatpush1.msra.mxu0 0.0
    %3273 = vmatprep.subr.mxu0 0.0
    %3274 = vmatpush1.msra.mxu0 0.0
    %3275 = vmatprep.subr.mxu0 0.0
    %3276 = vmatpush1.msra.mxu0 0.0
    %3277 = vmatprep.subr.mxu0 0.0
    %3278 = vmatpush1.msra.mxu0 0.0
    %3279 = vmatprep.subr.mxu0 0.0
    %3280 = vmatpush1.msra.mxu0 0.0
    %3281 = vmatprep.subr.mxu0 0.0
    %3282 = vmatpush1.msra.mxu0 0.0
    %3283 = vmatprep.subr.mxu0 0.0
    %3284 = vmatpush1.msra.mxu0 0.0
    %3285 = vmatprep.subr.mxu0 0.0
    %3286 = vmatpush1.msra.mxu0 0.0
    %3287 = vmatprep.subr.mxu0 0.0
    %3288 = vmatpush1.msra.mxu0 0.0
    %3289 = vmatprep.subr.mxu0 0.0
    %3290 = vmatpush1.msra.mxu0 0.0
    %3291 = vmatprep.subr.mxu0 0.0
    %3292 = vmatpush1.msra.mxu0 0.0
    %3293 = vmatprep.subr.mxu0 0.0
    %3294 = vmatpush1.msra.mxu0 0.0
    %3295 = vmatprep.subr.mxu0 0.0
    %3296 = vmatpush1.msra.mxu0 0.0
    %3297 = vmatprep.subr.mxu0 0.0
    %3298 = vmatpush1.msra.mxu0 0.0
    %3299 = vmatprep.subr.mxu0 0.0
    %3300 = vmatpush1.msra.mxu0 0.0
    %3301 = vmatprep.subr.mxu0 0.0
    %3302 = vmatpush1.msra.mxu0 0.0
    %3303 = vmatprep.subr.mxu0 0.0
    %3304 = vmatpush1.msra.mxu0 0.0
    %3305 = vmatprep.subr.mxu0 0.0
    %3306 = vmatpush1.msra.mxu0 0.0
    %3307 = vmatprep.subr.mxu0 0.0
    %3308 = vmatpush1.msra.mxu0 0.0
    %3309 = vmatprep.subr.mxu0 0.0
    %3310 = vmatpush1.msra.mxu0 0.0
    %3311 = vmatprep.subr.mxu0 0.0
    %3312 = vmatpush1.msra.mxu0 0.0
    %3313 = vmatprep.subr.mxu0 0.0
    %3314 = vmatpush1.msra.mxu0 0.0
    %3315 = vmatprep.subr.mxu0 0.0
    %3316 = vmatpush1.msra.mxu0 0.0
    %3317 = vmatprep.mubr.f32.mxu0 0.0
    %3318 = vmatmul.mubr.f32.gmra.mrb[0].mxu0 %v3249
    %v3319 = vpop.f32.mrb[0].mxu0
    %v3320 = vadd.f32 0.0, %v3319
    %v3321 = vpop.f32.mrb[0].mxu0
    %3322 = vdwg.mxu0
    %3324 = vrot.lane.b32.xlu0 %v2986, 8
    %v3325 = vpop.permute.xlu0 %3324
    %3328 = vrot.lane.b32.xlu0 %v3153, 16
    %v3329 = vpop.permute.xlu0 %3328
    %3332 = vrot.lane.b32.xlu0 %v3320, 24
    %v3333 = vpop.permute.xlu0 %3332
    %v3335 = vsel %vm865, %v2819, %v3325
    %v3336 = vsel %vm1545, %v3335, %v3329
    %v3337 = vsel %vm1547, %v3336, %v3333
    %v3339 = vrot.slane %v2650, 5
    %v3340 = vrot.slane %v2653, 5
    %v3341 = vsel %vm1550, %v3339, %v3340
    %3342 = vrot.lane.b32.xlu0 %v3341, 96
    %v3343 = vpop.permute.xlu0 %3342
    %v3344 = vsel %vm865, %v3341, 0
    %v3346 = vsel %vm865, %v3343, 0
    %3348 = vmatprep.subr.mxu0 0.0
    %3349 = vmatpush1.xpose.msra.mxu0 %v3346
    %3350 = vmatprep.subr.mxu0 0.0
    %3351 = vmatpush1.xpose.msra.mxu0 0.0
    %3352 = vmatprep.subr.mxu0 0.0
    %3353 = vmatpush1.xpose.msra.mxu0 0.0
    %3354 = vmatprep.subr.mxu0 0.0
    %3355 = vmatpush1.xpose.msra.mxu0 0.0
    %3356 = vmatprep.subr.mxu0 0.0
    %3357 = vmatpush1.xpose.msra.mxu0 0.0
    %3358 = vmatprep.subr.mxu0 0.0
    %3359 = vmatpush1.xpose.msra.mxu0 0.0
    %3360 = vmatprep.subr.mxu0 0.0
    %3361 = vmatpush1.xpose.msra.mxu0 0.0
    %3362 = vmatprep.subr.mxu0 0.0
    %3363 = vmatpush1.xpose.msra.mxu0 0.0
    %3364 = vmatprep.subr.mxu0 0.0
    %3365 = vmatpush1.xpose.msra.mxu0 0.0
    %3366 = vmatprep.subr.mxu0 0.0
    %3367 = vmatpush1.xpose.msra.mxu0 0.0
    %3368 = vmatprep.subr.mxu0 0.0
    %3369 = vmatpush1.xpose.msra.mxu0 0.0
    %3370 = vmatprep.subr.mxu0 0.0
    %3371 = vmatpush1.xpose.msra.mxu0 0.0
    %3372 = vmatprep.subr.mxu0 0.0
    %3373 = vmatpush1.xpose.msra.mxu0 0.0
    %3374 = vmatprep.subr.mxu0 0.0
    %3375 = vmatpush1.xpose.msra.mxu0 0.0
    %3376 = vmatprep.subr.mxu0 0.0
    %3377 = vmatpush1.xpose.msra.mxu0 0.0
    %3378 = vmatprep.subr.mxu0 0.0
    %3379 = vmatpush1.xpose.msra.mxu0 0.0
    %3380 = vmatprep.subr.mxu0 0.0
    %3381 = vmatpush1.xpose.msra.mxu0 0.0
    %3382 = vmatprep.subr.mxu0 0.0
    %3383 = vmatpush1.xpose.msra.mxu0 0.0
    %3384 = vmatprep.subr.mxu0 0.0
    %3385 = vmatpush1.xpose.msra.mxu0 0.0
    %3386 = vmatprep.subr.mxu0 0.0
    %3387 = vmatpush1.xpose.msra.mxu0 0.0
    %3388 = vmatprep.subr.mxu0 0.0
    %3389 = vmatpush1.xpose.msra.mxu0 0.0
    %3390 = vmatprep.subr.mxu0 0.0
    %3391 = vmatpush1.xpose.msra.mxu0 0.0
    %3392 = vmatprep.subr.mxu0 0.0
    %3393 = vmatpush1.xpose.msra.mxu0 0.0
    %3394 = vmatprep.subr.mxu0 0.0
    %3395 = vmatpush1.xpose.msra.mxu0 0.0
    %3396 = vmatprep.subr.mxu0 0.0
    %3397 = vmatpush1.xpose.msra.mxu0 0.0
    %3398 = vmatprep.subr.mxu0 0.0
    %3399 = vmatpush1.xpose.msra.mxu0 0.0
    %3400 = vmatprep.subr.mxu0 0.0
    %3401 = vmatpush1.xpose.msra.mxu0 0.0
    %3402 = vmatprep.subr.mxu0 0.0
    %3403 = vmatpush1.xpose.msra.mxu0 0.0
    %3404 = vmatprep.subr.mxu0 0.0
    %3405 = vmatpush1.xpose.msra.mxu0 0.0
    %3406 = vmatprep.subr.mxu0 0.0
    %3407 = vmatpush1.xpose.msra.mxu0 0.0
    %3408 = vmatprep.subr.mxu0 0.0
    %3409 = vmatpush1.xpose.msra.mxu0 0.0
    %3410 = vmatprep.subr.mxu0 0.0
    %3411 = vmatpush1.xpose.msra.mxu0 0.0
    %3412 = vmatprep.mubr.f32.mxu0 0.0
    %3413 = vmatmul.mubr.f32.gmra.mrb[0].mxu0 %v3344
    %v3414 = vpop.f32.mrb[0].mxu0
    %v3415 = vadd.f32 0.0, %v3414
    %v3416 = vpop.f32.mrb[0].mxu0
    %3417 = vdwg.mxu0
    %v3418 = vmul.f32 %v3415, 0.35355338
    %v3419 = vsel %vm941, %v3418, -inf
    %3420 = vmax.xlane.f32.xlu0 %v3419
    %v3421 = vpop.xlane.xlu0 %3420
    %v3422 = vsub.f32 %v3418, %v3421
    %v3423 = vmul.f32 %v3422, 1.442695
    %v3424 = vpow.pop %v3423
    %v3425 = vsel %vm941, %v3424, 0.0
    %3426 = vadd.xlane.f32.xlu0 %v3425
    %v3427 = vpop.xlane.xlu0 %3426
    %v3428 = vrcp.pop %v3427
    %v3429 = vmul.f32 %v3424, %v3428
    %3430 = vrot.lane.b32.xlu0 %v3341, 64
    %v3431 = vpop.permute.xlu0 %3430
    %v3433 = vsel %vm955, %v3429, 0
    %v3435 = vsel %vm750, %v3431, 0
    %3437 = vmatprep.subr.mxu0 0.0
    %3438 = vmatpush1.msra.mxu0 %v3435
    %3439 = vmatprep.subr.mxu0 0.0
    %3440 = vmatpush1.msra.mxu0 0.0
    %3441 = vmatprep.subr.mxu0 0.0
    %3442 = vmatpush1.msra.mxu0 0.0
    %3443 = vmatprep.subr.mxu0 0.0
    %3444 = vmatpush1.msra.mxu0 0.0
    %3445 = vmatprep.subr.mxu0 0.0
    %3446 = vmatpush1.msra.mxu0 0.0
    %3447 = vmatprep.subr.mxu0 0.0
    %3448 = vmatpush1.msra.mxu0 0.0
    %3449 = vmatprep.subr.mxu0 0.0
    %3450 = vmatpush1.msra.mxu0 0.0
    %3451 = vmatprep.subr.mxu0 0.0
    %3452 = vmatpush1.msra.mxu0 0.0
    %3453 = vmatprep.subr.mxu0 0.0
    %3454 = vmatpush1.msra.mxu0 0.0
    %3455 = vmatprep.subr.mxu0 0.0
    %3456 = vmatpush1.msra.mxu0 0.0
    %3457 = vmatprep.subr.mxu0 0.0
    %3458 = vmatpush1.msra.mxu0 0.0
    %3459 = vmatprep.subr.mxu0 0.0
    %3460 = vmatpush1.msra.mxu0 0.0
    %3461 = vmatprep.subr.mxu0 0.0
    %3462 = vmatpush1.msra.mxu0 0.0
    %3463 = vmatprep.subr.mxu0 0.0
    %3464 = vmatpush1.msra.mxu0 0.0
    %3465 = vmatprep.subr.mxu0 0.0
    %3466 = vmatpush1.msra.mxu0 0.0
    %3467 = vmatprep.subr.mxu0 0.0
    %3468 = vmatpush1.msra.mxu0 0.0
    %3469 = vmatprep.subr.mxu0 0.0
    %3470 = vmatpush1.msra.mxu0 0.0
    %3471 = vmatprep.subr.mxu0 0.0
    %3472 = vmatpush1.msra.mxu0 0.0
    %3473 = vmatprep.subr.mxu0 0.0
    %3474 = vmatpush1.msra.mxu0 0.0
    %3475 = vmatprep.subr.mxu0 0.0
    %3476 = vmatpush1.msra.mxu0 0.0
    %3477 = vmatprep.subr.mxu0 0.0
    %3478 = vmatpush1.msra.mxu0 0.0
    %3479 = vmatprep.subr.mxu0 0.0
    %3480 = vmatpush1.msra.mxu0 0.0
    %3481 = vmatprep.subr.mxu0 0.0
    %3482 = vmatpush1.msra.mxu0 0.0
    %3483 = vmatprep.subr.mxu0 0.0
    %3484 = vmatpush1.msra.mxu0 0.0
    %3485 = vmatprep.subr.mxu0 0.0
    %3486 = vmatpush1.msra.mxu0 0.0
    %3487 = vmatprep.subr.mxu0 0.0
    %3488 = vmatpush1.msra.mxu0 0.0
    %3489 = vmatprep.subr.mxu0 0.0
    %3490 = vmatpush1.msra.mxu0 0.0
    %3491 = vmatprep.subr.mxu0 0.0
    %3492 = vmatpush1.msra.mxu0 0.0
    %3493 = vmatprep.subr.mxu0 0.0
    %3494 = vmatpush1.msra.mxu0 0.0
    %3495 = vmatprep.subr.mxu0 0.0
    %3496 = vmatpush1.msra.mxu0 0.0
    %3497 = vmatprep.subr.mxu0 0.0
    %3498 = vmatpush1.msra.mxu0 0.0
    %3499 = vmatprep.subr.mxu0 0.0
    %3500 = vmatpush1.msra.mxu0 0.0
    %3501 = vmatprep.mubr.f32.mxu0 0.0
    %3502 = vmatmul.mubr.f32.gmra.mrb[0].mxu0 %v3433
    %v3503 = vpop.f32.mrb[0].mxu0
    %v3504 = vadd.f32 0.0, %v3503
    %v3505 = vpop.f32.mrb[0].mxu0
    %3506 = vdwg.mxu0
    %3507 = vrot.lane.b32.xlu0 %v3341, 120
    %v3508 = vpop.permute.xlu0 %3507
    %3509 = vrot.lane.b32.xlu0 %v3341, 88
    %v3510 = vpop.permute.xlu0 %3509
    %v3511 = vsel %vm865, %v3508, 0
    %v3513 = vsel %vm865, %v3510, 0
    %3515 = vmatprep.subr.mxu0 0.0
    %3516 = vmatpush1.xpose.msra.mxu0 %v3513
    %3517 = vmatprep.subr.mxu0 0.0
    %3518 = vmatpush1.xpose.msra.mxu0 0.0
    %3519 = vmatprep.subr.mxu0 0.0
    %3520 = vmatpush1.xpose.msra.mxu0 0.0
    %3521 = vmatprep.subr.mxu0 0.0
    %3522 = vmatpush1.xpose.msra.mxu0 0.0
    %3523 = vmatprep.subr.mxu0 0.0
    %3524 = vmatpush1.xpose.msra.mxu0 0.0
    %3525 = vmatprep.subr.mxu0 0.0
    %3526 = vmatpush1.xpose.msra.mxu0 0.0
    %3527 = vmatprep.subr.mxu0 0.0
    %3528 = vmatpush1.xpose.msra.mxu0 0.0
    %3529 = vmatprep.subr.mxu0 0.0
    %3530 = vmatpush1.xpose.msra.mxu0 0.0
    %3531 = vmatprep.subr.mxu0 0.0
    %3532 = vmatpush1.xpose.msra.mxu0 0.0
    %3533 = vmatprep.subr.mxu0 0.0
    %3534 = vmatpush1.xpose.msra.mxu0 0.0
    %3535 = vmatprep.subr.mxu0 0.0
    %3536 = vmatpush1.xpose.msra.mxu0 0.0
    %3537 = vmatprep.subr.mxu0 0.0
    %3538 = vmatpush1.xpose.msra.mxu0 0.0
    %3539 = vmatprep.subr.mxu0 0.0
    %3540 = vmatpush1.xpose.msra.mxu0 0.0
    %3541 = vmatprep.subr.mxu0 0.0
    %3542 = vmatpush1.xpose.msra.mxu0 0.0
    %3543 = vmatprep.subr.mxu0 0.0
    %3544 = vmatpush1.xpose.msra.mxu0 0.0
    %3545 = vmatprep.subr.mxu0 0.0
    %3546 = vmatpush1.xpose.msra.mxu0 0.0
    %3547 = vmatprep.subr.mxu0 0.0
    %3548 = vmatpush1.xpose.msra.mxu0 0.0
    %3549 = vmatprep.subr.mxu0 0.0
    %3550 = vmatpush1.xpose.msra.mxu0 0.0
    %3551 = vmatprep.subr.mxu0 0.0
    %3552 = vmatpush1.xpose.msra.mxu0 0.0
    %3553 = vmatprep.subr.mxu0 0.0
    %3554 = vmatpush1.xpose.msra.mxu0 0.0
    %3555 = vmatprep.subr.mxu0 0.0
    %3556 = vmatpush1.xpose.msra.mxu0 0.0
    %3557 = vmatprep.subr.mxu0 0.0
    %3558 = vmatpush1.xpose.msra.mxu0 0.0
    %3559 = vmatprep.subr.mxu0 0.0
    %3560 = vmatpush1.xpose.msra.mxu0 0.0
    %3561 = vmatprep.subr.mxu0 0.0
    %3562 = vmatpush1.xpose.msra.mxu0 0.0
    %3563 = vmatprep.subr.mxu0 0.0
    %3564 = vmatpush1.xpose.msra.mxu0 0.0
    %3565 = vmatprep.subr.mxu0 0.0
    %3566 = vmatpush1.xpose.msra.mxu0 0.0
    %3567 = vmatprep.subr.mxu0 0.0
    %3568 = vmatpush1.xpose.msra.mxu0 0.0
    %3569 = vmatprep.subr.mxu0 0.0
    %3570 = vmatpush1.xpose.msra.mxu0 0.0
    %3571 = vmatprep.subr.mxu0 0.0
    %3572 = vmatpush1.xpose.msra.mxu0 0.0
    %3573 = vmatprep.subr.mxu0 0.0
    %3574 = vmatpush1.xpose.msra.mxu0 0.0
    %3575 = vmatprep.subr.mxu0 0.0
    %3576 = vmatpush1.xpose.msra.mxu0 0.0
    %3577 = vmatprep.subr.mxu0 0.0
    %3578 = vmatpush1.xpose.msra.mxu0 0.0
    %3579 = vmatprep.mubr.f32.mxu0 0.0
    %3580 = vmatmul.mubr.f32.gmra.mrb[0].mxu0 %v3511
    %v3581 = vpop.f32.mrb[0].mxu0
    %v3582 = vadd.f32 0.0, %v3581
    %v3583 = vpop.f32.mrb[0].mxu0
    %3584 = vdwg.mxu0
    %v3585 = vmul.f32 %v3582, 0.35355338
    %v3586 = vsel %vm941, %v3585, -inf
    %3587 = vmax.xlane.f32.xlu0 %v3586
    %v3588 = vpop.xlane.xlu0 %3587
    %v3589 = vsub.f32 %v3585, %v3588
    %v3590 = vmul.f32 %v3589, 1.442695
    %v3591 = vpow.pop %v3590
    %v3592 = vsel %vm941, %v3591, 0.0
    %3593 = vadd.xlane.f32.xlu0 %v3592
    %v3594 = vpop.xlane.xlu0 %3593
    %v3595 = vrcp.pop %v3594
    %v3596 = vmul.f32 %v3591, %v3595
    %3597 = vrot.lane.b32.xlu0 %v3341, 56
    %v3598 = vpop.permute.xlu0 %3597
    %v3600 = vsel %vm955, %v3596, 0
    %v3602 = vsel %vm750, %v3598, 0
    %3604 = vmatprep.subr.mxu0 0.0
    %3605 = vmatpush1.msra.mxu0 %v3602
    %3606 = vmatprep.subr.mxu0 0.0
    %3607 = vmatpush1.msra.mxu0 0.0
    %3608 = vmatprep.subr.mxu0 0.0
    %3609 = vmatpush1.msra.mxu0 0.0
    %3610 = vmatprep.subr.mxu0 0.0
    %3611 = vmatpush1.msra.mxu0 0.0
    %3612 = vmatprep.subr.mxu0 0.0
    %3613 = vmatpush1.msra.mxu0 0.0
    %3614 = vmatprep.subr.mxu0 0.0
    %3615 = vmatpush1.msra.mxu0 0.0
    %3616 = vmatprep.subr.mxu0 0.0
    %3617 = vmatpush1.msra.mxu0 0.0
    %3618 = vmatprep.subr.mxu0 0.0
    %3619 = vmatpush1.msra.mxu0 0.0
    %3620 = vmatprep.subr.mxu0 0.0
    %3621 = vmatpush1.msra.mxu0 0.0
    %3622 = vmatprep.subr.mxu0 0.0
    %3623 = vmatpush1.msra.mxu0 0.0
    %3624 = vmatprep.subr.mxu0 0.0
    %3625 = vmatpush1.msra.mxu0 0.0
    %3626 = vmatprep.subr.mxu0 0.0
    %3627 = vmatpush1.msra.mxu0 0.0
    %3628 = vmatprep.subr.mxu0 0.0
    %3629 = vmatpush1.msra.mxu0 0.0
    %3630 = vmatprep.subr.mxu0 0.0
    %3631 = vmatpush1.msra.mxu0 0.0
    %3632 = vmatprep.subr.mxu0 0.0
    %3633 = vmatpush1.msra.mxu0 0.0
    %3634 = vmatprep.subr.mxu0 0.0
    %3635 = vmatpush1.msra.mxu0 0.0
    %3636 = vmatprep.subr.mxu0 0.0
    %3637 = vmatpush1.msra.mxu0 0.0
    %3638 = vmatprep.subr.mxu0 0.0
    %3639 = vmatpush1.msra.mxu0 0.0
    %3640 = vmatprep.subr.mxu0 0.0
    %3641 = vmatpush1.msra.mxu0 0.0
    %3642 = vmatprep.subr.mxu0 0.0
    %3643 = vmatpush1.msra.mxu0 0.0
    %3644 = vmatprep.subr.mxu0 0.0
    %3645 = vmatpush1.msra.mxu0 0.0
    %3646 = vmatprep.subr.mxu0 0.0
    %3647 = vmatpush1.msra.mxu0 0.0
    %3648 = vmatprep.subr.mxu0 0.0
    %3649 = vmatpush1.msra.mxu0 0.0
    %3650 = vmatprep.subr.mxu0 0.0
    %3651 = vmatpush1.msra.mxu0 0.0
    %3652 = vmatprep.subr.mxu0 0.0
    %3653 = vmatpush1.msra.mxu0 0.0
    %3654 = vmatprep.subr.mxu0 0.0
    %3655 = vmatpush1.msra.mxu0 0.0
    %3656 = vmatprep.subr.mxu0 0.0
    %3657 = vmatpush1.msra.mxu0 0.0
    %3658 = vmatprep.subr.mxu0 0.0
    %3659 = vmatpush1.msra.mxu0 0.0
    %3660 = vmatprep.subr.mxu0 0.0
    %3661 = vmatpush1.msra.mxu0 0.0
    %3662 = vmatprep.subr.mxu0 0.0
    %3663 = vmatpush1.msra.mxu0 0.0
    %3664 = vmatprep.subr.mxu0 0.0
    %3665 = vmatpush1.msra.mxu0 0.0
    %3666 = vmatprep.subr.mxu0 0.0
    %3667 = vmatpush1.msra.mxu0 0.0
    %3668 = vmatprep.mubr.f32.mxu0 0.0
    %3669 = vmatmul.mubr.f32.gmra.mrb[0].mxu0 %v3600
    %v3670 = vpop.f32.mrb[0].mxu0
    %v3671 = vadd.f32 0.0, %v3670
    %v3672 = vpop.f32.mrb[0].mxu0
    %3673 = vdwg.mxu0
    %3674 = vrot.lane.b32.xlu0 %v3341, 112
    %v3675 = vpop.permute.xlu0 %3674
    %3676 = vrot.lane.b32.xlu0 %v3341, 80
    %v3677 = vpop.permute.xlu0 %3676
    %v3678 = vsel %vm865, %v3675, 0
    %v3680 = vsel %vm865, %v3677, 0
    %3682 = vmatprep.subr.mxu0 0.0
    %3683 = vmatpush1.xpose.msra.mxu0 %v3680
    %3684 = vmatprep.subr.mxu0 0.0
    %3685 = vmatpush1.xpose.msra.mxu0 0.0
    %3686 = vmatprep.subr.mxu0 0.0
    %3687 = vmatpush1.xpose.msra.mxu0 0.0
    %3688 = vmatprep.subr.mxu0 0.0
    %3689 = vmatpush1.xpose.msra.mxu0 0.0
    %3690 = vmatprep.subr.mxu0 0.0
    %3691 = vmatpush1.xpose.msra.mxu0 0.0
    %3692 = vmatprep.subr.mxu0 0.0
    %3693 = vmatpush1.xpose.msra.mxu0 0.0
    %3694 = vmatprep.subr.mxu0 0.0
    %3695 = vmatpush1.xpose.msra.mxu0 0.0
    %3696 = vmatprep.subr.mxu0 0.0
    %3697 = vmatpush1.xpose.msra.mxu0 0.0
    %3698 = vmatprep.subr.mxu0 0.0
    %3699 = vmatpush1.xpose.msra.mxu0 0.0
    %3700 = vmatprep.subr.mxu0 0.0
    %3701 = vmatpush1.xpose.msra.mxu0 0.0
    %3702 = vmatprep.subr.mxu0 0.0
    %3703 = vmatpush1.xpose.msra.mxu0 0.0
    %3704 = vmatprep.subr.mxu0 0.0
    %3705 = vmatpush1.xpose.msra.mxu0 0.0
    %3706 = vmatprep.subr.mxu0 0.0
    %3707 = vmatpush1.xpose.msra.mxu0 0.0
    %3708 = vmatprep.subr.mxu0 0.0
    %3709 = vmatpush1.xpose.msra.mxu0 0.0
    %3710 = vmatprep.subr.mxu0 0.0
    %3711 = vmatpush1.xpose.msra.mxu0 0.0
    %3712 = vmatprep.subr.mxu0 0.0
    %3713 = vmatpush1.xpose.msra.mxu0 0.0
    %3714 = vmatprep.subr.mxu0 0.0
    %3715 = vmatpush1.xpose.msra.mxu0 0.0
    %3716 = vmatprep.subr.mxu0 0.0
    %3717 = vmatpush1.xpose.msra.mxu0 0.0
    %3718 = vmatprep.subr.mxu0 0.0
    %3719 = vmatpush1.xpose.msra.mxu0 0.0
    %3720 = vmatprep.subr.mxu0 0.0
    %3721 = vmatpush1.xpose.msra.mxu0 0.0
    %3722 = vmatprep.subr.mxu0 0.0
    %3723 = vmatpush1.xpose.msra.mxu0 0.0
    %3724 = vmatprep.subr.mxu0 0.0
    %3725 = vmatpush1.xpose.msra.mxu0 0.0
    %3726 = vmatprep.subr.mxu0 0.0
    %3727 = vmatpush1.xpose.msra.mxu0 0.0
    %3728 = vmatprep.subr.mxu0 0.0
    %3729 = vmatpush1.xpose.msra.mxu0 0.0
    %3730 = vmatprep.subr.mxu0 0.0
    %3731 = vmatpush1.xpose.msra.mxu0 0.0
    %3732 = vmatprep.subr.mxu0 0.0
    %3733 = vmatpush1.xpose.msra.mxu0 0.0
    %3734 = vmatprep.subr.mxu0 0.0
    %3735 = vmatpush1.xpose.msra.mxu0 0.0
    %3736 = vmatprep.subr.mxu0 0.0
    %3737 = vmatpush1.xpose.msra.mxu0 0.0
    %3738 = vmatprep.subr.mxu0 0.0
    %3739 = vmatpush1.xpose.msra.mxu0 0.0
    %3740 = vmatprep.subr.mxu0 0.0
    %3741 = vmatpush1.xpose.msra.mxu0 0.0
    %3742 = vmatprep.subr.mxu0 0.0
    %3743 = vmatpush1.xpose.msra.mxu0 0.0
    %3744 = vmatprep.subr.mxu0 0.0
    %3745 = vmatpush1.xpose.msra.mxu0 0.0
    %3746 = vmatprep.mubr.f32.mxu0 0.0
    %3747 = vmatmul.mubr.f32.gmra.mrb[0].mxu0 %v3678
    %v3748 = vpop.f32.mrb[0].mxu0
    %v3749 = vadd.f32 0.0, %v3748
    %v3750 = vpop.f32.mrb[0].mxu0
    %3751 = vdwg.mxu0
    %v3752 = vmul.f32 %v3749, 0.35355338
    %v3753 = vsel %vm941, %v3752, -inf
    %3754 = vmax.xlane.f32.xlu0 %v3753
    %v3755 = vpop.xlane.xlu0 %3754
    %v3756 = vsub.f32 %v3752, %v3755
    %v3757 = vmul.f32 %v3756, 1.442695
    %v3758 = vpow.pop %v3757
    %v3759 = vsel %vm941, %v3758, 0.0
    %3760 = vadd.xlane.f32.xlu0 %v3759
    %v3761 = vpop.xlane.xlu0 %3760
    %v3762 = vrcp.pop %v3761
    %v3763 = vmul.f32 %v3758, %v3762
    %3764 = vrot.lane.b32.xlu0 %v3341, 48
    %v3765 = vpop.permute.xlu0 %3764
    %v3767 = vsel %vm955, %v3763, 0
    %v3769 = vsel %vm750, %v3765, 0
    %3771 = vmatprep.subr.mxu0 0.0
    %3772 = vmatpush1.msra.mxu0 %v3769
    %3773 = vmatprep.subr.mxu0 0.0
    %3774 = vmatpush1.msra.mxu0 0.0
    %3775 = vmatprep.subr.mxu0 0.0
    %3776 = vmatpush1.msra.mxu0 0.0
    %3777 = vmatprep.subr.mxu0 0.0
    %3778 = vmatpush1.msra.mxu0 0.0
    %3779 = vmatprep.subr.mxu0 0.0
    %3780 = vmatpush1.msra.mxu0 0.0
    %3781 = vmatprep.subr.mxu0 0.0
    %3782 = vmatpush1.msra.mxu0 0.0
    %3783 = vmatprep.subr.mxu0 0.0
    %3784 = vmatpush1.msra.mxu0 0.0
    %3785 = vmatprep.subr.mxu0 0.0
    %3786 = vmatpush1.msra.mxu0 0.0
    %3787 = vmatprep.subr.mxu0 0.0
    %3788 = vmatpush1.msra.mxu0 0.0
    %3789 = vmatprep.subr.mxu0 0.0
    %3790 = vmatpush1.msra.mxu0 0.0
    %3791 = vmatprep.subr.mxu0 0.0
    %3792 = vmatpush1.msra.mxu0 0.0
    %3793 = vmatprep.subr.mxu0 0.0
    %3794 = vmatpush1.msra.mxu0 0.0
    %3795 = vmatprep.subr.mxu0 0.0
    %3796 = vmatpush1.msra.mxu0 0.0
    %3797 = vmatprep.subr.mxu0 0.0
    %3798 = vmatpush1.msra.mxu0 0.0
    %3799 = vmatprep.subr.mxu0 0.0
    %3800 = vmatpush1.msra.mxu0 0.0
    %3801 = vmatprep.subr.mxu0 0.0
    %3802 = vmatpush1.msra.mxu0 0.0
    %3803 = vmatprep.subr.mxu0 0.0
    %3804 = vmatpush1.msra.mxu0 0.0
    %3805 = vmatprep.subr.mxu0 0.0
    %3806 = vmatpush1.msra.mxu0 0.0
    %3807 = vmatprep.subr.mxu0 0.0
    %3808 = vmatpush1.msra.mxu0 0.0
    %3809 = vmatprep.subr.mxu0 0.0
    %3810 = vmatpush1.msra.mxu0 0.0
    %3811 = vmatprep.subr.mxu0 0.0
    %3812 = vmatpush1.msra.mxu0 0.0
    %3813 = vmatprep.subr.mxu0 0.0
    %3814 = vmatpush1.msra.mxu0 0.0
    %3815 = vmatprep.subr.mxu0 0.0
    %3816 = vmatpush1.msra.mxu0 0.0
    %3817 = vmatprep.subr.mxu0 0.0
    %3818 = vmatpush1.msra.mxu0 0.0
    %3819 = vmatprep.subr.mxu0 0.0
    %3820 = vmatpush1.msra.mxu0 0.0
    %3821 = vmatprep.subr.mxu0 0.0
    %3822 = vmatpush1.msra.mxu0 0.0
    %3823 = vmatprep.subr.mxu0 0.0
    %3824 = vmatpush1.msra.mxu0 0.0
    %3825 = vmatprep.subr.mxu0 0.0
    %3826 = vmatpush1.msra.mxu0 0.0
    %3827 = vmatprep.subr.mxu0 0.0
    %3828 = vmatpush1.msra.mxu0 0.0
    %3829 = vmatprep.subr.mxu0 0.0
    %3830 = vmatpush1.msra.mxu0 0.0
    %3831 = vmatprep.subr.mxu0 0.0
    %3832 = vmatpush1.msra.mxu0 0.0
    %3833 = vmatprep.subr.mxu0 0.0
    %3834 = vmatpush1.msra.mxu0 0.0
    %3835 = vmatprep.mubr.f32.mxu0 0.0
    %3836 = vmatmul.mubr.f32.gmra.mrb[0].mxu0 %v3767
    %v3837 = vpop.f32.mrb[0].mxu0
    %v3838 = vadd.f32 0.0, %v3837
    %v3839 = vpop.f32.mrb[0].mxu0
    %3840 = vdwg.mxu0
    %3841 = vrot.lane.b32.xlu0 %v3341, 104
    %v3842 = vpop.permute.xlu0 %3841
    %3843 = vrot.lane.b32.xlu0 %v3341, 72
    %v3844 = vpop.permute.xlu0 %3843
    %v3845 = vsel %vm865, %v3842, 0
    %v3847 = vsel %vm865, %v3844, 0
    %3849 = vmatprep.subr.mxu0 0.0
    %3850 = vmatpush1.xpose.msra.mxu0 %v3847
    %3851 = vmatprep.subr.mxu0 0.0
    %3852 = vmatpush1.xpose.msra.mxu0 0.0
    %3853 = vmatprep.subr.mxu0 0.0
    %3854 = vmatpush1.xpose.msra.mxu0 0.0
    %3855 = vmatprep.subr.mxu0 0.0
    %3856 = vmatpush1.xpose.msra.mxu0 0.0
    %3857 = vmatprep.subr.mxu0 0.0
    %3858 = vmatpush1.xpose.msra.mxu0 0.0
    %3859 = vmatprep.subr.mxu0 0.0
    %3860 = vmatpush1.xpose.msra.mxu0 0.0
    %3861 = vmatprep.subr.mxu0 0.0
    %3862 = vmatpush1.xpose.msra.mxu0 0.0
    %3863 = vmatprep.subr.mxu0 0.0
    %3864 = vmatpush1.xpose.msra.mxu0 0.0
    %3865 = vmatprep.subr.mxu0 0.0
    %3866 = vmatpush1.xpose.msra.mxu0 0.0
    %3867 = vmatprep.subr.mxu0 0.0
    %3868 = vmatpush1.xpose.msra.mxu0 0.0
    %3869 = vmatprep.subr.mxu0 0.0
    %3870 = vmatpush1.xpose.msra.mxu0 0.0
    %3871 = vmatprep.subr.mxu0 0.0
    %3872 = vmatpush1.xpose.msra.mxu0 0.0
    %3873 = vmatprep.subr.mxu0 0.0
    %3874 = vmatpush1.xpose.msra.mxu0 0.0
    %3875 = vmatprep.subr.mxu0 0.0
    %3876 = vmatpush1.xpose.msra.mxu0 0.0
    %3877 = vmatprep.subr.mxu0 0.0
    %3878 = vmatpush1.xpose.msra.mxu0 0.0
    %3879 = vmatprep.subr.mxu0 0.0
    %3880 = vmatpush1.xpose.msra.mxu0 0.0
    %3881 = vmatprep.subr.mxu0 0.0
    %3882 = vmatpush1.xpose.msra.mxu0 0.0
    %3883 = vmatprep.subr.mxu0 0.0
    %3884 = vmatpush1.xpose.msra.mxu0 0.0
    %3885 = vmatprep.subr.mxu0 0.0
    %3886 = vmatpush1.xpose.msra.mxu0 0.0
    %3887 = vmatprep.subr.mxu0 0.0
    %3888 = vmatpush1.xpose.msra.mxu0 0.0
    %3889 = vmatprep.subr.mxu0 0.0
    %3890 = vmatpush1.xpose.msra.mxu0 0.0
    %3891 = vmatprep.subr.mxu0 0.0
    %3892 = vmatpush1.xpose.msra.mxu0 0.0
    %3893 = vmatprep.subr.mxu0 0.0
    %3894 = vmatpush1.xpose.msra.mxu0 0.0
    %3895 = vmatprep.subr.mxu0 0.0
    %3896 = vmatpush1.xpose.msra.mxu0 0.0
    %3897 = vmatprep.subr.mxu0 0.0
    %3898 = vmatpush1.xpose.msra.mxu0 0.0
    %3899 = vmatprep.subr.mxu0 0.0
    %3900 = vmatpush1.xpose.msra.mxu0 0.0
    %3901 = vmatprep.subr.mxu0 0.0
    %3902 = vmatpush1.xpose.msra.mxu0 0.0
    %3903 = vmatprep.subr.mxu0 0.0
    %3904 = vmatpush1.xpose.msra.mxu0 0.0
    %3905 = vmatprep.subr.mxu0 0.0
    %3906 = vmatpush1.xpose.msra.mxu0 0.0
    %3907 = vmatprep.subr.mxu0 0.0
    %3908 = vmatpush1.xpose.msra.mxu0 0.0
    %3909 = vmatprep.subr.mxu0 0.0
    %3910 = vmatpush1.xpose.msra.mxu0 0.0
    %3911 = vmatprep.subr.mxu0 0.0
    %3912 = vmatpush1.xpose.msra.mxu0 0.0
    %3913 = vmatprep.mubr.f32.mxu0 0.0
    %3914 = vmatmul.mubr.f32.gmra.mrb[0].mxu0 %v3845
    %v3915 = vpop.f32.mrb[0].mxu0
    %v3916 = vadd.f32 0.0, %v3915
    %v3917 = vpop.f32.mrb[0].mxu0
    %3918 = vdwg.mxu0
    %v3919 = vmul.f32 %v3916, 0.35355338
    %v3920 = vsel %vm941, %v3919, -inf
    %3921 = vmax.xlane.f32.xlu0 %v3920
    %v3922 = vpop.xlane.xlu0 %3921
    %v3923 = vsub.f32 %v3919, %v3922
    %v3924 = vmul.f32 %v3923, 1.442695
    %v3925 = vpow.pop %v3924
    %v3926 = vsel %vm941, %v3925, 0.0
    %3927 = vadd.xlane.f32.xlu0 %v3926
    %v3928 = vpop.xlane.xlu0 %3927
    %v3929 = vrcp.pop %v3928
    %v3930 = vmul.f32 %v3925, %v3929
    %3931 = vrot.lane.b32.xlu0 %v3341, 40
    %v3932 = vpop.permute.xlu0 %3931
    %v3934 = vsel %vm955, %v3930, 0
    %v3936 = vsel %vm750, %v3932, 0
    %3938 = vmatprep.subr.mxu0 0.0
    %3939 = vmatpush1.msra.mxu0 %v3936
    %3940 = vmatprep.subr.mxu0 0.0
    %3941 = vmatpush1.msra.mxu0 0.0
    %3942 = vmatprep.subr.mxu0 0.0
    %3943 = vmatpush1.msra.mxu0 0.0
    %3944 = vmatprep.subr.mxu0 0.0
    %3945 = vmatpush1.msra.mxu0 0.0
    %3946 = vmatprep.subr.mxu0 0.0
    %3947 = vmatpush1.msra.mxu0 0.0
    %3948 = vmatprep.subr.mxu0 0.0
    %3949 = vmatpush1.msra.mxu0 0.0
    %3950 = vmatprep.subr.mxu0 0.0
    %3951 = vmatpush1.msra.mxu0 0.0
    %3952 = vmatprep.subr.mxu0 0.0
    %3953 = vmatpush1.msra.mxu0 0.0
    %3954 = vmatprep.subr.mxu0 0.0
    %3955 = vmatpush1.msra.mxu0 0.0
    %3956 = vmatprep.subr.mxu0 0.0
    %3957 = vmatpush1.msra.mxu0 0.0
    %3958 = vmatprep.subr.mxu0 0.0
    %3959 = vmatpush1.msra.mxu0 0.0
    %3960 = vmatprep.subr.mxu0 0.0
    %3961 = vmatpush1.msra.mxu0 0.0
    %3962 = vmatprep.subr.mxu0 0.0
    %3963 = vmatpush1.msra.mxu0 0.0
    %3964 = vmatprep.subr.mxu0 0.0
    %3965 = vmatpush1.msra.mxu0 0.0
    %3966 = vmatprep.subr.mxu0 0.0
    %3967 = vmatpush1.msra.mxu0 0.0
    %3968 = vmatprep.subr.mxu0 0.0
    %3969 = vmatpush1.msra.mxu0 0.0
    %3970 = vmatprep.subr.mxu0 0.0
    %3971 = vmatpush1.msra.mxu0 0.0
    %3972 = vmatprep.subr.mxu0 0.0
    %3973 = vmatpush1.msra.mxu0 0.0
    %3974 = vmatprep.subr.mxu0 0.0
    %3975 = vmatpush1.msra.mxu0 0.0
    %3976 = vmatprep.subr.mxu0 0.0
    %3977 = vmatpush1.msra.mxu0 0.0
    %3978 = vmatprep.subr.mxu0 0.0
    %3979 = vmatpush1.msra.mxu0 0.0
    %3980 = vmatprep.subr.mxu0 0.0
    %3981 = vmatpush1.msra.mxu0 0.0
    %3982 = vmatprep.subr.mxu0 0.0
    %3983 = vmatpush1.msra.mxu0 0.0
    %3984 = vmatprep.subr.mxu0 0.0
    %3985 = vmatpush1.msra.mxu0 0.0
    %3986 = vmatprep.subr.mxu0 0.0
    %3987 = vmatpush1.msra.mxu0 0.0
    %3988 = vmatprep.subr.mxu0 0.0
    %3989 = vmatpush1.msra.mxu0 0.0
    %3990 = vmatprep.subr.mxu0 0.0
    %3991 = vmatpush1.msra.mxu0 0.0
    %3992 = vmatprep.subr.mxu0 0.0
    %3993 = vmatpush1.msra.mxu0 0.0
    %3994 = vmatprep.subr.mxu0 0.0
    %3995 = vmatpush1.msra.mxu0 0.0
    %3996 = vmatprep.subr.mxu0 0.0
    %3997 = vmatpush1.msra.mxu0 0.0
    %3998 = vmatprep.subr.mxu0 0.0
    %3999 = vmatpush1.msra.mxu0 0.0
    %4000 = vmatprep.subr.mxu0 0.0
    %4001 = vmatpush1.msra.mxu0 0.0
    %4002 = vmatprep.mubr.f32.mxu0 0.0
    %4003 = vmatmul.mubr.f32.gmra.mrb[0].mxu0 %v3934
    %v4004 = vpop.f32.mrb[0].mxu0
    %v4005 = vadd.f32 0.0, %v4004
    %v4006 = vpop.f32.mrb[0].mxu0
    %4007 = vdwg.mxu0
    %4009 = vrot.lane.b32.xlu0 %v3671, 8
    %v4010 = vpop.permute.xlu0 %4009
    %4013 = vrot.lane.b32.xlu0 %v3838, 16
    %v4014 = vpop.permute.xlu0 %4013
    %4017 = vrot.lane.b32.xlu0 %v4005, 24
    %v4018 = vpop.permute.xlu0 %4017
    %v4020 = vsel %vm865, %v3504, %v4010
    %v4021 = vsel %vm1545, %v4020, %v4014
    %v4022 = vsel %vm1547, %v4021, %v4018
    %v4024 = vrot.slane %v4022, 3
    %v4026 = vsel %vm750, %v3337, %v4024
    %s4027 = scalar_lea.vmem %s6, 16
    %v4028 = vld [vmem:[%s4027] sm:$0xf]
    %v4029 = vld [vmem:[%s4027 + $0x4] sm:$0xf]
    %v4030 = vld [vmem:[%s4027 + $0x8] sm:$0xf]
    %v4031 = vld [vmem:[%s4027 + $0xc] sm:$0xf]
    %v4032 = vpack.c.bf16 %v4024, %v4026
    %v4037 = vunpack.c.l.b16 %v4028
    %v4038 = vunpack.c.l.b16 %v4029
    %v4039 = vunpack.c.l.b16 %v4030
    %v4040 = vunpack.c.l.b16 %v4031
    %v4041 = vpack.c.b16 %v4038, %v4037
    %v4042 = vpack.c.b16 %v4040, %v4039
    %v4046 = vsel %vm753, %v4032, 0
    %4048 = vmatprep.subr.bf16.mxu0 0
    %4049 = vmatpush1.bf16.msra.mxu0 %v4041
    %4050 = vmatprep.subr.bf16.mxu0 0
    %4051 = vmatpush1.bf16.msra.mxu0 %v4042
    %4052 = vmatprep.subr.bf16.mxu0 0
    %4053 = vmatpush1.bf16.msra.mxu0 0
    %4054 = vmatprep.subr.bf16.mxu0 0
    %4055 = vmatpush1.bf16.msra.mxu0 0
    %4056 = vmatprep.subr.bf16.mxu0 0
    %4057 = vmatpush1.bf16.msra.mxu0 0
    %4058 = vmatprep.subr.bf16.mxu0 0
    %4059 = vmatpush1.bf16.msra.mxu0 0
    %4060 = vmatprep.subr.bf16.mxu0 0
    %4061 = vmatpush1.bf16.msra.mxu0 0
    %4062 = vmatprep.subr.bf16.mxu0 0
    %4063 = vmatpush1.bf16.msra.mxu0 0
    %4064 = vmatprep.subr.bf16.mxu0 0
    %4065 = vmatpush1.bf16.msra.mxu0 0
    %4066 = vmatprep.subr.bf16.mxu0 0
    %4067 = vmatpush1.bf16.msra.mxu0 0
    %4068 = vmatprep.subr.bf16.mxu0 0
    %4069 = vmatpush1.bf16.msra.mxu0 0
    %4070 = vmatprep.subr.bf16.mxu0 0
    %4071 = vmatpush1.bf16.msra.mxu0 0
    %4072 = vmatprep.subr.bf16.mxu0 0
    %4073 = vmatpush1.bf16.msra.mxu0 0
    %4074 = vmatprep.subr.bf16.mxu0 0
    %4075 = vmatpush1.bf16.msra.mxu0 0
    %4076 = vmatprep.subr.bf16.mxu0 0
    %4077 = vmatpush1.bf16.msra.mxu0 0
    %4078 = vmatprep.subr.bf16.mxu0 0
    %4079 = vmatpush1.bf16.msra.mxu0 0
    %4080 = vmatprep.mubr.bf16.mxu0 0
    %4081 = vmatmul.mubr.bf16.gmra.mrb[0].mxu0 %v4046
    %v4082 = vpop.f32.mrb[0].mxu0
    %v4083 = vadd.f32 0.0, %v4082
    %v4084 = vpop.f32.mrb[0].mxu0
    %v4085 = vpop.f32.mrb[0].mxu0
    %v4086 = vadd.f32 0.0, %v4085
    %v4087 = vpop.f32.mrb[0].mxu0
    %4088 = vdwg.mxu0
    %v4089 = vadd.f32 %v2544, %v4083
    %v4090 = vadd.f32 %v2545, %v4086
    %v4091 = vlaneseq
    %v4092 = vshrl.u32 %v4091, 7
    %v4093 = vsub.s32 4, %v4092
    %v4094 = vrot.slane %v2547, %v4093
    %v4095 = vadd.f32 %v4089, %v4094
    %v4096 = vadd.f32 %v4090, %v4094
    %v4097 = vsel %vm753, %v4095, 0.0
    %4098 = vadd.xlane.f32.xlu0 %v4097
    %v4099 = vpop.xlane.xlu0 %4098
    %v4100 = vsel %vm757, %v4096, 0.0
    %4101 = vadd.xlane.f32.xlu0 %v4100
    %v4102 = vpop.xlane.xlu0 %4101
    %v4103 = vmul.f32 %v4099, %v761
    %v4104 = vmul.f32 %v4102, %v761
    %v4105 = vsub.f32 %v4095, %v4103
    %v4106 = vsub.f32 %v4096, %v4104
    %v4107 = vmul.f32 %v4105, %v4105
    %v4108 = vmul.f32 %v4106, %v4106
    %v4109 = vsel %vm753, %v4107, 0.0
    %4110 = vadd.xlane.f32.xlu0 %v4109
    %v4111 = vpop.xlane.xlu0 %4110
    %v4112 = vsel %vm757, %v4108, 0.0
    %4113 = vadd.xlane.f32.xlu0 %v4112
    %v4114 = vpop.xlane.xlu0 %4113
    %v4115 = vmul.f32 %v4111, %v761
    %v4116 = vmul.f32 %v4114, %v761
    %v4117 = vadd.f32 %v4115, 1e-12
    %v4118 = vadd.f32 %v4116, 1e-12
    %v4119 = vrsqrt.pop %v4117
    %v4120 = vrsqrt.pop %v4118
    %v4121 = vmul.f32 %v4105, %v4119
    %v4122 = vmul.f32 %v4106, %v4120
    %v4123 = vlaneseq
    %v4124 = vshrl.u32 %v4123, 7
    %v4125 = vsub.s32 2, %v4124
    %v4126 = vrot.slane %v2547, %v4125
    %v4127 = vmul.f32 %v4121, %v4126
    %v4128 = vmul.f32 %v4122, %v4126
    %v4129 = vlaneseq
    %v4130 = vshrl.u32 %v4129, 7
    %v4131 = vsub.s32 3, %v4130
    %v4132 = vrot.slane %v2547, %v4131
    %v4133 = vadd.f32 %v4127, %v4132
    %v4134 = vadd.f32 %v4128, %v4132
    %s4135 = scalar_lea.vmem %s7, 16
    %v4136 = vld [vmem:[%s4135] sm:$0xf]
    %v4137 = vld [vmem:[%s4135 + $0x4] sm:$0xf]
    %v4138 = vld [vmem:[%s4135 + $0x8] sm:$0xf]
    %v4139 = vld [vmem:[%s4135 + $0xc] sm:$0xf]
    %v4140 = vpack.c.bf16 %v4134, %v4133
    %s4141 = scalar_lea.vmem %s8, 1
    %v4142 = vld [vmem:[%s4141] sm:$0x1]
    %v4144 = vlaneseq
    %v4145 = vshrl.u32 %v4144, 7
    %v4146 = vsub.s32 0, %v4145
    %v4147 = vrot.slane %v4142, %v4146
    %v4153 = vunpack.c.l.b16 %v4136
    %v4154 = vunpack.c.l.b16 %v4137
    %v4155 = vunpack.c.l.b16 %v4138
    %v4156 = vunpack.c.l.b16 %v4139
    %v4157 = vpack.c.b16 %v4154, %v4153
    %v4158 = vpack.c.b16 %v4156, %v4155
    %v4162 = vsel %vm753, %v4140, 0
    %4164 = vmatprep.subr.bf16.mxu0 0
    %4165 = vmatpush1.bf16.msra.mxu0 %v4157
    %4166 = vmatprep.subr.bf16.mxu0 0
    %4167 = vmatpush1.bf16.msra.mxu0 %v4158
    %4168 = vmatprep.subr.bf16.mxu0 0
    %4169 = vmatpush1.bf16.msra.mxu0 0
    %4170 = vmatprep.subr.bf16.mxu0 0
    %4171 = vmatpush1.bf16.msra.mxu0 0
    %4172 = vmatprep.subr.bf16.mxu0 0
    %4173 = vmatpush1.bf16.msra.mxu0 0
    %4174 = vmatprep.subr.bf16.mxu0 0
    %4175 = vmatpush1.bf16.msra.mxu0 0
    %4176 = vmatprep.subr.bf16.mxu0 0
    %4177 = vmatpush1.bf16.msra.mxu0 0
    %4178 = vmatprep.subr.bf16.mxu0 0
    %4179 = vmatpush1.bf16.msra.mxu0 0
    %4180 = vmatprep.subr.bf16.mxu0 0
    %4181 = vmatpush1.bf16.msra.mxu0 0
    %4182 = vmatprep.subr.bf16.mxu0 0
    %4183 = vmatpush1.bf16.msra.mxu0 0
    %4184 = vmatprep.subr.bf16.mxu0 0
    %4185 = vmatpush1.bf16.msra.mxu0 0
    %4186 = vmatprep.subr.bf16.mxu0 0
    %4187 = vmatpush1.bf16.msra.mxu0 0
    %4188 = vmatprep.subr.bf16.mxu0 0
    %4189 = vmatpush1.bf16.msra.mxu0 0
    %4190 = vmatprep.subr.bf16.mxu0 0
    %4191 = vmatpush1.bf16.msra.mxu0 0
    %4192 = vmatprep.subr.bf16.mxu0 0
    %4193 = vmatpush1.bf16.msra.mxu0 0
    %4194 = vmatprep.subr.bf16.mxu0 0
    %4195 = vmatpush1.bf16.msra.mxu0 0
    %4196 = vmatprep.mubr.bf16.mxu0 0
    %4197 = vmatmul.mubr.bf16.gmra.mrb[0].mxu0 %v4162
    %v4198 = vpop.f32.mrb[0].mxu0
    %v4199 = vadd.f32 %v4147, %v4198
    %v4200 = vpop.f32.mrb[0].mxu0
    %v4201 = vpop.f32.mrb[0].mxu0
    %v4202 = vadd.f32 %v4147, %v4201
    %v4203 = vpop.f32.mrb[0].mxu0
    %4204 = vdwg.mxu0
    %v4205 = vmul.f32 %v4199, %v4199
    %v4206 = vmul.f32 %v4202, %v4202
    %v4207 = vmul.f32 %v4199, %v4205
    %v4208 = vmul.f32 %v4202, %v4206
    %v4209 = vmul.f32 %v4207, 0.044715
    %v4210 = vmul.f32 %v4208, 0.044715
    %v4211 = vadd.f32 %v4199, %v4209
    %v4212 = vadd.f32 %v4202, %v4210
    %v4213 = vmul.f32 %v4211, 0.7978846
    %v4214 = vmul.f32 %v4212, 0.7978846
    %v4215 = vtanh.pop %v4213
    %v4216 = vtanh.pop %v4214
    %v4217 = vadd.f32 %v4215, 1.0
    %v4218 = vadd.f32 %v4216, 1.0
    %v4219 = vmul.f32 %v4217, 0.5
    %v4220 = vmul.f32 %v4218, 0.5
    %v4221 = vmul.f32 %v4199, %v4219
    %v4222 = vmul.f32 %v4202, %v4220
    %s4223 = scalar_lea.vmem %s9, 64
    %v4224 = vld [vmem:[%s4223] sm:$0xf]
    %v4225 = vld [vmem:[%s4223 + $0x4] sm:$0xf]
    %v4226 = vld [vmem:[%s4223 + $0x8] sm:$0xf]
    %v4227 = vld [vmem:[%s4223 + $0xc] sm:$0xf]
    %v4228 = vld [vmem:[%s4223 + $0x10] sm:$0xf]
    %v4229 = vld [vmem:[%s4223 + $0x14] sm:$0xf]
    %v4230 = vld [vmem:[%s4223 + $0x18] sm:$0xf]
    %v4231 = vld [vmem:[%s4223 + $0x1c] sm:$0xf]
    %v4232 = vld [vmem:[%s4223 + $0x20] sm:$0xf]
    %v4233 = vld [vmem:[%s4223 + $0x24] sm:$0xf]
    %v4234 = vld [vmem:[%s4223 + $0x28] sm:$0xf]
    %v4235 = vld [vmem:[%s4223 + $0x2c] sm:$0xf]
    %v4236 = vld [vmem:[%s4223 + $0x30] sm:$0xf]
    %v4237 = vld [vmem:[%s4223 + $0x34] sm:$0xf]
    %v4238 = vld [vmem:[%s4223 + $0x38] sm:$0xf]
    %v4239 = vld [vmem:[%s4223 + $0x3c] sm:$0xf]
    %v4240 = vpack.c.bf16 %v4222, %v4221
    %v4257 = vunpack.c.l.b16 %v4224
    %v4258 = vunpack.c.l.b16 %v4225
    %v4259 = vunpack.c.l.b16 %v4226
    %v4260 = vunpack.c.l.b16 %v4227
    %v4261 = vunpack.c.l.b16 %v4228
    %v4262 = vunpack.c.l.b16 %v4229
    %v4263 = vunpack.c.l.b16 %v4230
    %v4264 = vunpack.c.l.b16 %v4231
    %v4265 = vunpack.c.l.b16 %v4232
    %v4266 = vunpack.c.l.b16 %v4233
    %v4267 = vunpack.c.l.b16 %v4234
    %v4268 = vunpack.c.l.b16 %v4235
    %v4269 = vunpack.c.l.b16 %v4236
    %v4270 = vunpack.c.l.b16 %v4237
    %v4271 = vunpack.c.l.b16 %v4238
    %v4272 = vunpack.c.l.b16 %v4239
    %v4273 = vpack.c.b16 %v4258, %v4257
    %v4274 = vpack.c.b16 %v4260, %v4259
    %v4275 = vpack.c.b16 %v4262, %v4261
    %v4276 = vpack.c.b16 %v4264, %v4263
    %v4277 = vpack.c.b16 %v4266, %v4265
    %v4278 = vpack.c.b16 %v4268, %v4267
    %v4279 = vpack.c.b16 %v4270, %v4269
    %v4280 = vpack.c.b16 %v4272, %v4271
    %4289 = vmatprep.subr.bf16.mxu0 0
    %4290 = vmatpush1.bf16.msra.mxu0 %v4273
    %4291 = vmatprep.subr.bf16.mxu0 0
    %4292 = vmatpush1.bf16.msra.mxu0 %v4274
    %4293 = vmatprep.subr.bf16.mxu0 0
    %4294 = vmatpush1.bf16.msra.mxu0 %v4275
    %4295 = vmatprep.subr.bf16.mxu0 0
    %4296 = vmatpush1.bf16.msra.mxu0 %v4276
    %4297 = vmatprep.subr.bf16.mxu0 0
    %4298 = vmatpush1.bf16.msra.mxu0 %v4277
    %4299 = vmatprep.subr.bf16.mxu0 0
    %4300 = vmatpush1.bf16.msra.mxu0 %v4278
    %4301 = vmatprep.subr.bf16.mxu0 0
    %4302 = vmatpush1.bf16.msra.mxu0 %v4279
    %4303 = vmatprep.subr.bf16.mxu0 0
    %4304 = vmatpush1.bf16.msra.mxu0 %v4280
    %4305 = vmatprep.subr.bf16.mxu0 0
    %4306 = vmatpush1.bf16.msra.mxu0 0
    %4307 = vmatprep.subr.bf16.mxu0 0
    %4308 = vmatpush1.bf16.msra.mxu0 0
    %4309 = vmatprep.subr.bf16.mxu0 0
    %4310 = vmatpush1.bf16.msra.mxu0 0
    %4311 = vmatprep.subr.bf16.mxu0 0
    %4312 = vmatpush1.bf16.msra.mxu0 0
    %4313 = vmatprep.subr.bf16.mxu0 0
    %4314 = vmatpush1.bf16.msra.mxu0 0
    %4315 = vmatprep.subr.bf16.mxu0 0
    %4316 = vmatpush1.bf16.msra.mxu0 0
    %4317 = vmatprep.subr.bf16.mxu0 0
    %4318 = vmatpush1.bf16.msra.mxu0 0
    %4319 = vmatprep.subr.bf16.mxu0 0
    %4320 = vmatpush1.bf16.msra.mxu0 0
    %4321 = vmatprep.mubr.bf16.mxu0 0
    %4322 = vmatmul.mubr.bf16.gmra.mrb[0].mxu0 %v4240
    %v4323 = vpop.f32.mrb[0].mxu0
    %v4324 = vadd.f32 0.0, %v4323
    %v4325 = vpop.f32.mrb[0].mxu0
    %v4326 = vpop.f32.mrb[0].mxu0
    %v4327 = vpop.f32.mrb[0].mxu0
    %4328 = vdwg.mxu0
    %v4329 = vadd.f32 %v4095, %v4324
    %v4330 = vlaneseq
    %v4331 = vshrl.u32 %v4330, 7
    %v4332 = vsub.s32 5, %v4331
    %v4333 = vrot.slane %v2547, %v4332
    %v4334 = vadd.f32 %v4329, %v4333
    %v4336 = vrot.slane %v4334, 4
    %v4338 = vsel %vm598, %v4334, %v4336
    %v4339 = vld [vmem:[%s11] sm:$0x1]
    %v4340 = vld [vmem:[%s11 + $0x1] sm:$0x1]
    %v4341 = vsel %vm757, %v4338, 0.0
    %4342 = vadd.xlane.f32.xlu0 %v4341
    %v4343 = vpop.xlane.xlu0 %4342
    %v4344 = vmul.f32 %v4343, %v761
    %v4345 = vsub.f32 %v4338, %v4344
    %v4346 = vmul.f32 %v4345, %v4345
    %v4347 = vsel %vm757, %v4346, 0.0
    %4348 = vadd.xlane.f32.xlu0 %v4347
    %v4349 = vpop.xlane.xlu0 %4348
    %v4350 = vmul.f32 %v4349, %v761
    %v4351 = vadd.f32 %v4350, 1e-12
    %v4352 = vrsqrt.pop %v4351
    %v4353 = vmul.f32 %v4345, %v4352
    %v4354 = vlaneseq
    %v4355 = vshrl.u32 %v4354, 7
    %v4356 = vsub.s32 0, %v4355
    %v4357 = vrot.slane %v4339, %v4356
    %v4358 = vmul.f32 %v4353, %v4357
    %v4359 = vlaneseq
    %v4360 = vshrl.u32 %v4359, 7
    %v4361 = vsub.s32 0, %v4360
    %v4362 = vrot.slane %v4340, %v4361
    %v4363 = vadd.f32 %v4358, %v4362
    %v4364 = vld [vmem:[%s12] sm:$0xff]
    %v4365 = vld [vmem:[%s12 + $0x8] sm:$0xff]
    %v4366 = vld [vmem:[%s12 + $0x10] sm:$0xff]
    %v4367 = vld [vmem:[%s12 + $0x18] sm:$0xff]
    %v4368 = vld [vmem:[%s13] sm:$0x1]
    %v4370 = vlaneseq
    %v4371 = vshrl.u32 %v4370, 7
    %v4372 = vsub.s32 0, %v4371
    %v4373 = vrot.slane %v4368, %v4372
    %v4376 = vsel %vm753, %v4363, 0
    %4378 = vmatprep.subr.mxu0 0.0
    %4379 = vmatpush1.msra.mxu0 %v4364
    %4380 = vmatprep.subr.mxu0 0.0
    %4381 = vmatpush1.msra.mxu0 %v4365
    %4382 = vmatprep.subr.mxu0 0.0
    %4383 = vmatpush1.msra.mxu0 %v4366
    %4384 = vmatprep.subr.mxu0 0.0
    %4385 = vmatpush1.msra.mxu0 %v4367
    %4386 = vmatprep.subr.mxu0 0.0
    %4387 = vmatpush1.msra.mxu0 0.0
    %4388 = vmatprep.subr.mxu0 0.0
    %4389 = vmatpush1.msra.mxu0 0.0
    %4390 = vmatprep.subr.mxu0 0.0
    %4391 = vmatpush1.msra.mxu0 0.0
    %4392 = vmatprep.subr.mxu0 0.0
    %4393 = vmatpush1.msra.mxu0 0.0
    %4394 = vmatprep.subr.mxu0 0.0
    %4395 = vmatpush1.msra.mxu0 0.0
    %4396 = vmatprep.subr.mxu0 0.0
    %4397 = vmatpush1.msra.mxu0 0.0
    %4398 = vmatprep.subr.mxu0 0.0
    %4399 = vmatpush1.msra.mxu0 0.0
    %4400 = vmatprep.subr.mxu0 0.0
    %4401 = vmatpush1.msra.mxu0 0.0
    %4402 = vmatprep.subr.mxu0 0.0
    %4403 = vmatpush1.msra.mxu0 0.0
    %4404 = vmatprep.subr.mxu0 0.0
    %4405 = vmatpush1.msra.mxu0 0.0
    %4406 = vmatprep.subr.mxu0 0.0
    %4407 = vmatpush1.msra.mxu0 0.0
    %4408 = vmatprep.subr.mxu0 0.0
    %4409 = vmatpush1.msra.mxu0 0.0
    %4410 = vmatprep.subr.mxu0 0.0
    %4411 = vmatpush1.msra.mxu0 0.0
    %4412 = vmatprep.subr.mxu0 0.0
    %4413 = vmatpush1.msra.mxu0 0.0
    %4414 = vmatprep.subr.mxu0 0.0
    %4415 = vmatpush1.msra.mxu0 0.0
    %4416 = vmatprep.subr.mxu0 0.0
    %4417 = vmatpush1.msra.mxu0 0.0
    %4418 = vmatprep.subr.mxu0 0.0
    %4419 = vmatpush1.msra.mxu0 0.0
    %4420 = vmatprep.subr.mxu0 0.0
    %4421 = vmatpush1.msra.mxu0 0.0
    %4422 = vmatprep.subr.mxu0 0.0
    %4423 = vmatpush1.msra.mxu0 0.0
    %4424 = vmatprep.subr.mxu0 0.0
    %4425 = vmatpush1.msra.mxu0 0.0
    %4426 = vmatprep.subr.mxu0 0.0
    %4427 = vmatpush1.msra.mxu0 0.0
    %4428 = vmatprep.subr.mxu0 0.0
    %4429 = vmatpush1.msra.mxu0 0.0
    %4430 = vmatprep.subr.mxu0 0.0
    %4431 = vmatpush1.msra.mxu0 0.0
    %4432 = vmatprep.subr.mxu0 0.0
    %4433 = vmatpush1.msra.mxu0 0.0
    %4434 = vmatprep.subr.mxu0 0.0
    %4435 = vmatpush1.msra.mxu0 0.0
    %4436 = vmatprep.subr.mxu0 0.0
    %4437 = vmatpush1.msra.mxu0 0.0
    %4438 = vmatprep.subr.mxu0 0.0
    %4439 = vmatpush1.msra.mxu0 0.0
    %4440 = vmatprep.subr.mxu0 0.0
    %4441 = vmatpush1.msra.mxu0 0.0
    %4442 = vmatprep.mubr.f32.mxu0 0.0
    %4443 = vmatmul.mubr.f32.gmra.mrb[0].mxu0 %v4376
    %v4444 = vpop.f32.mrb[0].mxu0
    %v4445 = vadd.f32 %v4373, %v4444
    %v4446 = vpop.f32.mrb[0].mxu0
    %4447 = vdwg.mxu0
    %vm4448 = vcmask 17408
    %4449 = vst.msk [vmem:[#allocation5] sm:$0x3] %vm4448, %v4445
    %v4450 = vsel %vm4448, %v4445, -inf
    %4451 = vmax.xlane.f32.xlu0 %v4450
    %v4452 = vpop.xlane.xlu0 %4451
    %v4453 = vsub.f32 %v4445, %v4452
    %v4454 = vmul.f32 %v4453, 1.442695
    %v4455 = vpow.pop %v4454
    %v4456 = vsel %vm4448, %v4455, 0.0
    %4457 = vadd.xlane.f32.xlu0 %v4456
    %v4458 = vpop.xlane.xlu0 %4457
    %v4459 = vlog2.pop %v4458
    %v4460 = vmul.f32 %v4459, 0.6931472
    %v4461 = vadd.f32 %v4460, %v4452
    %v4462 = vsub.f32 %v4445, %v4461
    %v4463 = vlaneseq
    %v4464 = vand.u32 %v4463, 127
    %s4465 = sld [smem:[#allocation2]]
    %v4466 = vstv %s4465
    %vm4467 = vcmp.eq.s32.totalorder %v4464, %v4466
    %v4468 = vsel %vm4467, %v4462, 0.0
    %vm4469 = vcmask 16384
    %v4470 = vsel %vm4469, %v4468, 0.0
    %4471 = vadd.xlane.f32.xlu0 %v4470
    %v4472 = vpop.xlane.xlu0 %4471
    %v4473 = vrot.slane %v4472, 4
    %v4474 = vadd.f32 %v4472, %v4473
    %v4475 = vrot.slane %v4474, 2
    %v4476 = vadd.f32 %v4474, %v4475
    %v4477 = vrot.slane %v4476, 1
    %v4478 = vadd.f32 %v4476, %v4477
    %s4479 = vtos %v4478
    %s4480 = ssub.f32 0.0, %s4479
    %s4481 = sld [smem:[#allocation2 + $0x1]]
    %v4482 = vstv %s4481
    %vm4483 = vcmp.eq.s32.totalorder %v4464, %v4482
    %v4484 = vsel %vm4483, %v4462, 0.0
    %v4486 = vrot.slane %v4484, 1
    %v4488 = vsel %vm4469, %v4486, 0.0
    %4489 = vadd.xlane.f32.xlu0 %v4488
    %v4490 = vpop.xlane.xlu0 %4489
    %v4491 = vrot.slane %v4490, 4
    %v4492 = vadd.f32 %v4490, %v4491
    %v4493 = vrot.slane %v4492, 2
    %v4494 = vadd.f32 %v4492, %v4493
    %v4495 = vrot.slane %v4494, 1
    %v4496 = vadd.f32 %v4494, %v4495
    %s4497 = vtos %v4496
    %s4498 = ssub.f32 %s4480, %s4497
    %v4499 = vrcp.pop 2.0
    %s4500 = vtos %v4499
    %s4501 = smul.f32 %s4498, %s4500
    %v4502 = vstv %s4501
    %vm4503 = vcmask 0
    %4504 = vst.msk [vmem:[#allocation6] sm:$0x1] %vm4503, %v4502
    // Predicated region
    $region62: #{vit_forward.1} parent=1 // pred_check
      _
    $region63: #{vit_forward.1} parent=1 // pred_check_branch
      %4506 = sbr.rel (0) target = $region65
    $region64: #{vit_forward.1} parent=1 // pred_region
      %s4508 = ssub.s32 32, 32
      %4509 = vsyncadd [#allocation3], %s4508
      %s4511 = sshll.u32 [#allocation5], 4
      %s4512 = int_to_ptr.vmem [resolvable:$true] %s4511
      %4514 = dma.vmem_to_hbm [thread:$0]  %s4512, 32, %s14, [#allocation3]
    $region65: #{vit_forward.1} parent=1 // pred_fallthru
      _
    // Predicated region
    $region66: #{vit_forward.1} parent=1 // pred_check
      _
    $region67: #{vit_forward.1} parent=1 // pred_check_branch
      %4516 = sbr.rel (0) target = $region69
    $region68: #{vit_forward.1} parent=1 // pred_region
      %s4518 = ssub.s32 16, 16
      %4519 = vsyncadd [#allocation7], %s4518
      %s4521 = sshll.u32 [#allocation6], 4
      %s4522 = int_to_ptr.vmem [resolvable:$true] %s4521
      %4524 = dma.vmem_to_hbm [thread:$0]  %s4522, 16, %s15, [#allocation7]
    $region69: #{vit_forward.1} parent=1 // pred_fallthru
      _
    // Predicated region
    $region70: #{vit_forward.1} parent=1 // pred_check
      _
    $region71: #{vit_forward.1} parent=1 // pred_check_branch
      %4526 = sbr.rel (0) target = $region73
    $region72: #{vit_forward.1} parent=1 // pred_region
      %4527 = dma.done [#allocation3], 32
    $region73: #{vit_forward.1} parent=1 // pred_fallthru
      _
    // Predicated region
    $region74: #{vit_forward.1} parent=1 // pred_check
      _
    $region75: #{vit_forward.1} parent=1 // pred_check_branch
      %4529 = sbr.rel (0) target = $region77
    $region76: #{vit_forward.1} parent=1 // pred_region
      %4530 = dma.done [#allocation7], 16
    $region77: #{vit_forward.1} parent=1 // pred_fallthru
      _
    %4531 = vsyncpa [#allocation3], 1
    %4532 = vsyncpa [#allocation7], 1
    %4533 = vsyncpa [#allocation4], 1

</llo_original>
